<compile_context>
chip_gen: v7x
topology: tpu7x:2x2x1
jax: 0.10.0
libtpu: 0.0.40
codegen_flags: <defaults>
</compile_context>

<pallas_src>
import jax
import jax.numpy as jnp
from jax.experimental import pallas as pl
from jax.experimental.pallas import tpu as pltpu

EPS = 1e-5            # PyTorch nn.LayerNorm default
MASK_BIAS = -1e30     # large finite negative instead of -inf (no inf-inf / 0*inf hazard)


def _layernorm(x, g, b):
    mu = jnp.mean(x, axis=-1, keepdims=True)
    var = jnp.mean((x - mu) ** 2, axis=-1, keepdims=True)
    return (x - mu) * jax.lax.rsqrt(var + EPS) * g + b


def _pick_tile(n, candidates):
    """Largest aligned tile from `candidates` that divides n; full extent otherwise."""
    for t in candidates:
        if n >= t and n % t == 0:   # '>=' so n exactly equal to a candidate uses it
            return t
    return n


def _nbytes(a):
    return int(a.size) * a.dtype.itemsize


def _device_vmem_bytes():
    try:
        return int(pltpu.get_tpu_info().vmem_capacity_bytes)
    except Exception:
        return 128 * 1024 * 1024     # v5e/v6e physical; v7x has 64 MiB


def _vmem_limit(est_bytes):
    """Explicit scoped-VMEM request: >= 32 MiB floor, <= ~90% of physical VMEM."""
    cap = (9 * _device_vmem_bytes()) // 10
    return int(max(32 * 1024 * 1024, min(cap, est_bytes)))


# ----------------------------- Pallas kernels -----------------------------

def layernorm_kernel(x_ref, g_ref, b_ref, out_ref):
    # x: (1, S, D); g/b: (1, D).  Used for the embedding LN when it cannot be
    # fused into encoder layer 0 (zero layers, or multiple sequence tiles).
    out_ref[0] = _layernorm(x_ref[0], g_ref[...], b_ref[...])


def linear_kernel(x_ref, w_ref, b_ref, out_ref):
    # x: (1, Ts, D) f32; w: (D, Tn) bf16; b: (1, Tn) f32 -> out (1, Ts, Tn) f32
    out_ref[0] = (jnp.dot(x_ref[0].astype(jnp.bfloat16), w_ref[...],
                          preferred_element_type=jnp.float32) + b_ref[...])


def make_encoder_kernel(n_heads, d_k, fuse_input_ln, single_seq_block):
    """One full BERT encoder layer for one (batch, seq-tile) grid cell:
    (optional fused embedding-LN) + fused-QKV MHA (+ MHA-internal LN) + norm1
    + FFN + norm2.  Matmuls run in bf16 on the MXU with f32 accumulation;
    LayerNorm / softmax math stays in f32."""
    assert single_seq_block or not fuse_input_ln
    scale = 1.0 / (d_k ** 0.5)

    def kernel(*refs):
        if single_seq_block:
            (xq_ref, mb_ref, gin_ref, bin_ref, wqkv_ref, bqkv_ref,
             wo_ref, bo_ref, ga_ref, ba_ref, g1_ref, b1_ref,
             w1_ref, bf1_ref, w2_ref, bf2_ref, g2_ref, b2_ref, out_ref) = refs
            xkv_ref = None
        else:
            (xq_ref, xkv_ref, mb_ref, gin_ref, bin_ref, wqkv_ref, bqkv_ref,
             wo_ref, bo_ref, ga_ref, ba_ref, g1_ref, b1_ref,
             w1_ref, bf1_ref, w2_ref, bf2_ref, g2_ref, b2_ref, out_ref) = refs

        ts, d = xq_ref.shape[1], xq_ref.shape[2]
        nh, dk = n_heads, d_k

        x_q = xq_ref[0]                     # (Ts, D) queries + residual stream
        mb = mb_ref[0]                      # (1, S) additive key-mask bias (finite)

        if fuse_input_ln:                   # embedding LayerNorm folded into layer 0
            x_q = _layernorm(x_q, gin_ref[...], bin_ref[...])
        xq_bf = x_q.astype(jnp.bfloat16)

        if single_seq_block:
            s = ts
            # Fused Q/K/V: a single (Ts, D) x (D, 3D) MXU matmul.
            qkv = (jnp.dot(xq_bf, wqkv_ref[...],
                           preferred_element_type=jnp.float32) + bqkv_ref[...])
            q, k, v = qkv[:, 0:d], qkv[:, d:2 * d], qkv[:, 2 * d:3 * d]
        else:
            s = xkv_ref.shape[1]
            # Q from the seq tile; fused K/V from the full-sequence bf16 block.
            q = (jnp.dot(xq_bf, wqkv_ref[:, 0:d],
                         preferred_element_type=jnp.float32) + bqkv_ref[:, 0:d])
            kv = (jnp.dot(xkv_ref[0], wqkv_ref[:, d:3 * d],
                          preferred_element_type=jnp.float32) + bqkv_ref[:, d:3 * d])
            k, v = kv[:, 0:d], kv[:, d:2 * d]

        # Fold 1/sqrt(d_k) into Q: Ts*D multiplies instead of H*Ts*S on the scores.
        q = q * scale

        # Batched multi-head attention: heads on the leading (batch) axis,
        # one batched einsum per matmul — no per-head python loop / concatenate.
        # TODO(synk): drop these head swapaxes (XLU relayouts) once Mosaic supports
        # dot_general with non-leading batch dims (einsum 'qhd,khd->hqk').
        qh = jnp.swapaxes(q.reshape(ts, nh, dk), 0, 1).astype(jnp.bfloat16)  # (H, Ts, dk)
        kh = jnp.swapaxes(k.reshape(s, nh, dk), 0, 1).astype(jnp.bfloat16)   # (H, S, dk)
        vh = jnp.swapaxes(v.reshape(s, nh, dk), 0, 1).astype(jnp.bfloat16)   # (H, S, dk)

        # TODO(synk): for long S on v7x (64 MiB VMEM) convert this to a KV-tiled
        # online-softmax loop so only (H, Ts, Tk) score blocks stay live.
        sc = jnp.einsum("hqd,hkd->hqk", qh, kh,
                        preferred_element_type=jnp.float32) + mb             # (H, Ts, S)
        sc_max = jnp.max(sc, axis=-1, keepdims=True)
        p = jnp.exp(sc - sc_max)
        p = p / jnp.sum(p, axis=-1, keepdims=True)      # exact divide (reference parity)
        ctx = jnp.einsum("hqk,hkd->hqd", p.astype(jnp.bfloat16), vh,
                         preferred_element_type=jnp.float32)                 # (H, Ts, dk)
        ctx = jnp.swapaxes(ctx, 0, 1).reshape(ts, nh * dk)                   # (Ts, H*dk)

        # MHA output projection + MHA-internal LayerNorm(output + Q)
        attn_out = (jnp.dot(ctx.astype(jnp.bfloat16), wo_ref[...],
                            preferred_element_type=jnp.float32) + bo_ref[...])
        attn_out = _layernorm(attn_out + x_q, ga_ref[...], ba_ref[...])

        # nn.Dropout is identity at inference; EncoderLayer.norm1
        x1 = _layernorm(x_q + attn_out, g1_ref[...], b1_ref[...])

        # Position-wise FFN: Linear -> ReLU -> Linear
        # TODO(synk): tile the FFN over d_ff (chunked w1/w2 + f32 accumulator) to
        # bound VMEM residency at BERT-base scale on v7x.
        h1 = jnp.maximum(
            jnp.dot(x1.astype(jnp.bfloat16), w1_ref[...],
                    preferred_element_type=jnp.float32) + bf1_ref[...], 0.0)
        ffn = (jnp.dot(h1.astype(jnp.bfloat16), w2_ref[...],
                       preferred_element_type=jnp.float32) + bf2_ref[...])

        out_ref[0] = _layernorm(x1 + ffn, g2_ref[...], b2_ref[...])

    return kernel


# ----------------------------- wrappers -----------------------------

def pallas_layernorm(x, g, b):
    B, S, D = x.shape
    return pl.pallas_call(
        layernorm_kernel,
        out_shape=jax.ShapeDtypeStruct((B, S, D), jnp.float32),
        grid_spec=pltpu.PrefetchScalarGridSpec(
            num_scalar_prefetch=0, grid=(B,),
            in_specs=[pl.BlockSpec((1, S, D), lambda b: (b, 0, 0)),
                      pl.BlockSpec((1, D), lambda b: (0, 0)),
                      pl.BlockSpec((1, D), lambda b: (0, 0))],
            out_specs=pl.BlockSpec((1, S, D), lambda b: (b, 0, 0))),
        compiler_params=pltpu.CompilerParams(dimension_semantics=("parallel",)),
    )(x, g, b)


def pallas_linear(x, w, b):
    """y = x @ w + b.  Grid is (out-feature slab, batch, seq-tile) with the
    out-feature axis OUTERMOST so each (D, Tn) weight slab is streamed from HBM
    exactly once and reused across all (batch, seq) tiles.  Dout is zero-padded
    up to a slab multiple (BERT's 30522-wide vocab head is not 128-divisible)
    and the padded logits are sliced off afterwards."""
    B, S, D = x.shape
    Dout = w.shape[1]
    ts = _pick_tile(S, (512, 256, 128))
    tn = Dout if Dout <= 2048 else 2048
    Dout_p = ((Dout + tn - 1) // tn) * tn
    if Dout_p != Dout:
        w = jnp.pad(w, ((0, 0), (0, Dout_p - Dout)))
        b = jnp.pad(b, ((0, 0), (0, Dout_p - Dout)))

    est = 2 * (ts * D * 4 + D * tn * 2 + tn * 4 + ts * tn * 4)   # double-buffered blocks
    out = pl.pallas_call(
        linear_kernel,
        out_shape=jax.ShapeDtypeStruct((B, S, Dout_p), jnp.float32),
        grid_spec=pltpu.PrefetchScalarGridSpec(
            num_scalar_prefetch=0, grid=(Dout_p // tn, B, S // ts),
            in_specs=[pl.BlockSpec((1, ts, D), lambda n, bb, s: (bb, s, 0)),
                      pl.BlockSpec((D, tn), lambda n, bb, s: (0, n)),
                      pl.BlockSpec((1, tn), lambda n, bb, s: (0, n))],
            out_specs=pl.BlockSpec((1, ts, tn), lambda n, bb, s: (bb, s, n))),
        compiler_params=pltpu.CompilerParams(
            dimension_semantics=("parallel", "parallel", "parallel"),
            vmem_limit_bytes=_vmem_limit(int(est * 1.5))),
    )(x, w, b)
    return out[:, :, :Dout] if Dout_p != Dout else out


# Flipped off (once) if this JAX build rejects pl.Buffered(1) on a BlockSpec.
_SINGLE_BUFFER_WEIGHTS = [True]


def pallas_encoder_layer(x, mask_bias, lp, n_heads, d_k, fuse_input_ln, g_in, b_in):
    B, S, D = x.shape
    ts = _pick_tile(S, (512, 256, 128))
    ns = S // ts
    single = (ns == 1)
    assert single or not fuse_input_ln
    d_ff = lp["w1"].shape[1]

    weights = [g_in, b_in,
               lp["wqkv"], lp["bqkv"], lp["wo"], lp["bo"], lp["ga"], lp["ba"],
               lp["g1"], lp["b1"], lp["w1"], lp["bf1"], lp["w2"], lp["bf2"],
               lp["g2"], lp["b2"]]

    x_args = [x]
    if not single:
        # Full sequence for K/V, cast to bf16 once in XLA so the repeated
        # per-tile HBM reads are half-width (v5e HBM-BW relief).
        x_args.append(x.astype(jnp.bfloat16))
    args = (*x_args, mask_bias, *weights)

    # Rough per-grid-cell VMEM footprint: weights single-buffered, activation
    # blocks double-buffered, plus attention / FFN intermediates.
    est = (sum(_nbytes(w) for w in weights)
           + 4 * ts * D * 4                       # q tile in + out (2 bufs each)
           + (0 if single else 2 * S * D * 2)     # bf16 full-seq K/V block
           + 2 * S * 4                            # mask bias
           + ts * 3 * D * 4 + ts * d_ff * 4       # QKV + FFN hidden
           + 2 * n_heads * ts * S * 4)            # scores + softmax probs
    vmem = _vmem_limit(int(est * 1.5))

    def build(single_buffer_weights):
        # Constant-index weights gain nothing from double-buffering (no DMA to
        # hide) but pay 2x VMEM; request single buffering when supported.
        pipe = {"pipeline_mode": pl.Buffered(1)} if single_buffer_weights else {}
        x_specs = [pl.BlockSpec((1, ts, D), lambda b, s: (b, s, 0))]
        if not single:
            x_specs.append(pl.BlockSpec((1, S, D), lambda b, s: (b, 0, 0)))
        in_specs = (x_specs
                    + [pl.BlockSpec((1, 1, S), lambda b, s: (b, 0, 0))]
                    + [pl.BlockSpec(w.shape, lambda b, s: (0, 0), **pipe)
                       for w in weights])
        return pl.pallas_call(
            make_encoder_kernel(n_heads, d_k, fuse_input_ln, single),
            out_shape=jax.ShapeDtypeStruct((B, S, D), jnp.float32),
            grid_spec=pltpu.PrefetchScalarGridSpec(
                num_scalar_prefetch=0, grid=(B, ns),
                in_specs=in_specs,
                out_specs=pl.BlockSpec((1, ts, D), lambda b, s: (b, s, 0))),
            compiler_params=pltpu.CompilerParams(
                dimension_semantics=("parallel", "parallel"),
                vmem_limit_bytes=vmem))

    if _SINGLE_BUFFER_WEIGHTS[0]:
        try:
            return build(True)(*args)
        except Exception:          # pl.Buffered(1) unsupported -> default buffering
            _SINGLE_BUFFER_WEIGHTS[0] = False
    return build(False)(*args)


# ----------------------------- parameter init -----------------------------

def init_params(key, vocab_size, d_model, max_len, n_heads, d_ff, n_layers):
    def rnd(k, shape, dtype=jnp.float32, s=0.02):
        return (jax.random.normal(k, shape, jnp.float32) * s).astype(dtype)

    keys = jax.random.split(key, 3 + n_layers)
    ones_d = jnp.ones((1, d_model), jnp.float32)
    zeros_d = jnp.zeros((1, d_model), jnp.float32)

    params = {
        "tok_embed": rnd(keys[0], (vocab_size, d_model)),
        "pos_embed": rnd(keys[1], (max_len, d_model)),
        "emb_g": ones_d, "emb_b": zeros_d,
        "fc_w": rnd(keys[2], (d_model, vocab_size), jnp.bfloat16),
        "fc_b": jnp.zeros((1, vocab_size), jnp.float32),
        "layers": [],
    }
    for i in range(n_layers):
        lk = jax.random.split(keys[3 + i], 4)
        lp = {
            # fused [W_Q | W_K | W_V]: one (D, 3D) bf16 weight + (1, 3D) f32 bias
            "wqkv": rnd(lk[0], (d_model, 3 * d_model), jnp.bfloat16),
            "bqkv": jnp.zeros((1, 3 * d_model), jnp.float32),
            "wo": rnd(lk[1], (d_model, d_model), jnp.bfloat16), "bo": zeros_d,
            "ga": ones_d, "ba": zeros_d,          # MultiHeadAttention.norm
            "g1": ones_d, "b1": zeros_d,          # EncoderLayer.norm1
            "w1": rnd(lk[2], (d_model, d_ff), jnp.bfloat16),
            "bf1": jnp.zeros((1, d_ff), jnp.float32),
            "w2": rnd(lk[3], (d_ff, d_model), jnp.bfloat16),
            "bf2": zeros_d,
            "g2": ones_d, "b2": zeros_d,          # EncoderLayer.norm2
        }
        params["layers"].append(lp)
    return params


# ----------------------------- BERT forward -----------------------------

def bert_forward(params, input_ids, attention_mask, n_heads):
    B, S = input_ids.shape
    d_model = params["tok_embed"].shape[1]
    d_k = d_model // n_heads

    # TODO(synk): token/position embedding gather stays in XLA (a scalar-prefetch
    # row-gather kernel is not worth it at these shapes).
    pos = jnp.arange(S, dtype=jnp.int32)
    emb = (params["tok_embed"][input_ids]
           + params["pos_embed"][pos][None, :, :]).astype(jnp.float32)

    # masked_fill(mask == 0, -inf) as a large finite additive key bias (NaN-safe).
    mask_bias = jnp.where(attention_mask == 0, MASK_BIAS, 0.0
                          ).astype(jnp.float32)[:, None, :]            # (B, 1, S)

    layers = params["layers"]
    ts = _pick_tile(S, (512, 256, 128))
    single = (ts == S)

    if layers and single:
        x = emb   # embedding LayerNorm is fused into the first encoder kernel
    else:
        # zero layers, or multiple seq tiles: run the embedding LN once up front
        # (avoids re-normalizing the full sequence for every K/V tile).
        x = pallas_layernorm(emb, params["emb_g"], params["emb_b"])

    # TODO(synk): optional cross-pallas_call prefetch of the next layer's weights
    # (semaphore + VMEM outputs) to hide per-layer weight DMA at low batch.
    all_hidden_states = []
    for i, lp in enumerate(layers):
        x = pallas_encoder_layer(x, mask_bias, lp, n_heads, d_k,
                                 fuse_input_ln=(i == 0 and single),
                                 g_in=params["emb_g"], b_in=params["emb_b"])
        all_hidden_states.append(x)

    logits = pallas_linear(x, params["fc_w"], params["fc_b"])
    return logits, all_hidden_states


# ----------------------------- main -----------------------------

if __name__ == "__main__":
    vocab_size, d_model, max_len, n_heads, d_ff, n_layers = 32, 32, 16, 4, 64, 2
    B, S = 2, 8

    key = jax.random.PRNGKey(0)
    pkey, ikey = jax.random.split(key)
    params = init_params(pkey, vocab_size, d_model, max_len, n_heads, d_ff, n_layers)

    input_ids = jax.random.randint(ikey, (B, S), 0, vocab_size, dtype=jnp.int32)
    # second sequence has 2 padding positions masked out (never a fully-masked row)
    attention_mask = jnp.ones((B, S), jnp.int32).at[1, 6:].set(0)

    logits, all_hidden_states = bert_forward(params, input_ids, attention_mask, n_heads)
    jax.block_until_ready(logits)
    for h in all_hidden_states:
        jax.block_until_ready(h)

    assert logits.shape == (B, S, vocab_size)
    assert len(all_hidden_states) == n_layers
    assert all(h.shape == (B, S, d_model) for h in all_hidden_states)
    assert bool(jnp.all(jnp.isfinite(logits)))
    print("KERNEL_OK")
</pallas_src>

<mosaic_0001>
module attributes {stable_mosaic.version = 11 : i64} {
  func.func @kernel(%arg0: i32, %arg1: i32, %arg2: memref<1x8x32xf32, #tpu.memory_space<vmem>>, %arg3: memref<1x1x8xf32, #tpu.memory_space<vmem>>, %arg4: memref<1x32xf32, #tpu.memory_space<vmem>>, %arg5: memref<1x32xf32, #tpu.memory_space<vmem>>, %arg6: memref<32x96xbf16, #tpu.memory_space<vmem>>, %arg7: memref<1x96xf32, #tpu.memory_space<vmem>>, %arg8: memref<32x32xbf16, #tpu.memory_space<vmem>>, %arg9: memref<1x32xf32, #tpu.memory_space<vmem>>, %arg10: memref<1x32xf32, #tpu.memory_space<vmem>>, %arg11: memref<1x32xf32, #tpu.memory_space<vmem>>, %arg12: memref<1x32xf32, #tpu.memory_space<vmem>>, %arg13: memref<1x32xf32, #tpu.memory_space<vmem>>, %arg14: memref<32x64xbf16, #tpu.memory_space<vmem>>, %arg15: memref<1x64xf32, #tpu.memory_space<vmem>>, %arg16: memref<64x32xbf16, #tpu.memory_space<vmem>>, %arg17: memref<1x32xf32, #tpu.memory_space<vmem>>, %arg18: memref<1x32xf32, #tpu.memory_space<vmem>>, %arg19: memref<1x32xf32, #tpu.memory_space<vmem>>, %arg20: memref<1x8x32xf32, #tpu.memory_space<vmem>>) attributes {dimension_semantics = [#tpu.dimension_semantics<parallel>, #tpu.dimension_semantics<parallel>], iteration_bounds = array<i64: 2, 1>, scalar_prefetch = 0 : i64, scratch_operands = 0 : i64, tpu.core_type = #tpu.core_type<tc>, window_params = [{transform_indices = @transform_0, window_bounds = array<i64: 1, 8, 32>}, {transform_indices = @transform_1, window_bounds = array<i64: 1, 1, 8>}, {pipeline_mode = #tpu.pipeline_mode<synchronous>, transform_indices = @transform_2, window_bounds = array<i64: 1, 32>}, {pipeline_mode = #tpu.pipeline_mode<synchronous>, transform_indices = @transform_3, window_bounds = array<i64: 1, 32>}, {pipeline_mode = #tpu.pipeline_mode<synchronous>, transform_indices = @transform_4, window_bounds = array<i64: 32, 96>}, {pipeline_mode = #tpu.pipeline_mode<synchronous>, transform_indices = @transform_5, window_bounds = array<i64: 1, 96>}, {pipeline_mode = #tpu.pipeline_mode<synchronous>, transform_indices = @transform_6, window_bounds = array<i64: 32, 32>}, {pipeline_mode = #tpu.pipeline_mode<synchronous>, transform_indices = @transform_7, window_bounds = array<i64: 1, 32>}, {pipeline_mode = #tpu.pipeline_mode<synchronous>, transform_indices = @transform_8, window_bounds = array<i64: 1, 32>}, {pipeline_mode = #tpu.pipeline_mode<synchronous>, transform_indices = @transform_9, window_bounds = array<i64: 1, 32>}, {pipeline_mode = #tpu.pipeline_mode<synchronous>, transform_indices = @transform_10, window_bounds = array<i64: 1, 32>}, {pipeline_mode = #tpu.pipeline_mode<synchronous>, transform_indices = @transform_11, window_bounds = array<i64: 1, 32>}, {pipeline_mode = #tpu.pipeline_mode<synchronous>, transform_indices = @transform_12, window_bounds = array<i64: 32, 64>}, {pipeline_mode = #tpu.pipeline_mode<synchronous>, transform_indices = @transform_13, window_bounds = array<i64: 1, 64>}, {pipeline_mode = #tpu.pipeline_mode<synchronous>, transform_indices = @transform_14, window_bounds = array<i64: 64, 32>}, {pipeline_mode = #tpu.pipeline_mode<synchronous>, transform_indices = @transform_15, window_bounds = array<i64: 1, 32>}, {pipeline_mode = #tpu.pipeline_mode<synchronous>, transform_indices = @transform_16, window_bounds = array<i64: 1, 32>}, {pipeline_mode = #tpu.pipeline_mode<synchronous>, transform_indices = @transform_17, window_bounds = array<i64: 1, 32>}, {transform_indices = @transform_18, window_bounds = array<i64: 1, 8, 32>}]} {
    %c0 = arith.constant 0 : index
    %c0_0 = arith.constant 0 : index
    %c0_1 = arith.constant 0 : index
    %0 = vector.load %arg2[%c0, %c0_0, %c0_1] : memref<1x8x32xf32, #tpu.memory_space<vmem>>, vector<1x8x32xf32>
    %1 = vector.shape_cast %0 : vector<1x8x32xf32> to vector<8x32xf32>
    %c0_2 = arith.constant 0 : index
    %c0_3 = arith.constant 0 : index
    %c0_4 = arith.constant 0 : index
    %2 = vector.load %arg3[%c0_2, %c0_3, %c0_4] : memref<1x1x8xf32, #tpu.memory_space<vmem>>, vector<1x1x8xf32>
    %3 = vector.shape_cast %2 : vector<1x1x8xf32> to vector<1x8xf32>
    %c0_5 = arith.constant 0 : index
    %c0_6 = arith.constant 0 : index
    %4 = vector.load %arg4[%c0_5, %c0_6] : memref<1x32xf32, #tpu.memory_space<vmem>>, vector<1x32xf32>
    %c0_7 = arith.constant 0 : index
    %c0_8 = arith.constant 0 : index
    %5 = vector.load %arg5[%c0_7, %c0_8] : memref<1x32xf32, #tpu.memory_space<vmem>>, vector<1x32xf32>
    %cst = arith.constant dense<0.000000e+00> : vector<8xf32>
    %6 = vector.multi_reduction <add>, %1, %cst [1] : vector<8x32xf32> to vector<8xf32>
    %7 = vector.shape_cast %6 : vector<8xf32> to vector<8x1xf32>
    %cst_9 = arith.constant 3.200000e+01 : f32
    %8 = vector.broadcast %cst_9 : f32 to vector<8x1xf32>
    %9 = arith.divf %7, %8 : vector<8x1xf32>
    %10 = vector.broadcast %9 : vector<8x1xf32> to vector<8x32xf32>
    %11 = arith.subf %1, %10 : vector<8x32xf32>
    %12 = arith.mulf %11, %11 : vector<8x32xf32>
    %cst_10 = arith.constant dense<0.000000e+00> : vector<8xf32>
    %13 = vector.multi_reduction <add>, %12, %cst_10 [1] : vector<8x32xf32> to vector<8xf32>
    %14 = vector.shape_cast %13 : vector<8xf32> to vector<8x1xf32>
    %cst_11 = arith.constant 3.200000e+01 : f32
    %15 = vector.broadcast %cst_11 : f32 to vector<8x1xf32>
    %16 = arith.divf %14, %15 : vector<8x1xf32>
    %17 = vector.broadcast %9 : vector<8x1xf32> to vector<8x32xf32>
    %18 = arith.subf %1, %17 : vector<8x32xf32>
    %cst_12 = arith.constant 9.99999974E-6 : f32
    %19 = vector.broadcast %cst_12 : f32 to vector<8x1xf32>
    %20 = arith.addf %16, %19 : vector<8x1xf32>
    %21 = math.rsqrt %20 : vector<8x1xf32>
    %22 = vector.broadcast %21 : vector<8x1xf32> to vector<8x32xf32>
    %23 = arith.mulf %18, %22 : vector<8x32xf32>
    %24 = vector.broadcast %4 : vector<1x32xf32> to vector<8x32xf32>
    %25 = arith.mulf %23, %24 : vector<8x32xf32>
    %26 = vector.broadcast %5 : vector<1x32xf32> to vector<8x32xf32>
    %27 = arith.addf %25, %26 : vector<8x32xf32>
    %28 = arith.truncf %27 : vector<8x32xf32> to vector<8x32xbf16>
    %c0_13 = arith.constant 0 : index
    %c0_14 = arith.constant 0 : index
    %29 = vector.load %arg6[%c0_13, %c0_14] : memref<32x96xbf16, #tpu.memory_space<vmem>>, vector<32x96xbf16>
    %cst_15 = arith.constant dense<0.000000e+00> : vector<8x96xf32>
    %30 = tpu.matmul %28, %29, %cst_15 {dimension_numbers = #tpu.dot_dimension_numbers<[1], [0], [0], [1], [0, 0, 1, 1], [], []>} : vector<8x32xbf16>, vector<32x96xbf16>, vector<8x96xf32> -> vector<8x96xf32>
    %c0_16 = arith.constant 0 : index
    %c0_17 = arith.constant 0 : index
    %31 = vector.load %arg7[%c0_16, %c0_17] : memref<1x96xf32, #tpu.memory_space<vmem>>, vector<1x96xf32>
    %32 = vector.broadcast %31 : vector<1x96xf32> to vector<8x96xf32>
    %33 = arith.addf %30, %32 : vector<8x96xf32>
    %34 = vector.extract_strided_slice %33 {offsets = [0, 0], sizes = [8, 32], strides = [1, 1]} : vector<8x96xf32> to vector<8x32xf32>
    %35 = vector.extract_strided_slice %33 {offsets = [0, 32], sizes = [8, 32], strides = [1, 1]} : vector<8x96xf32> to vector<8x32xf32>
    %36 = vector.extract_strided_slice %33 {offsets = [0, 64], sizes = [8, 32], strides = [1, 1]} : vector<8x96xf32> to vector<8x32xf32>
    %cst_18 = arith.constant 0.353553385 : f32
    %37 = vector.broadcast %cst_18 : f32 to vector<8x32xf32>
    %38 = arith.mulf %34, %37 : vector<8x32xf32>
    %39 = vector.shape_cast %38 : vector<8x32xf32> to vector<8x4x8xf32>
    %40 = tpu.transpose %39, [1, 0, 2] : vector<8x4x8xf32> -> vector<4x8x8xf32>
    %41 = arith.truncf %40 : vector<4x8x8xf32> to vector<4x8x8xbf16>
    %42 = vector.shape_cast %35 : vector<8x32xf32> to vector<8x4x8xf32>
    %43 = tpu.transpose %42, [1, 0, 2] : vector<8x4x8xf32> -> vector<4x8x8xf32>
    %44 = arith.truncf %43 : vector<4x8x8xf32> to vector<4x8x8xbf16>
    %45 = vector.shape_cast %36 : vector<8x32xf32> to vector<8x4x8xf32>
    %46 = tpu.transpose %45, [1, 0, 2] : vector<8x4x8xf32> -> vector<4x8x8xf32>
    %47 = arith.truncf %46 : vector<4x8x8xf32> to vector<4x8x8xbf16>
    "tpu.trace_start"() <{level = 10 : i32, message = "hqd,hkd->hqk"}> : () -> ()
    %cst_19 = arith.constant dense<0.000000e+00> : vector<4x8x8xf32>
    %48 = tpu.matmul %41, %44, %cst_19 {dimension_numbers = #tpu.dot_dimension_numbers<[2], [2], [1], [1], [0, 0, 0, 1, 1, 1], [0], [0]>} : vector<4x8x8xbf16>, vector<4x8x8xbf16>, vector<4x8x8xf32> -> vector<4x8x8xf32>
    "tpu.trace_stop"() : () -> ()
    %49 = vector.shape_cast %3 : vector<1x8xf32> to vector<1x1x8xf32>
    %50 = vector.broadcast %49 : vector<1x1x8xf32> to vector<4x8x8xf32>
    %51 = arith.addf %48, %50 : vector<4x8x8xf32>
    %cst_20 = arith.constant dense<0xFF800000> : vector<4x8xf32>
    %52 = vector.multi_reduction <maximumf>, %51, %cst_20 [2] : vector<4x8x8xf32> to vector<4x8xf32>
    %53 = vector.shape_cast %52 : vector<4x8xf32> to vector<4x8x1xf32>
    %54 = vector.broadcast %53 : vector<4x8x1xf32> to vector<4x8x8xf32>
    %55 = arith.subf %51, %54 : vector<4x8x8xf32>
    %56 = math.exp %55 : vector<4x8x8xf32>
    %cst_21 = arith.constant dense<0.000000e+00> : vector<4x8xf32>
    %57 = vector.multi_reduction <add>, %56, %cst_21 [2] : vector<4x8x8xf32> to vector<4x8xf32>
    %58 = vector.shape_cast %57 : vector<4x8xf32> to vector<4x8x1xf32>
    %59 = vector.broadcast %58 : vector<4x8x1xf32> to vector<4x8x8xf32>
    %60 = arith.divf %56, %59 : vector<4x8x8xf32>
    %61 = arith.truncf %60 : vector<4x8x8xf32> to vector<4x8x8xbf16>
    "tpu.trace_start"() <{level = 10 : i32, message = "hqk,hkd->hqd"}> : () -> ()
    %cst_22 = arith.constant dense<0.000000e+00> : vector<4x8x8xf32>
    %62 = tpu.matmul %61, %47, %cst_22 {dimension_numbers = #tpu.dot_dimension_numbers<[2], [1], [1], [2], [0, 0, 0, 1, 1, 2], [0], [0]>} : vector<4x8x8xbf16>, vector<4x8x8xbf16>, vector<4x8x8xf32> -> vector<4x8x8xf32>
    "tpu.trace_stop"() : () -> ()
    %63 = tpu.transpose %62, [1, 0, 2] : vector<4x8x8xf32> -> vector<8x4x8xf32>
    %64 = vector.shape_cast %63 : vector<8x4x8xf32> to vector<8x32xf32>
    %65 = arith.truncf %64 : vector<8x32xf32> to vector<8x32xbf16>
    %c0_23 = arith.constant 0 : index
    %c0_24 = arith.constant 0 : index
    %66 = vector.load %arg8[%c0_23, %c0_24] : memref<32x32xbf16, #tpu.memory_space<vmem>>, vector<32x32xbf16>
    %cst_25 = arith.constant dense<0.000000e+00> : vector<8x32xf32>
    %67 = tpu.matmul %65, %66, %cst_25 {dimension_numbers = #tpu.dot_dimension_numbers<[1], [0], [0], [1], [0, 0, 1, 1], [], []>} : vector<8x32xbf16>, vector<32x32xbf16>, vector<8x32xf32> -> vector<8x32xf32>
    %c0_26 = arith.constant 0 : index
    %c0_27 = arith.constant 0 : index
    %68 = vector.load %arg9[%c0_26, %c0_27] : memref<1x32xf32, #tpu.memory_space<vmem>>, vector<1x32xf32>
    %69 = vector.broadcast %68 : vector<1x32xf32> to vector<8x32xf32>
    %70 = arith.addf %67, %69 : vector<8x32xf32>
    %71 = arith.addf %70, %27 : vector<8x32xf32>
    %c0_28 = arith.constant 0 : index
    %c0_29 = arith.constant 0 : index
    %72 = vector.load %arg10[%c0_28, %c0_29] : memref<1x32xf32, #tpu.memory_space<vmem>>, vector<1x32xf32>
    %c0_30 = arith.constant 0 : index
    %c0_31 = arith.constant 0 : index
    %73 = vector.load %arg11[%c0_30, %c0_31] : memref<1x32xf32, #tpu.memory_space<vmem>>, vector<1x32xf32>
    %cst_32 = arith.constant dense<0.000000e+00> : vector<8xf32>
    %74 = vector.multi_reduction <add>, %71, %cst_32 [1] : vector<8x32xf32> to vector<8xf32>
    %75 = vector.shape_cast %74 : vector<8xf32> to vector<8x1xf32>
    %cst_33 = arith.constant 3.200000e+01 : f32
    %76 = vector.broadcast %cst_33 : f32 to vector<8x1xf32>
    %77 = arith.divf %75, %76 : vector<8x1xf32>
    %78 = vector.broadcast %77 : vector<8x1xf32> to vector<8x32xf32>
    %79 = arith.subf %71, %78 : vector<8x32xf32>
    %80 = arith.mulf %79, %79 : vector<8x32xf32>
    %cst_34 = arith.constant dense<0.000000e+00> : vector<8xf32>
    %81 = vector.multi_reduction <add>, %80, %cst_34 [1] : vector<8x32xf32> to vector<8xf32>
    %82 = vector.shape_cast %81 : vector<8xf32> to vector<8x1xf32>
    %cst_35 = arith.constant 3.200000e+01 : f32
    %83 = vector.broadcast %cst_35 : f32 to vector<8x1xf32>
    %84 = arith.divf %82, %83 : vector<8x1xf32>
    %85 = vector.broadcast %77 : vector<8x1xf32> to vector<8x32xf32>
    %86 = arith.subf %71, %85 : vector<8x32xf32>
    %cst_36 = arith.constant 9.99999974E-6 : f32
    %87 = vector.broadcast %cst_36 : f32 to vector<8x1xf32>
    %88 = arith.addf %84, %87 : vector<8x1xf32>
    %89 = math.rsqrt %88 : vector<8x1xf32>
    %90 = vector.broadcast %89 : vector<8x1xf32> to vector<8x32xf32>
    %91 = arith.mulf %86, %90 : vector<8x32xf32>
    %92 = vector.broadcast %72 : vector<1x32xf32> to vector<8x32xf32>
    %93 = arith.mulf %91, %92 : vector<8x32xf32>
    %94 = vector.broadcast %73 : vector<1x32xf32> to vector<8x32xf32>
    %95 = arith.addf %93, %94 : vector<8x32xf32>
    %96 = arith.addf %27, %95 : vector<8x32xf32>
    %c0_37 = arith.constant 0 : index
    %c0_38 = arith.constant 0 : index
    %97 = vector.load %arg12[%c0_37, %c0_38] : memref<1x32xf32, #tpu.memory_space<vmem>>, vector<1x32xf32>
    %c0_39 = arith.constant 0 : index
    %c0_40 = arith.constant 0 : index
    %98 = vector.load %arg13[%c0_39, %c0_40] : memref<1x32xf32, #tpu.memory_space<vmem>>, vector<1x32xf32>
    %cst_41 = arith.constant dense<0.000000e+00> : vector<8xf32>
    %99 = vector.multi_reduction <add>, %96, %cst_41 [1] : vector<8x32xf32> to vector<8xf32>
    %100 = vector.shape_cast %99 : vector<8xf32> to vector<8x1xf32>
    %cst_42 = arith.constant 3.200000e+01 : f32
    %101 = vector.broadcast %cst_42 : f32 to vector<8x1xf32>
    %102 = arith.divf %100, %101 : vector<8x1xf32>
    %103 = vector.broadcast %102 : vector<8x1xf32> to vector<8x32xf32>
    %104 = arith.subf %96, %103 : vector<8x32xf32>
    %105 = arith.mulf %104, %104 : vector<8x32xf32>
    %cst_43 = arith.constant dense<0.000000e+00> : vector<8xf32>
    %106 = vector.multi_reduction <add>, %105, %cst_43 [1] : vector<8x32xf32> to vector<8xf32>
    %107 = vector.shape_cast %106 : vector<8xf32> to vector<8x1xf32>
    %cst_44 = arith.constant 3.200000e+01 : f32
    %108 = vector.broadcast %cst_44 : f32 to vector<8x1xf32>
    %109 = arith.divf %107, %108 : vector<8x1xf32>
    %110 = vector.broadcast %102 : vector<8x1xf32> to vector<8x32xf32>
    %111 = arith.subf %96, %110 : vector<8x32xf32>
    %cst_45 = arith.constant 9.99999974E-6 : f32
    %112 = vector.broadcast %cst_45 : f32 to vector<8x1xf32>
    %113 = arith.addf %109, %112 : vector<8x1xf32>
    %114 = math.rsqrt %113 : vector<8x1xf32>
    %115 = vector.broadcast %114 : vector<8x1xf32> to vector<8x32xf32>
    %116 = arith.mulf %111, %115 : vector<8x32xf32>
    %117 = vector.broadcast %97 : vector<1x32xf32> to vector<8x32xf32>
    %118 = arith.mulf %116, %117 : vector<8x32xf32>
    %119 = vector.broadcast %98 : vector<1x32xf32> to vector<8x32xf32>
    %120 = arith.addf %118, %119 : vector<8x32xf32>
    %121 = arith.truncf %120 : vector<8x32xf32> to vector<8x32xbf16>
    %c0_46 = arith.constant 0 : index
    %c0_47 = arith.constant 0 : index
    %122 = vector.load %arg14[%c0_46, %c0_47] : memref<32x64xbf16, #tpu.memory_space<vmem>>, vector<32x64xbf16>
    %cst_48 = arith.constant dense<0.000000e+00> : vector<8x64xf32>
    %123 = tpu.matmul %121, %122, %cst_48 {dimension_numbers = #tpu.dot_dimension_numbers<[1], [0], [0], [1], [0, 0, 1, 1], [], []>} : vector<8x32xbf16>, vector<32x64xbf16>, vector<8x64xf32> -> vector<8x64xf32>
    %c0_49 = arith.constant 0 : index
    %c0_50 = arith.constant 0 : index
    %124 = vector.load %arg15[%c0_49, %c0_50] : memref<1x64xf32, #tpu.memory_space<vmem>>, vector<1x64xf32>
    %125 = vector.broadcast %124 : vector<1x64xf32> to vector<8x64xf32>
    %126 = arith.addf %123, %125 : vector<8x64xf32>
    %cst_51 = arith.constant 0.000000e+00 : f32
    %127 = vector.broadcast %cst_51 : f32 to vector<8x64xf32>
    %128 = arith.maximumf %126, %127 : vector<8x64xf32>
    %129 = arith.truncf %128 : vector<8x64xf32> to vector<8x64xbf16>
    %c0_52 = arith.constant 0 : index
    %c0_53 = arith.constant 0 : index
    %130 = vector.load %arg16[%c0_52, %c0_53] : memref<64x32xbf16, #tpu.memory_space<vmem>>, vector<64x32xbf16>
    %cst_54 = arith.constant dense<0.000000e+00> : vector<8x32xf32>
    %131 = tpu.matmul %129, %130, %cst_54 {dimension_numbers = #tpu.dot_dimension_numbers<[1], [0], [0], [1], [0, 0, 1, 1], [], []>} : vector<8x64xbf16>, vector<64x32xbf16>, vector<8x32xf32> -> vector<8x32xf32>
    %c0_55 = arith.constant 0 : index
    %c0_56 = arith.constant 0 : index
    %132 = vector.load %arg17[%c0_55, %c0_56] : memref<1x32xf32, #tpu.memory_space<vmem>>, vector<1x32xf32>
    %133 = vector.broadcast %132 : vector<1x32xf32> to vector<8x32xf32>
    %134 = arith.addf %131, %133 : vector<8x32xf32>
    %135 = arith.addf %120, %134 : vector<8x32xf32>
    %c0_57 = arith.constant 0 : index
    %c0_58 = arith.constant 0 : index
    %136 = vector.load %arg18[%c0_57, %c0_58] : memref<1x32xf32, #tpu.memory_space<vmem>>, vector<1x32xf32>
    %c0_59 = arith.constant 0 : index
    %c0_60 = arith.constant 0 : index
    %137 = vector.load %arg19[%c0_59, %c0_60] : memref<1x32xf32, #tpu.memory_space<vmem>>, vector<1x32xf32>
    %cst_61 = arith.constant dense<0.000000e+00> : vector<8xf32>
    %138 = vector.multi_reduction <add>, %135, %cst_61 [1] : vector<8x32xf32> to vector<8xf32>
    %139 = vector.shape_cast %138 : vector<8xf32> to vector<8x1xf32>
    %cst_62 = arith.constant 3.200000e+01 : f32
    %140 = vector.broadcast %cst_62 : f32 to vector<8x1xf32>
    %141 = arith.divf %139, %140 : vector<8x1xf32>
    %142 = vector.broadcast %141 : vector<8x1xf32> to vector<8x32xf32>
    %143 = arith.subf %135, %142 : vector<8x32xf32>
    %144 = arith.mulf %143, %143 : vector<8x32xf32>
    %cst_63 = arith.constant dense<0.000000e+00> : vector<8xf32>
    %145 = vector.multi_reduction <add>, %144, %cst_63 [1] : vector<8x32xf32> to vector<8xf32>
    %146 = vector.shape_cast %145 : vector<8xf32> to vector<8x1xf32>
    %cst_64 = arith.constant 3.200000e+01 : f32
    %147 = vector.broadcast %cst_64 : f32 to vector<8x1xf32>
    %148 = arith.divf %146, %147 : vector<8x1xf32>
    %149 = vector.broadcast %141 : vector<8x1xf32> to vector<8x32xf32>
    %150 = arith.subf %135, %149 : vector<8x32xf32>
    %cst_65 = arith.constant 9.99999974E-6 : f32
    %151 = vector.broadcast %cst_65 : f32 to vector<8x1xf32>
    %152 = arith.addf %148, %151 : vector<8x1xf32>
    %153 = math.rsqrt %152 : vector<8x1xf32>
    %154 = vector.broadcast %153 : vector<8x1xf32> to vector<8x32xf32>
    %155 = arith.mulf %150, %154 : vector<8x32xf32>
    %156 = vector.broadcast %136 : vector<1x32xf32> to vector<8x32xf32>
    %157 = arith.mulf %155, %156 : vector<8x32xf32>
    %158 = vector.broadcast %137 : vector<1x32xf32> to vector<8x32xf32>
    %159 = arith.addf %157, %158 : vector<8x32xf32>
    %c0_66 = arith.constant 0 : index
    %c0_67 = arith.constant 0 : index
    %c0_68 = arith.constant 0 : index
    %160 = vector.load %arg20[%c0_66, %c0_67, %c0_68] : memref<1x8x32xf32, #tpu.memory_space<vmem>>, vector<1x8x32xf32>
    %161 = vector.shape_cast %160 : vector<1x8x32xf32> to vector<8x32xf32>
    %162 = vector.shape_cast %159 : vector<8x32xf32> to vector<1x8x32xf32>
    tpu.vector_store %arg20[%c0_66, %c0_67, %c0_68], %162 {strides = array<i32>} : memref<1x8x32xf32, #tpu.memory_space<vmem>>, vector<1x8x32xf32>,
    return
  }
  func.func @transform_0(%arg0: i32, %arg1: i32) -> (i32, i32, i32) {
    %c0_i32 = arith.constant 0 : i32
    %c0_i32_0 = arith.constant 0 : i32
    return %arg0, %arg1, %c0_i32 : i32, i32, i32
  }
  func.func @transform_1(%arg0: i32, %arg1: i32) -> (i32, i32, i32) {
    %c0_i32 = arith.constant 0 : i32
    %c0_i32_0 = arith.constant 0 : i32
    %c0_i32_1 = arith.constant 0 : i32
    return %arg0, %c0_i32, %c0_i32_0 : i32, i32, i32
  }
  func.func @transform_2(%arg0: i32, %arg1: i32) -> (i32, i32) {
    %c0_i32 = arith.constant 0 : i32
    %c0_i32_0 = arith.constant 0 : i32
    %c0_i32_1 = arith.constant 0 : i32
    return %c0_i32, %c0_i32_0 : i32, i32
  }
  func.func @transform_3(%arg0: i32, %arg1: i32) -> (i32, i32) {
    %c0_i32 = arith.constant 0 : i32
    %c0_i32_0 = arith.constant 0 : i32
    %c0_i32_1 = arith.constant 0 : i32
    return %c0_i32, %c0_i32_0 : i32, i32
  }
  func.func @transform_4(%arg0: i32, %arg1: i32) -> (i32, i32) {
    %c0_i32 = arith.constant 0 : i32
    %c0_i32_0 = arith.constant 0 : i32
    %c0_i32_1 = arith.constant 0 : i32
    return %c0_i32, %c0_i32_0 : i32, i32
  }
  func.func @transform_5(%arg0: i32, %arg1: i32) -> (i32, i32) {
    %c0_i32 = arith.constant 0 : i32
    %c0_i32_0 = arith.constant 0 : i32
    %c0_i32_1 = arith.constant 0 : i32
    return %c0_i32, %c0_i32_0 : i32, i32
  }
  func.func @transform_6(%arg0: i32, %arg1: i32) -> (i32, i32) {
    %c0_i32 = arith.constant 0 : i32
    %c0_i32_0 = arith.constant 0 : i32
    %c0_i32_1 = arith.constant 0 : i32
    return %c0_i32, %c0_i32_0 : i32, i32
  }
  func.func @transform_7(%arg0: i32, %arg1: i32) -> (i32, i32) {
    %c0_i32 = arith.constant 0 : i32
    %c0_i32_0 = arith.constant 0 : i32
    %c0_i32_1 = arith.constant 0 : i32
    return %c0_i32, %c0_i32_0 : i32, i32
  }
  func.func @transform_8(%arg0: i32, %arg1: i32) -> (i32, i32) {
    %c0_i32 = arith.constant 0 : i32
    %c0_i32_0 = arith.constant 0 : i32
    %c0_i32_1 = arith.constant 0 : i32
    return %c0_i32, %c0_i32_0 : i32, i32
  }
  func.func @transform_9(%arg0: i32, %arg1: i32) -> (i32, i32) {
    %c0_i32 = arith.constant 0 : i32
    %c0_i32_0 = arith.constant 0 : i32
    %c0_i32_1 = arith.constant 0 : i32
    return %c0_i32, %c0_i32_0 : i32, i32
  }
  func.func @transform_10(%arg0: i32, %arg1: i32) -> (i32, i32) {
    %c0_i32 = arith.constant 0 : i32
    %c0_i32_0 = arith.constant 0 : i32
    %c0_i32_1 = arith.constant 0 : i32
    return %c0_i32, %c0_i32_0 : i32, i32
  }
  func.func @transform_11(%arg0: i32, %arg1: i32) -> (i32, i32) {
    %c0_i32 = arith.constant 0 : i32
    %c0_i32_0 = arith.constant 0 : i32
    %c0_i32_1 = arith.constant 0 : i32
    return %c0_i32, %c0_i32_0 : i32, i32
  }
  func.func @transform_12(%arg0: i32, %arg1: i32) -> (i32, i32) {
    %c0_i32 = arith.constant 0 : i32
    %c0_i32_0 = arith.constant 0 : i32
    %c0_i32_1 = arith.constant 0 : i32
    return %c0_i32, %c0_i32_0 : i32, i32
  }
  func.func @transform_13(%arg0: i32, %arg1: i32) -> (i32, i32) {
    %c0_i32 = arith.constant 0 : i32
    %c0_i32_0 = arith.constant 0 : i32
    %c0_i32_1 = arith.constant 0 : i32
    return %c0_i32, %c0_i32_0 : i32, i32
  }
  func.func @transform_14(%arg0: i32, %arg1: i32) -> (i32, i32) {
    %c0_i32 = arith.constant 0 : i32
    %c0_i32_0 = arith.constant 0 : i32
    %c0_i32_1 = arith.constant 0 : i32
    return %c0_i32, %c0_i32_0 : i32, i32
  }
  func.func @transform_15(%arg0: i32, %arg1: i32) -> (i32, i32) {
    %c0_i32 = arith.constant 0 : i32
    %c0_i32_0 = arith.constant 0 : i32
    %c0_i32_1 = arith.constant 0 : i32
    return %c0_i32, %c0_i32_0 : i32, i32
  }
  func.func @transform_16(%arg0: i32, %arg1: i32) -> (i32, i32) {
    %c0_i32 = arith.constant 0 : i32
    %c0_i32_0 = arith.constant 0 : i32
    %c0_i32_1 = arith.constant 0 : i32
    return %c0_i32, %c0_i32_0 : i32, i32
  }
  func.func @transform_17(%arg0: i32, %arg1: i32) -> (i32, i32) {
    %c0_i32 = arith.constant 0 : i32
    %c0_i32_0 = arith.constant 0 : i32
    %c0_i32_1 = arith.constant 0 : i32
    return %c0_i32, %c0_i32_0 : i32, i32
  }
  func.func @transform_18(%arg0: i32, %arg1: i32) -> (i32, i32, i32) {
    %c0_i32 = arith.constant 0 : i32
    %c0_i32_0 = arith.constant 0 : i32
    return %arg0, %arg1, %c0_i32 : i32, i32, i32
  }
}

module attributes {stable_mosaic.version = 11 : i64} {
  func.func @kernel(%arg0: i32, %arg1: i32, %arg2: memref<1x8x32xf32, #tpu.memory_space<vmem>>, %arg3: memref<1x1x8xf32, #tpu.memory_space<vmem>>, %arg4: memref<1x32xf32, #tpu.memory_space<vmem>>, %arg5: memref<1x32xf32, #tpu.memory_space<vmem>>, %arg6: memref<32x96xbf16, #tpu.memory_space<vmem>>, %arg7: memref<1x96xf32, #tpu.memory_space<vmem>>, %arg8: memref<32x32xbf16, #tpu.memory_space<vmem>>, %arg9: memref<1x32xf32, #tpu.memory_space<vmem>>, %arg10: memref<1x32xf32, #tpu.memory_space<vmem>>, %arg11: memref<1x32xf32, #tpu.memory_space<vmem>>, %arg12: memref<1x32xf32, #tpu.memory_space<vmem>>, %arg13: memref<1x32xf32, #tpu.memory_space<vmem>>, %arg14: memref<32x64xbf16, #tpu.memory_space<vmem>>, %arg15: memref<1x64xf32, #tpu.memory_space<vmem>>, %arg16: memref<64x32xbf16, #tpu.memory_space<vmem>>, %arg17: memref<1x32xf32, #tpu.memory_space<vmem>>, %arg18: memref<1x32xf32, #tpu.memory_space<vmem>>, %arg19: memref<1x32xf32, #tpu.memory_space<vmem>>, %arg20: memref<1x8x32xf32, #tpu.memory_space<vmem>>) attributes {dimension_semantics = [#tpu.dimension_semantics<parallel>, #tpu.dimension_semantics<parallel>], iteration_bounds = array<i64: 2, 1>, scalar_prefetch = 0 : i64, scratch_operands = 0 : i64, tpu.core_type = #tpu.core_type<tc>, window_params = [{transform_indices = @transform_0, window_bounds = array<i64: 1, 8, 32>}, {transform_indices = @transform_1, window_bounds = array<i64: 1, 1, 8>}, {pipeline_mode = #tpu.pipeline_mode<synchronous>, transform_indices = @transform_2, window_bounds = array<i64: 1, 32>}, {pipeline_mode = #tpu.pipeline_mode<synchronous>, transform_indices = @transform_3, window_bounds = array<i64: 1, 32>}, {pipeline_mode = #tpu.pipeline_mode<synchronous>, transform_indices = @transform_4, window_bounds = array<i64: 32, 96>}, {pipeline_mode = #tpu.pipeline_mode<synchronous>, transform_indices = @transform_5, window_bounds = array<i64: 1, 96>}, {pipeline_mode = #tpu.pipeline_mode<synchronous>, transform_indices = @transform_6, window_bounds = array<i64: 32, 32>}, {pipeline_mode = #tpu.pipeline_mode<synchronous>, transform_indices = @transform_7, window_bounds = array<i64: 1, 32>}, {pipeline_mode = #tpu.pipeline_mode<synchronous>, transform_indices = @transform_8, window_bounds = array<i64: 1, 32>}, {pipeline_mode = #tpu.pipeline_mode<synchronous>, transform_indices = @transform_9, window_bounds = array<i64: 1, 32>}, {pipeline_mode = #tpu.pipeline_mode<synchronous>, transform_indices = @transform_10, window_bounds = array<i64: 1, 32>}, {pipeline_mode = #tpu.pipeline_mode<synchronous>, transform_indices = @transform_11, window_bounds = array<i64: 1, 32>}, {pipeline_mode = #tpu.pipeline_mode<synchronous>, transform_indices = @transform_12, window_bounds = array<i64: 32, 64>}, {pipeline_mode = #tpu.pipeline_mode<synchronous>, transform_indices = @transform_13, window_bounds = array<i64: 1, 64>}, {pipeline_mode = #tpu.pipeline_mode<synchronous>, transform_indices = @transform_14, window_bounds = array<i64: 64, 32>}, {pipeline_mode = #tpu.pipeline_mode<synchronous>, transform_indices = @transform_15, window_bounds = array<i64: 1, 32>}, {pipeline_mode = #tpu.pipeline_mode<synchronous>, transform_indices = @transform_16, window_bounds = array<i64: 1, 32>}, {pipeline_mode = #tpu.pipeline_mode<synchronous>, transform_indices = @transform_17, window_bounds = array<i64: 1, 32>}, {transform_indices = @transform_18, window_bounds = array<i64: 1, 8, 32>}]} {
    %c0 = arith.constant 0 : index
    %c0_0 = arith.constant 0 : index
    %c0_1 = arith.constant 0 : index
    %0 = vector.load %arg2[%c0, %c0_0, %c0_1] : memref<1x8x32xf32, #tpu.memory_space<vmem>>, vector<1x8x32xf32>
    %1 = vector.shape_cast %0 : vector<1x8x32xf32> to vector<8x32xf32>
    %c0_2 = arith.constant 0 : index
    %c0_3 = arith.constant 0 : index
    %c0_4 = arith.constant 0 : index
    %2 = vector.load %arg3[%c0_2, %c0_3, %c0_4] : memref<1x1x8xf32, #tpu.memory_space<vmem>>, vector<1x1x8xf32>
    %3 = vector.shape_cast %2 : vector<1x1x8xf32> to vector<1x8xf32>
    %c0_5 = arith.constant 0 : index
    %c0_6 = arith.constant 0 : index
    %4 = vector.load %arg4[%c0_5, %c0_6] : memref<1x32xf32, #tpu.memory_space<vmem>>, vector<1x32xf32>
    %c0_7 = arith.constant 0 : index
    %c0_8 = arith.constant 0 : index
    %5 = vector.load %arg5[%c0_7, %c0_8] : memref<1x32xf32, #tpu.memory_space<vmem>>, vector<1x32xf32>
    %cst = arith.constant dense<0.000000e+00> : vector<8xf32>
    %6 = vector.multi_reduction <add>, %1, %cst [1] : vector<8x32xf32> to vector<8xf32>
    %7 = vector.shape_cast %6 : vector<8xf32> to vector<8x1xf32>
    %cst_9 = arith.constant 3.200000e+01 : f32
    %8 = vector.broadcast %cst_9 : f32 to vector<8x1xf32>
    %9 = arith.divf %7, %8 : vector<8x1xf32>
    %10 = vector.broadcast %9 : vector<8x1xf32> to vector<8x32xf32>
    %11 = arith.subf %1, %10 : vector<8x32xf32>
    %12 = arith.mulf %11, %11 : vector<8x32xf32>
    %cst_10 = arith.constant dense<0.000000e+00> : vector<8xf32>
    %13 = vector.multi_reduction <add>, %12, %cst_10 [1] : vector<8x32xf32> to vector<8xf32>
    %14 = vector.shape_cast %13 : vector<8xf32> to vector<8x1xf32>
    %cst_11 = arith.constant 3.200000e+01 : f32
    %15 = vector.broadcast %cst_11 : f32 to vector<8x1xf32>
    %16 = arith.divf %14, %15 : vector<8x1xf32>
    %17 = vector.broadcast %9 : vector<8x1xf32> to vector<8x32xf32>
    %18 = arith.subf %1, %17 : vector<8x32xf32>
    %cst_12 = arith.constant 9.99999974E-6 : f32
    %19 = vector.broadcast %cst_12 : f32 to vector<8x1xf32>
    %20 = arith.addf %16, %19 : vector<8x1xf32>
    %21 = math.rsqrt %20 : vector<8x1xf32>
    %22 = vector.broadcast %21 : vector<8x1xf32> to vector<8x32xf32>
    %23 = arith.mulf %18, %22 : vector<8x32xf32>
    %24 = vector.broadcast %4 : vector<1x32xf32> to vector<8x32xf32>
    %25 = arith.mulf %23, %24 : vector<8x32xf32>
    %26 = vector.broadcast %5 : vector<1x32xf32> to vector<8x32xf32>
    %27 = arith.addf %25, %26 : vector<8x32xf32>
    %28 = arith.truncf %27 : vector<8x32xf32> to vector<8x32xbf16>
    %c0_13 = arith.constant 0 : index
    %c0_14 = arith.constant 0 : index
    %29 = vector.load %arg6[%c0_13, %c0_14] : memref<32x96xbf16, #tpu.memory_space<vmem>>, vector<32x96xbf16>
    %cst_15 = arith.constant dense<0.000000e+00> : vector<8x96xf32>
    %30 = tpu.matmul %28, %29, %cst_15 {dimension_numbers = #tpu.dot_dimension_numbers<[1], [0], [0], [1], [0, 0, 1, 1], [], []>} : vector<8x32xbf16>, vector<32x96xbf16>, vector<8x96xf32> -> vector<8x96xf32>
    %c0_16 = arith.constant 0 : index
    %c0_17 = arith.constant 0 : index
    %31 = vector.load %arg7[%c0_16, %c0_17] : memref<1x96xf32, #tpu.memory_space<vmem>>, vector<1x96xf32>
    %32 = vector.broadcast %31 : vector<1x96xf32> to vector<8x96xf32>
    %33 = arith.addf %30, %32 : vector<8x96xf32>
    %34 = vector.extract_strided_slice %33 {offsets = [0, 0], sizes = [8, 32], strides = [1, 1]} : vector<8x96xf32> to vector<8x32xf32>
    %35 = vector.extract_strided_slice %33 {offsets = [0, 32], sizes = [8, 32], strides = [1, 1]} : vector<8x96xf32> to vector<8x32xf32>
    %36 = vector.extract_strided_slice %33 {offsets = [0, 64], sizes = [8, 32], strides = [1, 1]} : vector<8x96xf32> to vector<8x32xf32>
    %cst_18 = arith.constant 0.353553385 : f32
    %37 = vector.broadcast %cst_18 : f32 to vector<8x32xf32>
    %38 = arith.mulf %34, %37 : vector<8x32xf32>
    %39 = vector.shape_cast %38 : vector<8x32xf32> to vector<8x4x8xf32>
    %40 = tpu.transpose %39, [1, 0, 2] : vector<8x4x8xf32> -> vector<4x8x8xf32>
    %41 = arith.truncf %40 : vector<4x8x8xf32> to vector<4x8x8xbf16>
    %42 = vector.shape_cast %35 : vector<8x32xf32> to vector<8x4x8xf32>
    %43 = tpu.transpose %42, [1, 0, 2] : vector<8x4x8xf32> -> vector<4x8x8xf32>
    %44 = arith.truncf %43 : vector<4x8x8xf32> to vector<4x8x8xbf16>
    %45 = vector.shape_cast %36 : vector<8x32xf32> to vector<8x4x8xf32>
    %46 = tpu.transpose %45, [1, 0, 2] : vector<8x4x8xf32> -> vector<4x8x8xf32>
    %47 = arith.truncf %46 : vector<4x8x8xf32> to vector<4x8x8xbf16>
    "tpu.trace_start"() <{level = 10 : i32, message = "hqd,hkd->hqk"}> : () -> ()
    %cst_19 = arith.constant dense<0.000000e+00> : vector<4x8x8xf32>
    %48 = tpu.matmul %41, %44, %cst_19 {dimension_numbers = #tpu.dot_dimension_numbers<[2], [2], [1], [1], [0, 0, 0, 1, 1, 1], [0], [0]>} : vector<4x8x8xbf16>, vector<4x8x8xbf16>, vector<4x8x8xf32> -> vector<4x8x8xf32>
    "tpu.trace_stop"() : () -> ()
    %49 = vector.shape_cast %3 : vector<1x8xf32> to vector<1x1x8xf32>
    %50 = vector.broadcast %49 : vector<1x1x8xf32> to vector<4x8x8xf32>
    %51 = arith.addf %48, %50 : vector<4x8x8xf32>
    %cst_20 = arith.constant dense<0xFF800000> : vector<4x8xf32>
    %52 = vector.multi_reduction <maximumf>, %51, %cst_20 [2] : vector<4x8x8xf32> to vector<4x8xf32>
    %53 = vector.shape_cast %52 : vector<4x8xf32> to vector<4x8x1xf32>
    %54 = vector.broadcast %53 : vector<4x8x1xf32> to vector<4x8x8xf32>
    %55 = arith.subf %51, %54 : vector<4x8x8xf32>
    %56 = math.exp %55 : vector<4x8x8xf32>
    %cst_21 = arith.constant dense<0.000000e+00> : vector<4x8xf32>
    %57 = vector.multi_reduction <add>, %56, %cst_21 [2] : vector<4x8x8xf32> to vector<4x8xf32>
    %58 = vector.shape_cast %57 : vector<4x8xf32> to vector<4x8x1xf32>
    %59 = vector.broadcast %58 : vector<4x8x1xf32> to vector<4x8x8xf32>
    %60 = arith.divf %56, %59 : vector<4x8x8xf32>
    %61 = arith.truncf %60 : vector<4x8x8xf32> to vector<4x8x8xbf16>
    "tpu.trace_start"() <{level = 10 : i32, message = "hqk,hkd->hqd"}> : () -> ()
    %cst_22 = arith.constant dense<0.000000e+00> : vector<4x8x8xf32>
    %62 = tpu.matmul %61, %47, %cst_22 {dimension_numbers = #tpu.dot_dimension_numbers<[2], [1], [1], [2], [0, 0, 0, 1, 1, 2], [0], [0]>} : vector<4x8x8xbf16>, vector<4x8x8xbf16>, vector<4x8x8xf32> -> vector<4x8x8xf32>
    "tpu.trace_stop"() : () -> ()
    %63 = tpu.transpose %62, [1, 0, 2] : vector<4x8x8xf32> -> vector<8x4x8xf32>
    %64 = vector.shape_cast %63 : vector<8x4x8xf32> to vector<8x32xf32>
    %65 = arith.truncf %64 : vector<8x32xf32> to vector<8x32xbf16>
    %c0_23 = arith.constant 0 : index
    %c0_24 = arith.constant 0 : index
    %66 = vector.load %arg8[%c0_23, %c0_24] : memref<32x32xbf16, #tpu.memory_space<vmem>>, vector<32x32xbf16>
    %cst_25 = arith.constant dense<0.000000e+00> : vector<8x32xf32>
    %67 = tpu.matmul %65, %66, %cst_25 {dimension_numbers = #tpu.dot_dimension_numbers<[1], [0], [0], [1], [0, 0, 1, 1], [], []>} : vector<8x32xbf16>, vector<32x32xbf16>, vector<8x32xf32> -> vector<8x32xf32>
    %c0_26 = arith.constant 0 : index
    %c0_27 = arith.constant 0 : index
    %68 = vector.load %arg9[%c0_26, %c0_27] : memref<1x32xf32, #tpu.memory_space<vmem>>, vector<1x32xf32>
    %69 = vector.broadcast %68 : vector<1x32xf32> to vector<8x32xf32>
    %70 = arith.addf %67, %69 : vector<8x32xf32>
    %71 = arith.addf %70, %27 : vector<8x32xf32>
    %c0_28 = arith.constant 0 : index
    %c0_29 = arith.constant 0 : index
    %72 = vector.load %arg10[%c0_28, %c0_29] : memref<1x32xf32, #tpu.memory_space<vmem>>, vector<1x32xf32>
    %c0_30 = arith.constant 0 : index
    %c0_31 = arith.constant 0 : index
    %73 = vector.load %arg11[%c0_30, %c0_31] : memref<1x32xf32, #tpu.memory_space<vmem>>, vector<1x32xf32>
    %cst_32 = arith.constant dense<0.000000e+00> : vector<8xf32>
    %74 = vector.multi_reduction <add>, %71, %cst_32 [1] : vector<8x32xf32> to vector<8xf32>
    %75 = vector.shape_cast %74 : vector<8xf32> to vector<8x1xf32>
    %cst_33 = arith.constant 3.200000e+01 : f32
    %76 = vector.broadcast %cst_33 : f32 to vector<8x1xf32>
    %77 = arith.divf %75, %76 : vector<8x1xf32>
    %78 = vector.broadcast %77 : vector<8x1xf32> to vector<8x32xf32>
    %79 = arith.subf %71, %78 : vector<8x32xf32>
    %80 = arith.mulf %79, %79 : vector<8x32xf32>
    %cst_34 = arith.constant dense<0.000000e+00> : vector<8xf32>
    %81 = vector.multi_reduction <add>, %80, %cst_34 [1] : vector<8x32xf32> to vector<8xf32>
    %82 = vector.shape_cast %81 : vector<8xf32> to vector<8x1xf32>
    %cst_35 = arith.constant 3.200000e+01 : f32
    %83 = vector.broadcast %cst_35 : f32 to vector<8x1xf32>
    %84 = arith.divf %82, %83 : vector<8x1xf32>
    %85 = vector.broadcast %77 : vector<8x1xf32> to vector<8x32xf32>
    %86 = arith.subf %71, %85 : vector<8x32xf32>
    %cst_36 = arith.constant 9.99999974E-6 : f32
    %87 = vector.broadcast %cst_36 : f32 to vector<8x1xf32>
    %88 = arith.addf %84, %87 : vector<8x1xf32>
    %89 = math.rsqrt %88 : vector<8x1xf32>
    %90 = vector.broadcast %89 : vector<8x1xf32> to vector<8x32xf32>
    %91 = arith.mulf %86, %90 : vector<8x32xf32>
    %92 = vector.broadcast %72 : vector<1x32xf32> to vector<8x32xf32>
    %93 = arith.mulf %91, %92 : vector<8x32xf32>
    %94 = vector.broadcast %73 : vector<1x32xf32> to vector<8x32xf32>
    %95 = arith.addf %93, %94 : vector<8x32xf32>
    %96 = arith.addf %27, %95 : vector<8x32xf32>
    %c0_37 = arith.constant 0 : index
    %c0_38 = arith.constant 0 : index
    %97 = vector.load %arg12[%c0_37, %c0_38] : memref<1x32xf32, #tpu.memory_space<vmem>>, vector<1x32xf32>
    %c0_39 = arith.constant 0 : index
    %c0_40 = arith.constant 0 : index
    %98 = vector.load %arg13[%c0_39, %c0_40] : memref<1x32xf32, #tpu.memory_space<vmem>>, vector<1x32xf32>
    %cst_41 = arith.constant dense<0.000000e+00> : vector<8xf32>
    %99 = vector.multi_reduction <add>, %96, %cst_41 [1] : vector<8x32xf32> to vector<8xf32>
    %100 = vector.shape_cast %99 : vector<8xf32> to vector<8x1xf32>
    %cst_42 = arith.constant 3.200000e+01 : f32
    %101 = vector.broadcast %cst_42 : f32 to vector<8x1xf32>
    %102 = arith.divf %100, %101 : vector<8x1xf32>
    %103 = vector.broadcast %102 : vector<8x1xf32> to vector<8x32xf32>
    %104 = arith.subf %96, %103 : vector<8x32xf32>
    %105 = arith.mulf %104, %104 : vector<8x32xf32>
    %cst_43 = arith.constant dense<0.000000e+00> : vector<8xf32>
    %106 = vector.multi_reduction <add>, %105, %cst_43 [1] : vector<8x32xf32> to vector<8xf32>
    %107 = vector.shape_cast %106 : vector<8xf32> to vector<8x1xf32>
    %cst_44 = arith.constant 3.200000e+01 : f32
    %108 = vector.broadcast %cst_44 : f32 to vector<8x1xf32>
    %109 = arith.divf %107, %108 : vector<8x1xf32>
    %110 = vector.broadcast %102 : vector<8x1xf32> to vector<8x32xf32>
    %111 = arith.subf %96, %110 : vector<8x32xf32>
    %cst_45 = arith.constant 9.99999974E-6 : f32
    %112 = vector.broadcast %cst_45 : f32 to vector<8x1xf32>
    %113 = arith.addf %109, %112 : vector<8x1xf32>
    %114 = math.rsqrt %113 : vector<8x1xf32>
    %115 = vector.broadcast %114 : vector<8x1xf32> to vector<8x32xf32>
    %116 = arith.mulf %111, %115 : vector<8x32xf32>
    %117 = vector.broadcast %97 : vector<1x32xf32> to vector<8x32xf32>
    %118 = arith.mulf %116, %117 : vector<8x32xf32>
    %119 = vector.broadcast %98 : vector<1x32xf32> to vector<8x32xf32>
    %120 = arith.addf %118, %119 : vector<8x32xf32>
    %121 = arith.truncf %120 : vector<8x32xf32> to vector<8x32xbf16>
    %c0_46 = arith.constant 0 : index
    %c0_47 = arith.constant 0 : index
    %122 = vector.load %arg14[%c0_46, %c0_47] : memref<32x64xbf16, #tpu.memory_space<vmem>>, vector<32x64xbf16>
    %cst_48 = arith.constant dense<0.000000e+00> : vector<8x64xf32>
    %123 = tpu.matmul %121, %122, %cst_48 {dimension_numbers = #tpu.dot_dimension_numbers<[1], [0], [0], [1], [0, 0, 1, 1], [], []>} : vector<8x32xbf16>, vector<32x64xbf16>, vector<8x64xf32> -> vector<8x64xf32>
    %c0_49 = arith.constant 0 : index
    %c0_50 = arith.constant 0 : index
    %124 = vector.load %arg15[%c0_49, %c0_50] : memref<1x64xf32, #tpu.memory_space<vmem>>, vector<1x64xf32>
    %125 = vector.broadcast %124 : vector<1x64xf32> to vector<8x64xf32>
    %126 = arith.addf %123, %125 : vector<8x64xf32>
    %cst_51 = arith.constant 0.000000e+00 : f32
    %127 = vector.broadcast %cst_51 : f32 to vector<8x64xf32>
    %128 = arith.maximumf %126, %127 : vector<8x64xf32>
    %129 = arith.truncf %128 : vector<8x64xf32> to vector<8x64xbf16>
    %c0_52 = arith.constant 0 : index
    %c0_53 = arith.constant 0 : index
    %130 = vector.load %arg16[%c0_52, %c0_53] : memref<64x32xbf16, #tpu.memory_space<vmem>>, vector<64x32xbf16>
    %cst_54 = arith.constant dense<0.000000e+00> : vector<8x32xf32>
    %131 = tpu.matmul %129, %130, %cst_54 {dimension_numbers = #tpu.dot_dimension_numbers<[1], [0], [0], [1], [0, 0, 1, 1], [], []>} : vector<8x64xbf16>, vector<64x32xbf16>, vector<8x32xf32> -> vector<8x32xf32>
    %c0_55 = arith.constant 0 : index
    %c0_56 = arith.constant 0 : index
    %132 = vector.load %arg17[%c0_55, %c0_56] : memref<1x32xf32, #tpu.memory_space<vmem>>, vector<1x32xf32>
    %133 = vector.broadcast %132 : vector<1x32xf32> to vector<8x32xf32>
    %134 = arith.addf %131, %133 : vector<8x32xf32>
    %135 = arith.addf %120, %134 : vector<8x32xf32>
    %c0_57 = arith.constant 0 : index
    %c0_58 = arith.constant 0 : index
    %136 = vector.load %arg18[%c0_57, %c0_58] : memref<1x32xf32, #tpu.memory_space<vmem>>, vector<1x32xf32>
    %c0_59 = arith.constant 0 : index
    %c0_60 = arith.constant 0 : index
    %137 = vector.load %arg19[%c0_59, %c0_60] : memref<1x32xf32, #tpu.memory_space<vmem>>, vector<1x32xf32>
    %cst_61 = arith.constant dense<0.000000e+00> : vector<8xf32>
    %138 = vector.multi_reduction <add>, %135, %cst_61 [1] : vector<8x32xf32> to vector<8xf32>
    %139 = vector.shape_cast %138 : vector<8xf32> to vector<8x1xf32>
    %cst_62 = arith.constant 3.200000e+01 : f32
    %140 = vector.broadcast %cst_62 : f32 to vector<8x1xf32>
    %141 = arith.divf %139, %140 : vector<8x1xf32>
    %142 = vector.broadcast %141 : vector<8x1xf32> to vector<8x32xf32>
    %143 = arith.subf %135, %142 : vector<8x32xf32>
    %144 = arith.mulf %143, %143 : vector<8x32xf32>
    %cst_63 = arith.constant dense<0.000000e+00> : vector<8xf32>
    %145 = vector.multi_reduction <add>, %144, %cst_63 [1] : vector<8x32xf32> to vector<8xf32>
    %146 = vector.shape_cast %145 : vector<8xf32> to vector<8x1xf32>
    %cst_64 = arith.constant 3.200000e+01 : f32
    %147 = vector.broadcast %cst_64 : f32 to vector<8x1xf32>
    %148 = arith.divf %146, %147 : vector<8x1xf32>
    %149 = vector.broadcast %141 : vector<8x1xf32> to vector<8x32xf32>
    %150 = arith.subf %135, %149 : vector<8x32xf32>
    %cst_65 = arith.constant 9.99999974E-6 : f32
    %151 = vector.broadcast %cst_65 : f32 to vector<8x1xf32>
    %152 = arith.addf %148, %151 : vector<8x1xf32>
    %153 = math.rsqrt %152 : vector<8x1xf32>
    %154 = vector.broadcast %153 : vector<8x1xf32> to vector<8x32xf32>
    %155 = arith.mulf %150, %154 : vector<8x32xf32>
    %156 = vector.broadcast %136 : vector<1x32xf32> to vector<8x32xf32>
    %157 = arith.mulf %155, %156 : vector<8x32xf32>
    %158 = vector.broadcast %137 : vector<1x32xf32> to vector<8x32xf32>
    %159 = arith.addf %157, %158 : vector<8x32xf32>
    %c0_66 = arith.constant 0 : index
    %c0_67 = arith.constant 0 : index
    %c0_68 = arith.constant 0 : index
    %160 = vector.load %arg20[%c0_66, %c0_67, %c0_68] : memref<1x8x32xf32, #tpu.memory_space<vmem>>, vector<1x8x32xf32>
    %161 = vector.shape_cast %160 : vector<1x8x32xf32> to vector<8x32xf32>
    %162 = vector.shape_cast %159 : vector<8x32xf32> to vector<1x8x32xf32>
    tpu.vector_store %arg20[%c0_66, %c0_67, %c0_68], %162 {strides = array<i32>} : memref<1x8x32xf32, #tpu.memory_space<vmem>>, vector<1x8x32xf32>,
    return
  }
  func.func @transform_0(%arg0: i32, %arg1: i32) -> (i32, i32, i32) {
    %c0_i32 = arith.constant 0 : i32
    %c0_i32_0 = arith.constant 0 : i32
    return %arg0, %arg1, %c0_i32 : i32, i32, i32
  }
  func.func @transform_1(%arg0: i32, %arg1: i32) -> (i32, i32, i32) {
    %c0_i32 = arith.constant 0 : i32
    %c0_i32_0 = arith.constant 0 : i32
    %c0_i32_1 = arith.constant 0 : i32
    return %arg0, %c0_i32, %c0_i32_0 : i32, i32, i32
  }
  func.func @transform_2(%arg0: i32, %arg1: i32) -> (i32, i32) {
    %c0_i32 = arith.constant 0 : i32
    %c0_i32_0 = arith.constant 0 : i32
    %c0_i32_1 = arith.constant 0 : i32
    return %c0_i32, %c0_i32_0 : i32, i32
  }
  func.func @transform_3(%arg0: i32, %arg1: i32) -> (i32, i32) {
    %c0_i32 = arith.constant 0 : i32
    %c0_i32_0 = arith.constant 0 : i32
    %c0_i32_1 = arith.constant 0 : i32
    return %c0_i32, %c0_i32_0 : i32, i32
  }
  func.func @transform_4(%arg0: i32, %arg1: i32) -> (i32, i32) {
    %c0_i32 = arith.constant 0 : i32
    %c0_i32_0 = arith.constant 0 : i32
    %c0_i32_1 = arith.constant 0 : i32
    return %c0_i32, %c0_i32_0 : i32, i32
  }
  func.func @transform_5(%arg0: i32, %arg1: i32) -> (i32, i32) {
    %c0_i32 = arith.constant 0 : i32
    %c0_i32_0 = arith.constant 0 : i32
    %c0_i32_1 = arith.constant 0 : i32
    return %c0_i32, %c0_i32_0 : i32, i32
  }
  func.func @transform_6(%arg0: i32, %arg1: i32) -> (i32, i32) {
    %c0_i32 = arith.constant 0 : i32
    %c0_i32_0 = arith.constant 0 : i32
    %c0_i32_1 = arith.constant 0 : i32
    return %c0_i32, %c0_i32_0 : i32, i32
  }
  func.func @transform_7(%arg0: i32, %arg1: i32) -> (i32, i32) {
    %c0_i32 = arith.constant 0 : i32
    %c0_i32_0 = arith.constant 0 : i32
    %c0_i32_1 = arith.constant 0 : i32
    return %c0_i32, %c0_i32_0 : i32, i32
  }
  func.func @transform_8(%arg0: i32, %arg1: i32) -> (i32, i32) {
    %c0_i32 = arith.constant 0 : i32
    %c0_i32_0 = arith.constant 0 : i32
    %c0_i32_1 = arith.constant 0 : i32
    return %c0_i32, %c0_i32_0 : i32, i32
  }
  func.func @transform_9(%arg0: i32, %arg1: i32) -> (i32, i32) {
    %c0_i32 = arith.constant 0 : i32
    %c0_i32_0 = arith.constant 0 : i32
    %c0_i32_1 = arith.constant 0 : i32
    return %c0_i32, %c0_i32_0 : i32, i32
  }
  func.func @transform_10(%arg0: i32, %arg1: i32) -> (i32, i32) {
    %c0_i32 = arith.constant 0 : i32
    %c0_i32_0 = arith.constant 0 : i32
    %c0_i32_1 = arith.constant 0 : i32
    return %c0_i32, %c0_i32_0 : i32, i32
  }
  func.func @transform_11(%arg0: i32, %arg1: i32) -> (i32, i32) {
    %c0_i32 = arith.constant 0 : i32
    %c0_i32_0 = arith.constant 0 : i32
    %c0_i32_1 = arith.constant 0 : i32
    return %c0_i32, %c0_i32_0 : i32, i32
  }
  func.func @transform_12(%arg0: i32, %arg1: i32) -> (i32, i32) {
    %c0_i32 = arith.constant 0 : i32
    %c0_i32_0 = arith.constant 0 : i32
    %c0_i32_1 = arith.constant 0 : i32
    return %c0_i32, %c0_i32_0 : i32, i32
  }
  func.func @transform_13(%arg0: i32, %arg1: i32) -> (i32, i32) {
    %c0_i32 = arith.constant 0 : i32
    %c0_i32_0 = arith.constant 0 : i32
    %c0_i32_1 = arith.constant 0 : i32
    return %c0_i32, %c0_i32_0 : i32, i32
  }
  func.func @transform_14(%arg0: i32, %arg1: i32) -> (i32, i32) {
    %c0_i32 = arith.constant 0 : i32
    %c0_i32_0 = arith.constant 0 : i32
    %c0_i32_1 = arith.constant 0 : i32
    return %c0_i32, %c0_i32_0 : i32, i32
  }
  func.func @transform_15(%arg0: i32, %arg1: i32) -> (i32, i32) {
    %c0_i32 = arith.constant 0 : i32
    %c0_i32_0 = arith.constant 0 : i32
    %c0_i32_1 = arith.constant 0 : i32
    return %c0_i32, %c0_i32_0 : i32, i32
  }
  func.func @transform_16(%arg0: i32, %arg1: i32) -> (i32, i32) {
    %c0_i32 = arith.constant 0 : i32
    %c0_i32_0 = arith.constant 0 : i32
    %c0_i32_1 = arith.constant 0 : i32
    return %c0_i32, %c0_i32_0 : i32, i32
  }
  func.func @transform_17(%arg0: i32, %arg1: i32) -> (i32, i32) {
    %c0_i32 = arith.constant 0 : i32
    %c0_i32_0 = arith.constant 0 : i32
    %c0_i32_1 = arith.constant 0 : i32
    return %c0_i32, %c0_i32_0 : i32, i32
  }
  func.func @transform_18(%arg0: i32, %arg1: i32) -> (i32, i32, i32) {
    %c0_i32 = arith.constant 0 : i32
    %c0_i32_0 = arith.constant 0 : i32
    return %arg0, %arg1, %c0_i32 : i32, i32, i32
  }
}

</mosaic_0001>

<llo_original>
// kernel: tpu_custom_call.1
$region0: #{tpu_custom_call.1}
  #allocation0 [shape = 'u32[]', space=smem, size = 0x4, offset = 0x4, fixed_abs, tag = 'smem constant byte address 0x4 - core index']
  #allocation1 [shape = 'u32[144,128]{1,0:T(1,128)}', space=vmem, size = 0x12000, scoped, tag = 'internal scratch']
  %s0 = inlined_call_operand.vmem [shape: f32[2,8,32], index: 0, kind: input, shape index: {}]
  %s1 = inlined_call_operand.vmem [shape: f32[2,1,8], index: 1, kind: input, shape index: {}]
  %s2 = inlined_call_operand.hbm [shape: f32[1,32], index: 2, kind: input, shape index: {}]
  %s3 = inlined_call_operand.hbm [shape: f32[1,32], index: 3, kind: input, shape index: {}]
  %s4 = inlined_call_operand.vmem [shape: bf16[32,96], index: 4, kind: input, shape index: {}]
  %s5 = inlined_call_operand.hbm [shape: f32[1,96], index: 5, kind: input, shape index: {}]
  %s6 = inlined_call_operand.vmem [shape: bf16[32,32], index: 6, kind: input, shape index: {}]
  %s7 = inlined_call_operand.hbm [shape: f32[1,32], index: 7, kind: input, shape index: {}]
  %s8 = inlined_call_operand.hbm [shape: f32[1,32], index: 8, kind: input, shape index: {}]
  %s9 = inlined_call_operand.hbm [shape: f32[1,32], index: 9, kind: input, shape index: {}]
  %s10 = inlined_call_operand.vmem [shape: f32[1,32], index: 10, kind: input, shape index: {}]
  %s11 = inlined_call_operand.vmem [shape: f32[1,32], index: 11, kind: input, shape index: {}]
  %s12 = inlined_call_operand.vmem [shape: bf16[32,64], index: 12, kind: input, shape index: {}]
  %s13 = inlined_call_operand.vmem [shape: f32[1,64], index: 13, kind: input, shape index: {}]
  %s14 = inlined_call_operand.vmem [shape: bf16[64,32], index: 14, kind: input, shape index: {}]
  %s15 = inlined_call_operand.vmem [shape: f32[1,32], index: 15, kind: input, shape index: {}]
  %s16 = inlined_call_operand.vmem [shape: f32[1,32], index: 16, kind: input, shape index: {}]
  %s17 = inlined_call_operand.vmem [shape: f32[1,32], index: 17, kind: input, shape index: {}]
  %s18 = inlined_call_operand.hbm [shape: f32[2,8,32], index: 18, kind: output, shape index: {}]
  %s19 = sld [smem:[#allocation0]]
  $region129: #{tpu_custom_call.1} parent=0
    _
  %s21 = ssub.s32 1, %s19
  %s22 = scalar_select 0, %s21, %s19
  $region1: #{tpu_custom_call.1} parent=0
    #allocation2 [shape = 'u8[512]{0}', space=vmem, size = 0x400, scoped, tag = 'input window, operand 2, single buffered']
    #allocation3 [shape = 's32[2]{0}', space=sflag, size = 0x8, scoped, tag = 'scoped memory for tpu_custom_call.1']
    #allocation4 [shape = 's32[2]{0}', space=sflag, size = 0x8, scoped, tag = 'scoped memory for tpu_custom_call.1']
    #allocation5 [shape = 'u8[512]{0}', space=vmem, size = 0x400, scoped, tag = 'input window, operand 3, single buffered']
    #allocation6 [shape = 's32[1]{0}', space=sflag, size = 0x4, scoped, tag = 'scoped memory for tpu_custom_call.1']
    #allocation7 [shape = 'u8[512]{0}', space=vmem, size = 0x400, scoped, tag = 'input window, operand 5, single buffered']
    #allocation8 [shape = 'u8[512]{0}', space=vmem, size = 0x400, scoped, tag = 'input window, operand 7, single buffered']
    #allocation9 [shape = 's32[1]{0}', space=sflag, size = 0x4, scoped, tag = 'scoped memory for tpu_custom_call.1']
    #allocation10 [shape = 'u8[512]{0}', space=vmem, size = 0x400, scoped, tag = 'input window, operand 8, single buffered']
    #allocation11 [shape = 'u8[512]{0}', space=vmem, size = 0x400, scoped, tag = 'input window, operand 9, single buffered']
    #allocation12 [shape = 's32[1]{0}', space=sflag, size = 0x4, scoped, tag = 'scoped memory for tpu_custom_call.1']
    #allocation13 [shape = 'u8[8192]{0}', space=vmem, size = 0x2000, scoped, tag = 'output window, operand 0']
    %23 = vsyncpa [#allocation3], 0
    %24 = vsyncpa [#allocation6], 0
    %25 = vsyncpa [#allocation9], 0
    %26 = vsyncpa [#allocation12], 0
    %27 = vsyncpa [#allocation4], 0
    %s28 = scalar_lea.sflag [#allocation4], 1
    %29 = vsyncpa %s28, 0
    loop: start=0, step=1, limit=4
    $region2: #{tpu_custom_call.1} parent=1 // loop_pre_header
      _
    $region3: #{tpu_custom_call.1} parent=1 // loop_header
      %s31 = sphi 0, %s35
      %p32 = scmp.ge.s32.totalorder %s31, 4
      %s38 = sphi 0, %s50
      %s39 = sphi 0, %s46
      %s40 = sphi 0, %s38
      %s41 = sphi 0, %s39
      %s42 = sphi 0, %s40
      %s43 = sphi 0, %s41
      %s55 = sphi 0, %s57
      %s58 = sphi 0, %s55
      %s59 = sphi 0, %s58
      %s75 = sphi 0, %s59
      %s81 = sphi 0, %s83
      %s84 = sphi 0, %s81
      %s85 = sphi 0, %s84
      %s101 = sphi 0, %s85
      %s105 = sphi 0, %s105
      %s107 = sphi 0, %s105
      %s108 = sphi 0, %s107
      %s122 = sphi 0, %s108
      %s126 = sphi 0, %s126
      %s128 = sphi 0, %s126
      %s129 = sphi 0, %s128
      %s143 = sphi 0, %s129
      %s147 = sphi 0, %s147
      %s149 = sphi 0, %s147
      %s150 = sphi 0, %s149
      %s164 = sphi 0, %s150
      %s168 = sphi 0, %s168
      %s170 = sphi 0, %s168
      %s171 = sphi 0, %s170
      %s185 = sphi 0, %s171
      %s189 = sphi 0, %s189
      %s191 = sphi 0, %s189
      %s192 = sphi 0, %s191
      %s206 = sphi 0, %s192
      %s210 = sphi 0, %s210
      %s212 = sphi 0, %s210
      %s213 = sphi 0, %s212
      %s227 = sphi 0, %s213
      %s231 = sphi 0, %s231
      %s233 = sphi 0, %s231
      %s234 = sphi 0, %s233
      %s248 = sphi 0, %s234
      %s252 = sphi 0, %s252
      %s254 = sphi 0, %s252
      %s255 = sphi 0, %s254
      %s269 = sphi 0, %s255
      %s273 = sphi 0, %s273
      %s275 = sphi 0, %s273
      %s276 = sphi 0, %s275
      %s290 = sphi 0, %s276
      %s294 = sphi 0, %s294
      %s296 = sphi 0, %s294
      %s297 = sphi 0, %s296
      %s311 = sphi 0, %s297
      %s315 = sphi 0, %s315
      %s317 = sphi 0, %s315
      %s318 = sphi 0, %s317
      %s332 = sphi 0, %s318
      %s336 = sphi 0, %s336
      %s338 = sphi 0, %s336
      %s339 = sphi 0, %s338
      %s353 = sphi 0, %s339
      %s357 = sphi 0, %s357
      %s359 = sphi 0, %s357
      %s360 = sphi 0, %s359
      %s374 = sphi 0, %s360
      %s378 = sphi 0, %s378
      %s380 = sphi 0, %s378
      %s381 = sphi 0, %s380
      %s395 = sphi 0, %s381
      %s399 = sphi 0, %s399
      %s401 = sphi 0, %s399
      %s402 = sphi 0, %s401
      %s416 = sphi 0, %s402
      %s420 = sphi 0, %s420
      %s422 = sphi 0, %s420
      %s423 = sphi 0, %s422
      %s437 = sphi 0, %s423
      %s445 = sphi 0, %s447
      %s448 = sphi 0, %s445
      %s449 = sphi 0, %s448
      %s465 = sphi 0, %s449
    $region4: #{tpu_custom_call.1} parent=1 // loop_header_branch
      %34 = sbr.rel (%p32) target = $region8
    $region5: #{tpu_custom_call.1} parent=1 // loop_body
      %s36 = ssub.s32 %s31, 1
      %s37 = ssub.s32 %s31, 2
      %s44 = sadd.s32 1, %s39
      %p45 = scmp.ge.s32.totalorder %s44, 1
      %s46 = scalar_select %p45, 0, %s44
      %s47 = sadd.s32 1, %s38
      %s48 = scalar_select %p45, %s47, %s38
      %p49 = scmp.ge.s32.totalorder %s48, 2
      %s50 = scalar_select %p49, 0, %s48
      %s51 = ssub.s32 %s38, %s50
      %s52 = ssub.s32 %s39, %s46
      %s53 = sor.u32 %s51, %s52
      %p54 = scmp.eq.s32.totalorder %s53, 0
      %s56 = sadd.s32 %s55, 1
      %s57 = scalar_select %p54, %s55, %s56
      %p60 = pneg %p54
      %p61 = scmp.eq.s32.totalorder %s31, 1
      %p62 = por %p60, %p61
      %p63 = scmp.ne.s32.totalorder %s55, %s58
      %p64 = scmp.eq.s32.totalorder %s31, 0
      %p65 = por %p63, %p64
      %p66 = scmp.ne.s32.totalorder %s55, %s58
      %p67 = scmp.eq.s32.totalorder %s36, 1
      %p68 = por %p66, %p67
      %p69 = scmp.ne.s32.totalorder %s58, %s59
      %p70 = scmp.eq.s32.totalorder %s36, 0
      %p71 = por %p69, %p70
      %p72 = scmp.ne.s32.totalorder %s58, %s59
      %p73 = scmp.eq.s32.totalorder %s37, 1
      %p74 = por %p72, %p73
      %p76 = scmp.ne.s32.totalorder %s59, %s75
      %p77 = scmp.eq.s32.totalorder %s37, 0
      %p78 = por %p76, %p77
      %s79 = ssub.s32 %s38, %s50
      %p80 = scmp.eq.s32.totalorder %s79, 0
      %s82 = sadd.s32 %s81, 1
      %s83 = scalar_select %p80, %s81, %s82
      %p86 = pneg %p80
      %p87 = scmp.eq.s32.totalorder %s31, 1
      %p88 = por %p86, %p87
      %p89 = scmp.ne.s32.totalorder %s81, %s84
      %p90 = scmp.eq.s32.totalorder %s31, 0
      %p91 = por %p89, %p90
      %p92 = scmp.ne.s32.totalorder %s81, %s84
      %p93 = scmp.eq.s32.totalorder %s36, 1
      %p94 = por %p92, %p93
      %p95 = scmp.ne.s32.totalorder %s84, %s85
      %p96 = scmp.eq.s32.totalorder %s36, 0
      %p97 = por %p95, %p96
      %p98 = scmp.ne.s32.totalorder %s84, %s85
      %p99 = scmp.eq.s32.totalorder %s37, 1
      %p100 = por %p98, %p99
      %p102 = scmp.ne.s32.totalorder %s85, %s101
      %p103 = scmp.eq.s32.totalorder %s37, 0
      %p104 = por %p102, %p103
      %s106 = sadd.s32 %s105, 1
      %p109 = scmp.eq.s32.totalorder %s31, 1
      %p110 = scmp.ne.s32.totalorder %s105, %s107
      %p111 = scmp.eq.s32.totalorder %s31, 0
      %p112 = por %p110, %p111
      %p113 = scmp.ne.s32.totalorder %s105, %s107
      %p114 = scmp.eq.s32.totalorder %s36, 1
      %p115 = por %p113, %p114
      %p116 = scmp.ne.s32.totalorder %s107, %s108
      %p117 = scmp.eq.s32.totalorder %s36, 0
      %p118 = por %p116, %p117
      %p119 = scmp.ne.s32.totalorder %s107, %s108
      %p120 = scmp.eq.s32.totalorder %s37, 1
      %p121 = por %p119, %p120
      %p123 = scmp.ne.s32.totalorder %s108, %s122
      %p124 = scmp.eq.s32.totalorder %s37, 0
      %p125 = por %p123, %p124
      %s127 = sadd.s32 %s126, 1
      %p130 = scmp.eq.s32.totalorder %s31, 1
      %p131 = scmp.ne.s32.totalorder %s126, %s128
      %p132 = scmp.eq.s32.totalorder %s31, 0
      %p133 = por %p131, %p132
      %p134 = scmp.ne.s32.totalorder %s126, %s128
      %p135 = scmp.eq.s32.totalorder %s36, 1
      %p136 = por %p134, %p135
      %p137 = scmp.ne.s32.totalorder %s128, %s129
      %p138 = scmp.eq.s32.totalorder %s36, 0
      %p139 = por %p137, %p138
      %p140 = scmp.ne.s32.totalorder %s128, %s129
      %p141 = scmp.eq.s32.totalorder %s37, 1
      %p142 = por %p140, %p141
      %p144 = scmp.ne.s32.totalorder %s129, %s143
      %p145 = scmp.eq.s32.totalorder %s37, 0
      %p146 = por %p144, %p145
      %s148 = sadd.s32 %s147, 1
      %p151 = scmp.eq.s32.totalorder %s31, 1
      %p152 = scmp.ne.s32.totalorder %s147, %s149
      %p153 = scmp.eq.s32.totalorder %s31, 0
      %p154 = por %p152, %p153
      %p155 = scmp.ne.s32.totalorder %s147, %s149
      %p156 = scmp.eq.s32.totalorder %s36, 1
      %p157 = por %p155, %p156
      %p158 = scmp.ne.s32.totalorder %s149, %s150
      %p159 = scmp.eq.s32.totalorder %s36, 0
      %p160 = por %p158, %p159
      %p161 = scmp.ne.s32.totalorder %s149, %s150
      %p162 = scmp.eq.s32.totalorder %s37, 1
      %p163 = por %p161, %p162
      %p165 = scmp.ne.s32.totalorder %s150, %s164
      %p166 = scmp.eq.s32.totalorder %s37, 0
      %p167 = por %p165, %p166
      %s169 = sadd.s32 %s168, 1
      %p172 = scmp.eq.s32.totalorder %s31, 1
      %p173 = scmp.ne.s32.totalorder %s168, %s170
      %p174 = scmp.eq.s32.totalorder %s31, 0
      %p175 = por %p173, %p174
      %p176 = scmp.ne.s32.totalorder %s168, %s170
      %p177 = scmp.eq.s32.totalorder %s36, 1
      %p178 = por %p176, %p177
      %p179 = scmp.ne.s32.totalorder %s170, %s171
      %p180 = scmp.eq.s32.totalorder %s36, 0
      %p181 = por %p179, %p180
      %p182 = scmp.ne.s32.totalorder %s170, %s171
      %p183 = scmp.eq.s32.totalorder %s37, 1
      %p184 = por %p182, %p183
      %p186 = scmp.ne.s32.totalorder %s171, %s185
      %p187 = scmp.eq.s32.totalorder %s37, 0
      %p188 = por %p186, %p187
      %s190 = sadd.s32 %s189, 1
      %p193 = scmp.eq.s32.totalorder %s31, 1
      %p194 = scmp.ne.s32.totalorder %s189, %s191
      %p195 = scmp.eq.s32.totalorder %s31, 0
      %p196 = por %p194, %p195
      %p197 = scmp.ne.s32.totalorder %s189, %s191
      %p198 = scmp.eq.s32.totalorder %s36, 1
      %p199 = por %p197, %p198
      %p200 = scmp.ne.s32.totalorder %s191, %s192
      %p201 = scmp.eq.s32.totalorder %s36, 0
      %p202 = por %p200, %p201
      %p203 = scmp.ne.s32.totalorder %s191, %s192
      %p204 = scmp.eq.s32.totalorder %s37, 1
      %p205 = por %p203, %p204
      %p207 = scmp.ne.s32.totalorder %s192, %s206
      %p208 = scmp.eq.s32.totalorder %s37, 0
      %p209 = por %p207, %p208
      %s211 = sadd.s32 %s210, 1
      %p214 = scmp.eq.s32.totalorder %s31, 1
      %p215 = scmp.ne.s32.totalorder %s210, %s212
      %p216 = scmp.eq.s32.totalorder %s31, 0
      %p217 = por %p215, %p216
      %p218 = scmp.ne.s32.totalorder %s210, %s212
      %p219 = scmp.eq.s32.totalorder %s36, 1
      %p220 = por %p218, %p219
      %p221 = scmp.ne.s32.totalorder %s212, %s213
      %p222 = scmp.eq.s32.totalorder %s36, 0
      %p223 = por %p221, %p222
      %p224 = scmp.ne.s32.totalorder %s212, %s213
      %p225 = scmp.eq.s32.totalorder %s37, 1
      %p226 = por %p224, %p225
      %p228 = scmp.ne.s32.totalorder %s213, %s227
      %p229 = scmp.eq.s32.totalorder %s37, 0
      %p230 = por %p228, %p229
      %s232 = sadd.s32 %s231, 1
      %p235 = scmp.eq.s32.totalorder %s31, 1
      %p236 = scmp.ne.s32.totalorder %s231, %s233
      %p237 = scmp.eq.s32.totalorder %s31, 0
      %p238 = por %p236, %p237
      %p239 = scmp.ne.s32.totalorder %s231, %s233
      %p240 = scmp.eq.s32.totalorder %s36, 1
      %p241 = por %p239, %p240
      %p242 = scmp.ne.s32.totalorder %s233, %s234
      %p243 = scmp.eq.s32.totalorder %s36, 0
      %p244 = por %p242, %p243
      %p245 = scmp.ne.s32.totalorder %s233, %s234
      %p246 = scmp.eq.s32.totalorder %s37, 1
      %p247 = por %p245, %p246
      %p249 = scmp.ne.s32.totalorder %s234, %s248
      %p250 = scmp.eq.s32.totalorder %s37, 0
      %p251 = por %p249, %p250
      %s253 = sadd.s32 %s252, 1
      %p256 = scmp.eq.s32.totalorder %s31, 1
      %p257 = scmp.ne.s32.totalorder %s252, %s254
      %p258 = scmp.eq.s32.totalorder %s31, 0
      %p259 = por %p257, %p258
      %p260 = scmp.ne.s32.totalorder %s252, %s254
      %p261 = scmp.eq.s32.totalorder %s36, 1
      %p262 = por %p260, %p261
      %p263 = scmp.ne.s32.totalorder %s254, %s255
      %p264 = scmp.eq.s32.totalorder %s36, 0
      %p265 = por %p263, %p264
      %p266 = scmp.ne.s32.totalorder %s254, %s255
      %p267 = scmp.eq.s32.totalorder %s37, 1
      %p268 = por %p266, %p267
      %p270 = scmp.ne.s32.totalorder %s255, %s269
      %p271 = scmp.eq.s32.totalorder %s37, 0
      %p272 = por %p270, %p271
      %s274 = sadd.s32 %s273, 1
      %p277 = scmp.eq.s32.totalorder %s31, 1
      %p278 = scmp.ne.s32.totalorder %s273, %s275
      %p279 = scmp.eq.s32.totalorder %s31, 0
      %p280 = por %p278, %p279
      %p281 = scmp.ne.s32.totalorder %s273, %s275
      %p282 = scmp.eq.s32.totalorder %s36, 1
      %p283 = por %p281, %p282
      %p284 = scmp.ne.s32.totalorder %s275, %s276
      %p285 = scmp.eq.s32.totalorder %s36, 0
      %p286 = por %p284, %p285
      %p287 = scmp.ne.s32.totalorder %s275, %s276
      %p288 = scmp.eq.s32.totalorder %s37, 1
      %p289 = por %p287, %p288
      %p291 = scmp.ne.s32.totalorder %s276, %s290
      %p292 = scmp.eq.s32.totalorder %s37, 0
      %p293 = por %p291, %p292
      %s295 = sadd.s32 %s294, 1
      %p298 = scmp.eq.s32.totalorder %s31, 1
      %p299 = scmp.ne.s32.totalorder %s294, %s296
      %p300 = scmp.eq.s32.totalorder %s31, 0
      %p301 = por %p299, %p300
      %p302 = scmp.ne.s32.totalorder %s294, %s296
      %p303 = scmp.eq.s32.totalorder %s36, 1
      %p304 = por %p302, %p303
      %p305 = scmp.ne.s32.totalorder %s296, %s297
      %p306 = scmp.eq.s32.totalorder %s36, 0
      %p307 = por %p305, %p306
      %p308 = scmp.ne.s32.totalorder %s296, %s297
      %p309 = scmp.eq.s32.totalorder %s37, 1
      %p310 = por %p308, %p309
      %p312 = scmp.ne.s32.totalorder %s297, %s311
      %p313 = scmp.eq.s32.totalorder %s37, 0
      %p314 = por %p312, %p313
      %s316 = sadd.s32 %s315, 1
      %p319 = scmp.eq.s32.totalorder %s31, 1
      %p320 = scmp.ne.s32.totalorder %s315, %s317
      %p321 = scmp.eq.s32.totalorder %s31, 0
      %p322 = por %p320, %p321
      %p323 = scmp.ne.s32.totalorder %s315, %s317
      %p324 = scmp.eq.s32.totalorder %s36, 1
      %p325 = por %p323, %p324
      %p326 = scmp.ne.s32.totalorder %s317, %s318
      %p327 = scmp.eq.s32.totalorder %s36, 0
      %p328 = por %p326, %p327
      %p329 = scmp.ne.s32.totalorder %s317, %s318
      %p330 = scmp.eq.s32.totalorder %s37, 1
      %p331 = por %p329, %p330
      %p333 = scmp.ne.s32.totalorder %s318, %s332
      %p334 = scmp.eq.s32.totalorder %s37, 0
      %p335 = por %p333, %p334
      %s337 = sadd.s32 %s336, 1
      %p340 = scmp.eq.s32.totalorder %s31, 1
      %p341 = scmp.ne.s32.totalorder %s336, %s338
      %p342 = scmp.eq.s32.totalorder %s31, 0
      %p343 = por %p341, %p342
      %p344 = scmp.ne.s32.totalorder %s336, %s338
      %p345 = scmp.eq.s32.totalorder %s36, 1
      %p346 = por %p344, %p345
      %p347 = scmp.ne.s32.totalorder %s338, %s339
      %p348 = scmp.eq.s32.totalorder %s36, 0
      %p349 = por %p347, %p348
      %p350 = scmp.ne.s32.totalorder %s338, %s339
      %p351 = scmp.eq.s32.totalorder %s37, 1
      %p352 = por %p350, %p351
      %p354 = scmp.ne.s32.totalorder %s339, %s353
      %p355 = scmp.eq.s32.totalorder %s37, 0
      %p356 = por %p354, %p355
      %s358 = sadd.s32 %s357, 1
      %p361 = scmp.eq.s32.totalorder %s31, 1
      %p362 = scmp.ne.s32.totalorder %s357, %s359
      %p363 = scmp.eq.s32.totalorder %s31, 0
      %p364 = por %p362, %p363
      %p365 = scmp.ne.s32.totalorder %s357, %s359
      %p366 = scmp.eq.s32.totalorder %s36, 1
      %p367 = por %p365, %p366
      %p368 = scmp.ne.s32.totalorder %s359, %s360
      %p369 = scmp.eq.s32.totalorder %s36, 0
      %p370 = por %p368, %p369
      %p371 = scmp.ne.s32.totalorder %s359, %s360
      %p372 = scmp.eq.s32.totalorder %s37, 1
      %p373 = por %p371, %p372
      %p375 = scmp.ne.s32.totalorder %s360, %s374
      %p376 = scmp.eq.s32.totalorder %s37, 0
      %p377 = por %p375, %p376
      %s379 = sadd.s32 %s378, 1
      %p382 = scmp.eq.s32.totalorder %s31, 1
      %p383 = scmp.ne.s32.totalorder %s378, %s380
      %p384 = scmp.eq.s32.totalorder %s31, 0
      %p385 = por %p383, %p384
      %p386 = scmp.ne.s32.totalorder %s378, %s380
      %p387 = scmp.eq.s32.totalorder %s36, 1
      %p388 = por %p386, %p387
      %p389 = scmp.ne.s32.totalorder %s380, %s381
      %p390 = scmp.eq.s32.totalorder %s36, 0
      %p391 = por %p389, %p390
      %p392 = scmp.ne.s32.totalorder %s380, %s381
      %p393 = scmp.eq.s32.totalorder %s37, 1
      %p394 = por %p392, %p393
      %p396 = scmp.ne.s32.totalorder %s381, %s395
      %p397 = scmp.eq.s32.totalorder %s37, 0
      %p398 = por %p396, %p397
      %s400 = sadd.s32 %s399, 1
      %p403 = scmp.eq.s32.totalorder %s31, 1
      %p404 = scmp.ne.s32.totalorder %s399, %s401
      %p405 = scmp.eq.s32.totalorder %s31, 0
      %p406 = por %p404, %p405
      %p407 = scmp.ne.s32.totalorder %s399, %s401
      %p408 = scmp.eq.s32.totalorder %s36, 1
      %p409 = por %p407, %p408
      %p410 = scmp.ne.s32.totalorder %s401, %s402
      %p411 = scmp.eq.s32.totalorder %s36, 0
      %p412 = por %p410, %p411
      %p413 = scmp.ne.s32.totalorder %s401, %s402
      %p414 = scmp.eq.s32.totalorder %s37, 1
      %p415 = por %p413, %p414
      %p417 = scmp.ne.s32.totalorder %s402, %s416
      %p418 = scmp.eq.s32.totalorder %s37, 0
      %p419 = por %p417, %p418
      %s421 = sadd.s32 %s420, 1
      %p424 = scmp.eq.s32.totalorder %s31, 1
      %p425 = scmp.ne.s32.totalorder %s420, %s422
      %p426 = scmp.eq.s32.totalorder %s31, 0
      %p427 = por %p425, %p426
      %p428 = scmp.ne.s32.totalorder %s420, %s422
      %p429 = scmp.eq.s32.totalorder %s36, 1
      %p430 = por %p428, %p429
      %p431 = scmp.ne.s32.totalorder %s422, %s423
      %p432 = scmp.eq.s32.totalorder %s36, 0
      %p433 = por %p431, %p432
      %p434 = scmp.ne.s32.totalorder %s422, %s423
      %p435 = scmp.eq.s32.totalorder %s37, 1
      %p436 = por %p434, %p435
      %p438 = scmp.ne.s32.totalorder %s423, %s437
      %p439 = scmp.eq.s32.totalorder %s37, 0
      %p440 = por %p438, %p439
      %s441 = ssub.s32 %s38, %s50
      %s442 = ssub.s32 %s39, %s46
      %s443 = sor.u32 %s441, %s442
      %p444 = scmp.eq.s32.totalorder %s443, 0
      %s446 = sadd.s32 %s445, 1
      %s447 = scalar_select %p444, %s445, %s446
      %p450 = pneg %p444
      %p451 = scmp.eq.s32.totalorder %s31, 1
      %p452 = por %p450, %p451
      %p453 = scmp.ne.s32.totalorder %s445, %s448
      %p454 = scmp.eq.s32.totalorder %s31, 0
      %p455 = por %p453, %p454
      %p456 = scmp.ne.s32.totalorder %s445, %s448
      %p457 = scmp.eq.s32.totalorder %s36, 1
      %p458 = por %p456, %p457
      %p459 = scmp.ne.s32.totalorder %s448, %s449
      %p460 = scmp.eq.s32.totalorder %s36, 0
      %p461 = por %p459, %p460
      %p462 = scmp.ne.s32.totalorder %s448, %s449
      %p463 = scmp.eq.s32.totalorder %s37, 1
      %p464 = por %p462, %p463
      %p466 = scmp.ne.s32.totalorder %s449, %s465
      %p467 = scmp.eq.s32.totalorder %s37, 0
      %p468 = por %p466, %p467
      %p469 = scmp.le.s32.totalorder 1, %s31
      %p470 = scmp.lt.s32.totalorder %s31, 3
      %p471 = pnand %p469, %p470
      %p472 = pneg %p471
      // Predicated region
      $region9: #{tpu_custom_call.1} parent=5 // pred_check
        _
      $region10: #{tpu_custom_call.1} parent=5 // pred_check_branch
        %474 = sbr.rel (%p471) target = $region12
      $region11: #{tpu_custom_call.1} parent=5 // pred_region
        %s475 = ssub.s32 %s31, 1
        // Predicated region
        $region13: #{tpu_custom_call.1} parent=11 // pred_check
          %p476 = pneg %p118
        $region14: #{tpu_custom_call.1} parent=11 // pred_check_branch
          %478 = sbr.rel (%p476) target = $region16
        $region15: #{tpu_custom_call.1} parent=11 // pred_region
          %s480 = ssub.s32 16, 16
          %481 = vsyncadd [#allocation3], %s480
          %s483 = sshll.u32 [#allocation2], 4
          %s484 = int_to_ptr.vmem [resolvable:$true] %s483
          %486 = dma.hbm_to_vmem [thread:$0]  %s2, 16, %s484, [#allocation3]
        $region16: #{tpu_custom_call.1} parent=11 // pred_fallthru
          _
        // Predicated region
        $region17: #{tpu_custom_call.1} parent=11 // pred_check
          %p487 = pneg %p139
        $region18: #{tpu_custom_call.1} parent=11 // pred_check_branch
          %489 = sbr.rel (%p487) target = $region20
        $region19: #{tpu_custom_call.1} parent=11 // pred_region
          %s491 = ssub.s32 16, 16
          %492 = vsyncadd [#allocation6], %s491
          %s494 = sshll.u32 [#allocation5], 4
          %s495 = int_to_ptr.vmem [resolvable:$true] %s494
          %497 = dma.hbm_to_vmem [thread:$0]  %s3, 16, %s495, [#allocation6]
        $region20: #{tpu_custom_call.1} parent=11 // pred_fallthru
          _
        // Predicated region
        $region21: #{tpu_custom_call.1} parent=11 // pred_check
          %p498 = pneg %p160
        $region22: #{tpu_custom_call.1} parent=11 // pred_check_branch
          %500 = sbr.rel (%p498) target = $region24
        $region23: #{tpu_custom_call.1} parent=11 // pred_region
          _
        $region24: #{tpu_custom_call.1} parent=11 // pred_fallthru
          _
        // Predicated region
        $region25: #{tpu_custom_call.1} parent=11 // pred_check
          %p501 = pneg %p181
        $region26: #{tpu_custom_call.1} parent=11 // pred_check_branch
          %503 = sbr.rel (%p501) target = $region28
        $region27: #{tpu_custom_call.1} parent=11 // pred_region
          %s505 = ssub.s32 16, 16
          %506 = vsyncadd [#allocation6], %s505
          %s508 = sshll.u32 [#allocation7], 4
          %s509 = int_to_ptr.vmem [resolvable:$true] %s508
          %511 = dma.hbm_to_vmem [thread:$0]  %s5, 16, %s509, [#allocation6]
        $region28: #{tpu_custom_call.1} parent=11 // pred_fallthru
          _
        // Predicated region
        $region29: #{tpu_custom_call.1} parent=11 // pred_check
          %p512 = pneg %p202
        $region30: #{tpu_custom_call.1} parent=11 // pred_check_branch
          %514 = sbr.rel (%p512) target = $region32
        $region31: #{tpu_custom_call.1} parent=11 // pred_region
          _
        $region32: #{tpu_custom_call.1} parent=11 // pred_fallthru
          _
        // Predicated region
        $region33: #{tpu_custom_call.1} parent=11 // pred_check
          %p515 = pneg %p223
        $region34: #{tpu_custom_call.1} parent=11 // pred_check_branch
          %517 = sbr.rel (%p515) target = $region36
        $region35: #{tpu_custom_call.1} parent=11 // pred_region
          %s519 = ssub.s32 16, 16
          %520 = vsyncadd [#allocation9], %s519
          %s522 = sshll.u32 [#allocation8], 4
          %s523 = int_to_ptr.vmem [resolvable:$true] %s522
          %525 = dma.hbm_to_vmem [thread:$0]  %s7, 16, %s523, [#allocation9]
        $region36: #{tpu_custom_call.1} parent=11 // pred_fallthru
          _
        // Predicated region
        $region37: #{tpu_custom_call.1} parent=11 // pred_check
          %p526 = pneg %p244
        $region38: #{tpu_custom_call.1} parent=11 // pred_check_branch
          %528 = sbr.rel (%p526) target = $region40
        $region39: #{tpu_custom_call.1} parent=11 // pred_region
          %s530 = ssub.s32 16, 16
          %531 = vsyncadd [#allocation9], %s530
          %s533 = sshll.u32 [#allocation10], 4
          %s534 = int_to_ptr.vmem [resolvable:$true] %s533
          %536 = dma.hbm_to_vmem [thread:$0]  %s8, 16, %s534, [#allocation9]
        $region40: #{tpu_custom_call.1} parent=11 // pred_fallthru
          _
        // Predicated region
        $region41: #{tpu_custom_call.1} parent=11 // pred_check
          %p537 = pneg %p265
        $region42: #{tpu_custom_call.1} parent=11 // pred_check_branch
          %539 = sbr.rel (%p537) target = $region44
        $region43: #{tpu_custom_call.1} parent=11 // pred_region
          %s541 = ssub.s32 16, 16
          %542 = vsyncadd [#allocation12], %s541
          %s544 = sshll.u32 [#allocation11], 4
          %s545 = int_to_ptr.vmem [resolvable:$true] %s544
          %547 = dma.hbm_to_vmem [thread:$0]  %s9, 16, %s545, [#allocation12]
        $region44: #{tpu_custom_call.1} parent=11 // pred_fallthru
          _
        // Predicated region
        $region45: #{tpu_custom_call.1} parent=11 // pred_check
          %p548 = pneg %p286
        $region46: #{tpu_custom_call.1} parent=11 // pred_check_branch
          %550 = sbr.rel (%p548) target = $region48
        $region47: #{tpu_custom_call.1} parent=11 // pred_region
          _
        $region48: #{tpu_custom_call.1} parent=11 // pred_fallthru
          _
        // Predicated region
        $region49: #{tpu_custom_call.1} parent=11 // pred_check
          %p551 = pneg %p307
        $region50: #{tpu_custom_call.1} parent=11 // pred_check_branch
          %553 = sbr.rel (%p551) target = $region52
        $region51: #{tpu_custom_call.1} parent=11 // pred_region
          _
        $region52: #{tpu_custom_call.1} parent=11 // pred_fallthru
          _
        // Predicated region
        $region53: #{tpu_custom_call.1} parent=11 // pred_check
          %p554 = pneg %p328
        $region54: #{tpu_custom_call.1} parent=11 // pred_check_branch
          %556 = sbr.rel (%p554) target = $region56
        $region55: #{tpu_custom_call.1} parent=11 // pred_region
          _
        $region56: #{tpu_custom_call.1} parent=11 // pred_fallthru
          _
        // Predicated region
        $region57: #{tpu_custom_call.1} parent=11 // pred_check
          %p557 = pneg %p349
        $region58: #{tpu_custom_call.1} parent=11 // pred_check_branch
          %559 = sbr.rel (%p557) target = $region60
        $region59: #{tpu_custom_call.1} parent=11 // pred_region
          _
        $region60: #{tpu_custom_call.1} parent=11 // pred_fallthru
          _
        // Predicated region
        $region61: #{tpu_custom_call.1} parent=11 // pred_check
          %p560 = pneg %p370
        $region62: #{tpu_custom_call.1} parent=11 // pred_check_branch
          %562 = sbr.rel (%p560) target = $region64
        $region63: #{tpu_custom_call.1} parent=11 // pred_region
          _
        $region64: #{tpu_custom_call.1} parent=11 // pred_fallthru
          _
        // Predicated region
        $region65: #{tpu_custom_call.1} parent=11 // pred_check
          %p563 = pneg %p391
        $region66: #{tpu_custom_call.1} parent=11 // pred_check_branch
          %565 = sbr.rel (%p563) target = $region68
        $region67: #{tpu_custom_call.1} parent=11 // pred_region
          _
        $region68: #{tpu_custom_call.1} parent=11 // pred_fallthru
          _
        // Predicated region
        $region69: #{tpu_custom_call.1} parent=11 // pred_check
          %p566 = pneg %p412
        $region70: #{tpu_custom_call.1} parent=11 // pred_check_branch
          %568 = sbr.rel (%p566) target = $region72
        $region71: #{tpu_custom_call.1} parent=11 // pred_region
          _
        $region72: #{tpu_custom_call.1} parent=11 // pred_fallthru
          _
        // Predicated region
        $region73: #{tpu_custom_call.1} parent=11 // pred_check
          %p569 = pneg %p433
        $region74: #{tpu_custom_call.1} parent=11 // pred_check_branch
          %571 = sbr.rel (%p569) target = $region76
        $region75: #{tpu_custom_call.1} parent=11 // pred_region
          _
        $region76: #{tpu_custom_call.1} parent=11 // pred_fallthru
          _
      $region12: #{tpu_custom_call.1} parent=5 // pred_fallthru
        _
      %p572 = scmp.lt.s32.totalorder %s31, 2
      // Predicated region
      $region77: #{tpu_custom_call.1} parent=5 // pred_check
        %p573 = pneg %p572
      $region78: #{tpu_custom_call.1} parent=5 // pred_check_branch
        %575 = sbr.rel (%p573) target = $region80
      $region79: #{tpu_custom_call.1} parent=5 // pred_region
        // Predicated region
        $region81: #{tpu_custom_call.1} parent=79 // pred_check
          %p576 = pneg %p65
        $region82: #{tpu_custom_call.1} parent=79 // pred_check_branch
          %578 = sbr.rel (%p576) target = $region84
        $region83: #{tpu_custom_call.1} parent=79 // pred_region
          %p579 = scmp.lt.s32.totalorder %s38, 1
          %s580 = scalar_select %p579, %s38, 1
          %p581 = scmp.lt.s32.totalorder %s39, 0
          %s582 = scalar_select %p581, %s39, 0
          %s583 = sadd.s32 %s582, %s580
          %s584 = smul.addr %s583, 8
          %s585 = scalar_lea.vmem %s0, %s584
        $region84: #{tpu_custom_call.1} parent=79 // pred_fallthru
          _
        // Predicated region
        $region85: #{tpu_custom_call.1} parent=79 // pred_check
          %p586 = pneg %p91
        $region86: #{tpu_custom_call.1} parent=79 // pred_check_branch
          %588 = sbr.rel (%p586) target = $region88
        $region87: #{tpu_custom_call.1} parent=79 // pred_region
          %p589 = scmp.lt.s32.totalorder %s38, 1
          %s590 = scalar_select %p589, %s38, 1
          %s591 = scalar_lea.vmem %s1, %s590
        $region88: #{tpu_custom_call.1} parent=79 // pred_fallthru
          _
      $region80: #{tpu_custom_call.1} parent=5 // pred_fallthru
        _
      %p592 = scmp.le.s32.totalorder 1, %s31
      %p593 = scmp.lt.s32.totalorder %s31, 3
      %p594 = pnand %p592, %p593
      %p595 = pneg %p594
      // Predicated region
      $region89: #{tpu_custom_call.1} parent=5 // pred_check
        _
      $region90: #{tpu_custom_call.1} parent=5 // pred_check_branch
        %597 = sbr.rel (%p594) target = $region92
      $region91: #{tpu_custom_call.1} parent=5 // pred_region
        %s598 = ssub.s32 %s31, 1
        // Predicated region
        $region93: #{tpu_custom_call.1} parent=91 // pred_check
          %p599 = pneg %p118
        $region94: #{tpu_custom_call.1} parent=91 // pred_check_branch
          %601 = sbr.rel (%p599) target = $region96
        $region95: #{tpu_custom_call.1} parent=91 // pred_region
          %602 = dma.done [#allocation3], 16
        $region96: #{tpu_custom_call.1} parent=91 // pred_fallthru
          _
        // Predicated region
        $region97: #{tpu_custom_call.1} parent=91 // pred_check
          %p603 = pneg %p139
        $region98: #{tpu_custom_call.1} parent=91 // pred_check_branch
          %605 = sbr.rel (%p603) target = $region100
        $region99: #{tpu_custom_call.1} parent=91 // pred_region
          %606 = dma.done [#allocation6], 16
        $region100: #{tpu_custom_call.1} parent=91 // pred_fallthru
          _
        // Predicated region
        $region101: #{tpu_custom_call.1} parent=91 // pred_check
          %p607 = pneg %p181
        $region102: #{tpu_custom_call.1} parent=91 // pred_check_branch
          %609 = sbr.rel (%p607) target = $region104
        $region103: #{tpu_custom_call.1} parent=91 // pred_region
          %610 = dma.done [#allocation6], 16
        $region104: #{tpu_custom_call.1} parent=91 // pred_fallthru
          _
        // Predicated region
        $region105: #{tpu_custom_call.1} parent=91 // pred_check
          %p611 = pneg %p223
        $region106: #{tpu_custom_call.1} parent=91 // pred_check_branch
          %613 = sbr.rel (%p611) target = $region108
        $region107: #{tpu_custom_call.1} parent=91 // pred_region
          %614 = dma.done [#allocation9], 16
        $region108: #{tpu_custom_call.1} parent=91 // pred_fallthru
          _
        // Predicated region
        $region109: #{tpu_custom_call.1} parent=91 // pred_check
          %p615 = pneg %p244
        $region110: #{tpu_custom_call.1} parent=91 // pred_check_branch
          %617 = sbr.rel (%p615) target = $region112
        $region111: #{tpu_custom_call.1} parent=91 // pred_region
          %618 = dma.done [#allocation9], 16
        $region112: #{tpu_custom_call.1} parent=91 // pred_fallthru
          _
        // Predicated region
        $region113: #{tpu_custom_call.1} parent=91 // pred_check
          %p619 = pneg %p265
        $region114: #{tpu_custom_call.1} parent=91 // pred_check_branch
          %621 = sbr.rel (%p619) target = $region116
        $region115: #{tpu_custom_call.1} parent=91 // pred_region
          %622 = dma.done [#allocation12], 16
        $region116: #{tpu_custom_call.1} parent=91 // pred_fallthru
          _
        %p623 = scmp.lt.s32.totalorder %s40, 1
        %s624 = scalar_select %p623, %s40, 1
        %p625 = scmp.lt.s32.totalorder %s41, 0
        %s626 = scalar_select %p625, %s41, 0
        %s627 = sadd.s32 %s626, %s624
        %s628 = smul.addr %s627, 8
        %s629 = scalar_lea.vmem %s0, %s628
        %p630 = pneg %p71
        %p631 = pneg %p68
        %p632 = scmp.lt.s32.totalorder %s40, 1
        %s633 = scalar_select %p632, %s40, 1
        %s634 = scalar_lea.vmem %s1, %s633
        %p635 = pneg %p97
        %p636 = pneg %p94
        %p637 = pneg %p118
        %p638 = pneg %p115
        %p639 = pneg %p139
        %p640 = pneg %p136
        %p641 = pneg %p160
        %p642 = pneg %p157
        %p643 = pneg %p181
        %p644 = pneg %p178
        %p645 = pneg %p202
        %p646 = pneg %p199
        %p647 = pneg %p223
        %p648 = pneg %p220
        %p649 = pneg %p244
        %p650 = pneg %p241
        %p651 = pneg %p265
        %p652 = pneg %p262
        %p653 = pneg %p286
        %p654 = pneg %p283
        %p655 = pneg %p307
        %p656 = pneg %p304
        %p657 = pneg %p328
        %p658 = pneg %p325
        %p659 = pneg %p349
        %p660 = pneg %p346
        %p661 = pneg %p370
        %p662 = pneg %p367
        %p663 = pneg %p391
        %p664 = pneg %p388
        %p665 = pneg %p412
        %p666 = pneg %p409
        %p667 = pneg %p433
        %p668 = pneg %p430
        %p669 = pneg %p461
        %p670 = pneg %p458
        %s671 = sand.u32 %s448, 1
        %s672 = scalar_lea.sflag [#allocation4], %s671
        %s673 = sand.u32 %s448, 1
        %s674 = smul.addr %s673, 8
        %s675 = scalar_lea.vmem [#allocation13], %s674
        %p676 = scmp.lt.s32.totalorder %s40, 1
        %s677 = scalar_select %p676, %s40, 1
        %p678 = scmp.lt.s32.totalorder %s41, 0
        %s679 = scalar_select %p678, %s41, 0
        %s680 = sadd.s32 %s679, %s677
        %s681 = smul.addr %s680, 8
        %s682 = scalar_lea.vmem %s0, %s681
        %p683 = scmp.lt.s32.totalorder %s40, 1
        %s684 = scalar_select %p683, %s40, 1
        %s685 = scalar_lea.vmem %s1, %s684
        %v687 = vld [vmem:[%s682] sm:$0xff]
        %v688 = vld [vmem:[%s685] sm:$0x1]
        %v689 = vld [vmem:[#allocation2] sm:$0x1]
        %v690 = vld [vmem:[#allocation5] sm:$0x1]
        %vm691 = vcmask 261120
        %v692 = vsel %vm691, %v687, 0.0
        %693 = vadd.xlane.f32.xlu0 %v692
        %v694 = vpop.xlane.xlu0 %693
        %v695 = vrcp.pop 32.0
        %v696 = vmul.f32 %v694, %v695
        %v697 = vsub.f32 %v687, %v696
        %v698 = vmul.f32 %v697, %v697
        %v699 = vsel %vm691, %v698, 0.0
        %700 = vadd.xlane.f32.xlu0 %v699
        %v701 = vpop.xlane.xlu0 %700
        %v702 = vmul.f32 %v701, %v695
        %v703 = vadd.f32 %v702, 1e-05
        %v704 = vrsqrt.pop %v703
        %v705 = vmul.f32 %v697, %v704
        %v707 = vlaneseq
        %v708 = vshrl.u32 %v707, 7
        %v709 = vsub.s32 0, %v708
        %v710 = vrot.slane %v689, %v709
        %v712 = vmul.f32 %v705, %v710
        %v714 = vlaneseq
        %v715 = vshrl.u32 %v714, 7
        %v716 = vsub.s32 0, %v715
        %v717 = vrot.slane %v690, %v716
        %v719 = vadd.f32 %v712, %v717
        %v720 = vpack.c.bf16 %v719, %v719
        %v721 = vld [vmem:[%s4] sm:$0xf]
        %v722 = vld [vmem:[%s4 + $0x4] sm:$0xf]
        %v723 = vld [vmem:[%s4 + $0x8] sm:$0xf]
        %v724 = vld [vmem:[%s4 + $0xc] sm:$0xf]
        %v725 = vld [vmem:[#allocation7] sm:$0x1]
        %v727 = vlaneseq
        %v728 = vshrl.u32 %v727, 7
        %v729 = vsub.s32 0, %v728
        %v730 = vrot.slane %v725, %v729
        %v736 = vunpack.c.l.b16 %v721
        %v737 = vunpack.c.l.b16 %v722
        %v738 = vunpack.c.l.b16 %v723
        %v739 = vunpack.c.l.b16 %v724
        %v740 = vpack.c.b16 %v737, %v736
        %v741 = vpack.c.b16 %v739, %v738
        %v745 = vsel %vm691, %v720, 0
        %747 = vmatprep.subr.bf16.mxu0 0
        %748 = vmatpush1.bf16.msra.mxu0 %v740
        %749 = vmatprep.subr.bf16.mxu0 0
        %750 = vmatpush1.bf16.msra.mxu0 %v741
        %751 = vmatprep.subr.bf16.mxu0 0
        %752 = vmatpush1.bf16.msra.mxu0 0
        %753 = vmatprep.subr.bf16.mxu0 0
        %754 = vmatpush1.bf16.msra.mxu0 0
        %755 = vmatprep.subr.bf16.mxu0 0
        %756 = vmatpush1.bf16.msra.mxu0 0
        %757 = vmatprep.subr.bf16.mxu0 0
        %758 = vmatpush1.bf16.msra.mxu0 0
        %759 = vmatprep.subr.bf16.mxu0 0
        %760 = vmatpush1.bf16.msra.mxu0 0
        %761 = vmatprep.subr.bf16.mxu0 0
        %762 = vmatpush1.bf16.msra.mxu0 0
        %763 = vmatprep.subr.bf16.mxu0 0
        %764 = vmatpush1.bf16.msra.mxu0 0
        %765 = vmatprep.subr.bf16.mxu0 0
        %766 = vmatpush1.bf16.msra.mxu0 0
        %767 = vmatprep.subr.bf16.mxu0 0
        %768 = vmatpush1.bf16.msra.mxu0 0
        %769 = vmatprep.subr.bf16.mxu0 0
        %770 = vmatpush1.bf16.msra.mxu0 0
        %771 = vmatprep.subr.bf16.mxu0 0
        %772 = vmatpush1.bf16.msra.mxu0 0
        %773 = vmatprep.subr.bf16.mxu0 0
        %774 = vmatpush1.bf16.msra.mxu0 0
        %775 = vmatprep.subr.bf16.mxu0 0
        %776 = vmatpush1.bf16.msra.mxu0 0
        %777 = vmatprep.subr.bf16.mxu0 0
        %778 = vmatpush1.bf16.msra.mxu0 0
        %779 = vmatprep.mubr.bf16.mxu0 0
        %780 = vmatmul.mubr.bf16.gmra.mrb[0].mxu0 %v745
        %v781 = vpop.f32.mrb[0].mxu0
        %v782 = vadd.f32 %v730, %v781
        %v783 = vpop.f32.mrb[0].mxu0
        %v784 = vpop.f32.mrb[0].mxu0
        %v785 = vpop.f32.mrb[0].mxu0
        %786 = vdwg.mxu0
        %v787 = vmul.f32 %v782, 0.35355338
        %789 = vrot.lane.b32.xlu0 %v787, 120
        %v790 = vpop.permute.xlu0 %789
        %792 = vrot.lane.b32.xlu0 %v787, 112
        %v793 = vpop.permute.xlu0 %792
        %795 = vrot.lane.b32.xlu0 %v787, 104
        %v796 = vpop.permute.xlu0 %795
        %v798 = vcombine.low %v787, %v793
        %v799 = vcombine.high %v787, %v793
        %v801 = vunpack.c.l.s4 1983009808
        %v802 = vunpack.c.0.s8 %v801
        %v803 = vlaneseq
        %v804 = vshrl.u32 %v803, 7
        %v805 = vsub.s32 %v802, %v804
        %v806 = vrot.slane %v798, %v805
        %v808 = vunpack.c.l.s4 1983009808
        %v809 = vunpack.c.0.s8 %v808
        %v810 = vlaneseq
        %v811 = vshrl.u32 %v810, 7
        %v812 = vsub.s32 %v809, %v811
        %v813 = vrot.slane %v799, %v812
        %v814 = vcombine.low %v790, %v796
        %v815 = vcombine.high %v790, %v796
        %v817 = vunpack.c.l.s4 1983009808
        %v818 = vunpack.c.0.s8 %v817
        %v819 = vlaneseq
        %v820 = vshrl.u32 %v819, 7
        %v821 = vsub.s32 %v818, %v820
        %v822 = vrot.slane %v814, %v821
        %v824 = vunpack.c.l.s4 1983009808
        %v825 = vunpack.c.0.s8 %v824
        %v826 = vlaneseq
        %v827 = vshrl.u32 %v826, 7
        %v828 = vsub.s32 %v825, %v827
        %v829 = vrot.slane %v815, %v828
        %v830 = vcombine.low %v806, %v822
        %v831 = vcombine.high %v806, %v822
        %v833 = vunpack.c.l.s4 1934713408
        %v834 = vunpack.c.0.s8 %v833
        %v835 = vlaneseq
        %v836 = vshrl.u32 %v835, 7
        %v837 = vsub.s32 %v834, %v836
        %v838 = vrot.slane %v830, %v837
        %v840 = vunpack.c.l.s4 1934713408
        %v841 = vunpack.c.0.s8 %v840
        %v842 = vlaneseq
        %v843 = vshrl.u32 %v842, 7
        %v844 = vsub.s32 %v841, %v843
        %v845 = vrot.slane %v831, %v844
        %v846 = vcombine.low %v813, %v829
        %v847 = vcombine.high %v813, %v829
        %v849 = vunpack.c.l.s4 1934713408
        %v850 = vunpack.c.0.s8 %v849
        %v851 = vlaneseq
        %v852 = vshrl.u32 %v851, 7
        %v853 = vsub.s32 %v850, %v852
        %v854 = vrot.slane %v846, %v853
        %v856 = vunpack.c.l.s4 1934713408
        %v857 = vunpack.c.0.s8 %v856
        %v858 = vlaneseq
        %v859 = vshrl.u32 %v858, 7
        %v860 = vsub.s32 %v857, %v859
        %v861 = vrot.slane %v847, %v860
        %v862 = vcombine.high %v838, 0.0
        %v863 = vcombine.high %v845, 0.0
        %v864 = vcombine.high %v854, 0.0
        %v865 = vcombine.high %v861, 0.0
        %v866 = vcombine.low %v838, %v845
        %v868 = vunpack.c.l.s4 1983009808
        %v869 = vunpack.c.0.s8 %v868
        %v870 = vlaneseq
        %v871 = vshrl.u32 %v870, 7
        %v872 = vsub.s32 %v869, %v871
        %v873 = vrot.slane %v866, %v872
        %v874 = vcombine.low %v862, %v863
        %v876 = vunpack.c.l.s4 1983009808
        %v877 = vunpack.c.0.s8 %v876
        %v878 = vlaneseq
        %v879 = vshrl.u32 %v878, 7
        %v880 = vsub.s32 %v877, %v879
        %v881 = vrot.slane %v874, %v880
        %v882 = vcombine.low %v854, %v861
        %v884 = vunpack.c.l.s4 1983009808
        %v885 = vunpack.c.0.s8 %v884
        %v886 = vlaneseq
        %v887 = vshrl.u32 %v886, 7
        %v888 = vsub.s32 %v885, %v887
        %v889 = vrot.slane %v882, %v888
        %v890 = vcombine.low %v864, %v865
        %v892 = vunpack.c.l.s4 1983009808
        %v893 = vunpack.c.0.s8 %v892
        %v894 = vlaneseq
        %v895 = vshrl.u32 %v894, 7
        %v896 = vsub.s32 %v893, %v895
        %v897 = vrot.slane %v890, %v896
        %v898 = vcombine.low %v873, %v881
        %v899 = vcombine.high %v873, %v881
        %v901 = vunpack.c.l.s4 1934713408
        %v902 = vunpack.c.0.s8 %v901
        %v903 = vlaneseq
        %v904 = vshrl.u32 %v903, 7
        %v905 = vsub.s32 %v902, %v904
        %v906 = vrot.slane %v898, %v905
        %v908 = vunpack.c.l.s4 1934713408
        %v909 = vunpack.c.0.s8 %v908
        %v910 = vlaneseq
        %v911 = vshrl.u32 %v910, 7
        %v912 = vsub.s32 %v909, %v911
        %v913 = vrot.slane %v899, %v912
        %v914 = vcombine.low %v889, %v897
        %v915 = vcombine.high %v889, %v897
        %v917 = vunpack.c.l.s4 1934713408
        %v918 = vunpack.c.0.s8 %v917
        %v919 = vlaneseq
        %v920 = vshrl.u32 %v919, 7
        %v921 = vsub.s32 %v918, %v920
        %v922 = vrot.slane %v914, %v921
        %v924 = vunpack.c.l.s4 1934713408
        %v925 = vunpack.c.0.s8 %v924
        %v926 = vlaneseq
        %v927 = vshrl.u32 %v926, 7
        %v928 = vsub.s32 %v925, %v927
        %v929 = vrot.slane %v915, %v928
        %v930 = vcombine.low %v906, %v922
        %v931 = vcombine.high %v906, %v922
        %v932 = vcombine.low %v913, %v929
        %v933 = vcombine.high %v913, %v929
        %v934 = vpack.c.bf16 %v930, %v930
        %v935 = vpack.c.bf16 %v931, %v931
        %v936 = vpack.c.bf16 %v932, %v932
        %v937 = vpack.c.bf16 %v933, %v933
        %939 = vrot.lane.b32.xlu0 %v782, 120
        %v940 = vpop.permute.xlu0 %939
        %941 = vrot.lane.b32.xlu0 %v782, 112
        %v942 = vpop.permute.xlu0 %941
        %943 = vrot.lane.b32.xlu0 %v782, 104
        %v944 = vpop.permute.xlu0 %943
        %945 = vrot.lane.b32.xlu0 %v782, 96
        %v946 = vpop.permute.xlu0 %945
        %947 = vrot.lane.b32.xlu0 %v940, 96
        %v948 = vpop.permute.xlu0 %947
        %949 = vrot.lane.b32.xlu0 %v942, 96
        %v950 = vpop.permute.xlu0 %949
        %951 = vrot.lane.b32.xlu0 %v944, 96
        %v952 = vpop.permute.xlu0 %951
        %v957 = vcombine.low %v946, %v950
        %v958 = vcombine.high %v946, %v950
        %v960 = vunpack.c.l.s4 1983009808
        %v961 = vunpack.c.0.s8 %v960
        %v962 = vlaneseq
        %v963 = vshrl.u32 %v962, 7
        %v964 = vsub.s32 %v961, %v963
        %v965 = vrot.slane %v957, %v964
        %v967 = vunpack.c.l.s4 1983009808
        %v968 = vunpack.c.0.s8 %v967
        %v969 = vlaneseq
        %v970 = vshrl.u32 %v969, 7
        %v971 = vsub.s32 %v968, %v970
        %v972 = vrot.slane %v958, %v971
        %v973 = vcombine.low %v948, %v952
        %v974 = vcombine.high %v948, %v952
        %v976 = vunpack.c.l.s4 1983009808
        %v977 = vunpack.c.0.s8 %v976
        %v978 = vlaneseq
        %v979 = vshrl.u32 %v978, 7
        %v980 = vsub.s32 %v977, %v979
        %v981 = vrot.slane %v973, %v980
        %v983 = vunpack.c.l.s4 1983009808
        %v984 = vunpack.c.0.s8 %v983
        %v985 = vlaneseq
        %v986 = vshrl.u32 %v985, 7
        %v987 = vsub.s32 %v984, %v986
        %v988 = vrot.slane %v974, %v987
        %v989 = vcombine.low %v965, %v981
        %v990 = vcombine.high %v965, %v981
        %v992 = vunpack.c.l.s4 1934713408
        %v993 = vunpack.c.0.s8 %v992
        %v994 = vlaneseq
        %v995 = vshrl.u32 %v994, 7
        %v996 = vsub.s32 %v993, %v995
        %v997 = vrot.slane %v989, %v996
        %v999 = vunpack.c.l.s4 1934713408
        %v1000 = vunpack.c.0.s8 %v999
        %v1001 = vlaneseq
        %v1002 = vshrl.u32 %v1001, 7
        %v1003 = vsub.s32 %v1000, %v1002
        %v1004 = vrot.slane %v990, %v1003
        %v1005 = vcombine.low %v972, %v988
        %v1006 = vcombine.high %v972, %v988
        %v1008 = vunpack.c.l.s4 1934713408
        %v1009 = vunpack.c.0.s8 %v1008
        %v1010 = vlaneseq
        %v1011 = vshrl.u32 %v1010, 7
        %v1012 = vsub.s32 %v1009, %v1011
        %v1013 = vrot.slane %v1005, %v1012
        %v1015 = vunpack.c.l.s4 1934713408
        %v1016 = vunpack.c.0.s8 %v1015
        %v1017 = vlaneseq
        %v1018 = vshrl.u32 %v1017, 7
        %v1019 = vsub.s32 %v1016, %v1018
        %v1020 = vrot.slane %v1006, %v1019
        %v1021 = vcombine.high %v997, 0.0
        %v1022 = vcombine.high %v1004, 0.0
        %v1023 = vcombine.high %v1013, 0.0
        %v1024 = vcombine.high %v1020, 0.0
        %v1025 = vcombine.low %v997, %v1004
        %v1027 = vunpack.c.l.s4 1983009808
        %v1028 = vunpack.c.0.s8 %v1027
        %v1029 = vlaneseq
        %v1030 = vshrl.u32 %v1029, 7
        %v1031 = vsub.s32 %v1028, %v1030
        %v1032 = vrot.slane %v1025, %v1031
        %v1033 = vcombine.low %v1021, %v1022
        %v1035 = vunpack.c.l.s4 1983009808
        %v1036 = vunpack.c.0.s8 %v1035
        %v1037 = vlaneseq
        %v1038 = vshrl.u32 %v1037, 7
        %v1039 = vsub.s32 %v1036, %v1038
        %v1040 = vrot.slane %v1033, %v1039
        %v1041 = vcombine.low %v1013, %v1020
        %v1043 = vunpack.c.l.s4 1983009808
        %v1044 = vunpack.c.0.s8 %v1043
        %v1045 = vlaneseq
        %v1046 = vshrl.u32 %v1045, 7
        %v1047 = vsub.s32 %v1044, %v1046
        %v1048 = vrot.slane %v1041, %v1047
        %v1049 = vcombine.low %v1023, %v1024
        %v1051 = vunpack.c.l.s4 1983009808
        %v1052 = vunpack.c.0.s8 %v1051
        %v1053 = vlaneseq
        %v1054 = vshrl.u32 %v1053, 7
        %v1055 = vsub.s32 %v1052, %v1054
        %v1056 = vrot.slane %v1049, %v1055
        %v1057 = vcombine.low %v1032, %v1040
        %v1058 = vcombine.high %v1032, %v1040
        %v1060 = vunpack.c.l.s4 1934713408
        %v1061 = vunpack.c.0.s8 %v1060
        %v1062 = vlaneseq
        %v1063 = vshrl.u32 %v1062, 7
        %v1064 = vsub.s32 %v1061, %v1063
        %v1065 = vrot.slane %v1057, %v1064
        %v1067 = vunpack.c.l.s4 1934713408
        %v1068 = vunpack.c.0.s8 %v1067
        %v1069 = vlaneseq
        %v1070 = vshrl.u32 %v1069, 7
        %v1071 = vsub.s32 %v1068, %v1070
        %v1072 = vrot.slane %v1058, %v1071
        %v1073 = vcombine.low %v1048, %v1056
        %v1074 = vcombine.high %v1048, %v1056
        %v1076 = vunpack.c.l.s4 1934713408
        %v1077 = vunpack.c.0.s8 %v1076
        %v1078 = vlaneseq
        %v1079 = vshrl.u32 %v1078, 7
        %v1080 = vsub.s32 %v1077, %v1079
        %v1081 = vrot.slane %v1073, %v1080
        %v1083 = vunpack.c.l.s4 1934713408
        %v1084 = vunpack.c.0.s8 %v1083
        %v1085 = vlaneseq
        %v1086 = vshrl.u32 %v1085, 7
        %v1087 = vsub.s32 %v1084, %v1086
        %v1088 = vrot.slane %v1074, %v1087
        %v1089 = vcombine.low %v1065, %v1081
        %v1090 = vcombine.high %v1065, %v1081
        %v1091 = vcombine.low %v1072, %v1088
        %v1092 = vcombine.high %v1072, %v1088
        %v1093 = vpack.c.bf16 %v1089, %v1089
        %v1094 = vpack.c.bf16 %v1090, %v1090
        %v1095 = vpack.c.bf16 %v1091, %v1091
        %v1096 = vpack.c.bf16 %v1092, %v1092
        %1097 = vrot.lane.b32.xlu0 %v782, 64
        %v1098 = vpop.permute.xlu0 %1097
        %1099 = vrot.lane.b32.xlu0 %v940, 64
        %v1100 = vpop.permute.xlu0 %1099
        %1101 = vrot.lane.b32.xlu0 %v942, 64
        %v1102 = vpop.permute.xlu0 %1101
        %1103 = vrot.lane.b32.xlu0 %v944, 64
        %v1104 = vpop.permute.xlu0 %1103
        %v1109 = vcombine.low %v1098, %v1102
        %v1110 = vcombine.high %v1098, %v1102
        %v1112 = vunpack.c.l.s4 1983009808
        %v1113 = vunpack.c.0.s8 %v1112
        %v1114 = vlaneseq
        %v1115 = vshrl.u32 %v1114, 7
        %v1116 = vsub.s32 %v1113, %v1115
        %v1117 = vrot.slane %v1109, %v1116
        %v1119 = vunpack.c.l.s4 1983009808
        %v1120 = vunpack.c.0.s8 %v1119
        %v1121 = vlaneseq
        %v1122 = vshrl.u32 %v1121, 7
        %v1123 = vsub.s32 %v1120, %v1122
        %v1124 = vrot.slane %v1110, %v1123
        %v1125 = vcombine.low %v1100, %v1104
        %v1126 = vcombine.high %v1100, %v1104
        %v1128 = vunpack.c.l.s4 1983009808
        %v1129 = vunpack.c.0.s8 %v1128
        %v1130 = vlaneseq
        %v1131 = vshrl.u32 %v1130, 7
        %v1132 = vsub.s32 %v1129, %v1131
        %v1133 = vrot.slane %v1125, %v1132
        %v1135 = vunpack.c.l.s4 1983009808
        %v1136 = vunpack.c.0.s8 %v1135
        %v1137 = vlaneseq
        %v1138 = vshrl.u32 %v1137, 7
        %v1139 = vsub.s32 %v1136, %v1138
        %v1140 = vrot.slane %v1126, %v1139
        %v1141 = vcombine.low %v1117, %v1133
        %v1142 = vcombine.high %v1117, %v1133
        %v1144 = vunpack.c.l.s4 1934713408
        %v1145 = vunpack.c.0.s8 %v1144
        %v1146 = vlaneseq
        %v1147 = vshrl.u32 %v1146, 7
        %v1148 = vsub.s32 %v1145, %v1147
        %v1149 = vrot.slane %v1141, %v1148
        %v1151 = vunpack.c.l.s4 1934713408
        %v1152 = vunpack.c.0.s8 %v1151
        %v1153 = vlaneseq
        %v1154 = vshrl.u32 %v1153, 7
        %v1155 = vsub.s32 %v1152, %v1154
        %v1156 = vrot.slane %v1142, %v1155
        %v1157 = vcombine.low %v1124, %v1140
        %v1158 = vcombine.high %v1124, %v1140
        %v1160 = vunpack.c.l.s4 1934713408
        %v1161 = vunpack.c.0.s8 %v1160
        %v1162 = vlaneseq
        %v1163 = vshrl.u32 %v1162, 7
        %v1164 = vsub.s32 %v1161, %v1163
        %v1165 = vrot.slane %v1157, %v1164
        %v1167 = vunpack.c.l.s4 1934713408
        %v1168 = vunpack.c.0.s8 %v1167
        %v1169 = vlaneseq
        %v1170 = vshrl.u32 %v1169, 7
        %v1171 = vsub.s32 %v1168, %v1170
        %v1172 = vrot.slane %v1158, %v1171
        %v1173 = vcombine.high %v1149, 0.0
        %v1174 = vcombine.high %v1156, 0.0
        %v1175 = vcombine.high %v1165, 0.0
        %v1176 = vcombine.high %v1172, 0.0
        %v1177 = vcombine.low %v1149, %v1156
        %v1179 = vunpack.c.l.s4 1983009808
        %v1180 = vunpack.c.0.s8 %v1179
        %v1181 = vlaneseq
        %v1182 = vshrl.u32 %v1181, 7
        %v1183 = vsub.s32 %v1180, %v1182
        %v1184 = vrot.slane %v1177, %v1183
        %v1185 = vcombine.low %v1173, %v1174
        %v1187 = vunpack.c.l.s4 1983009808
        %v1188 = vunpack.c.0.s8 %v1187
        %v1189 = vlaneseq
        %v1190 = vshrl.u32 %v1189, 7
        %v1191 = vsub.s32 %v1188, %v1190
        %v1192 = vrot.slane %v1185, %v1191
        %v1193 = vcombine.low %v1165, %v1172
        %v1195 = vunpack.c.l.s4 1983009808
        %v1196 = vunpack.c.0.s8 %v1195
        %v1197 = vlaneseq
        %v1198 = vshrl.u32 %v1197, 7
        %v1199 = vsub.s32 %v1196, %v1198
        %v1200 = vrot.slane %v1193, %v1199
        %v1201 = vcombine.low %v1175, %v1176
        %v1203 = vunpack.c.l.s4 1983009808
        %v1204 = vunpack.c.0.s8 %v1203
        %v1205 = vlaneseq
        %v1206 = vshrl.u32 %v1205, 7
        %v1207 = vsub.s32 %v1204, %v1206
        %v1208 = vrot.slane %v1201, %v1207
        %v1209 = vcombine.low %v1184, %v1192
        %v1210 = vcombine.high %v1184, %v1192
        %v1212 = vunpack.c.l.s4 1934713408
        %v1213 = vunpack.c.0.s8 %v1212
        %v1214 = vlaneseq
        %v1215 = vshrl.u32 %v1214, 7
        %v1216 = vsub.s32 %v1213, %v1215
        %v1217 = vrot.slane %v1209, %v1216
        %v1219 = vunpack.c.l.s4 1934713408
        %v1220 = vunpack.c.0.s8 %v1219
        %v1221 = vlaneseq
        %v1222 = vshrl.u32 %v1221, 7
        %v1223 = vsub.s32 %v1220, %v1222
        %v1224 = vrot.slane %v1210, %v1223
        %v1225 = vcombine.low %v1200, %v1208
        %v1226 = vcombine.high %v1200, %v1208
        %v1228 = vunpack.c.l.s4 1934713408
        %v1229 = vunpack.c.0.s8 %v1228
        %v1230 = vlaneseq
        %v1231 = vshrl.u32 %v1230, 7
        %v1232 = vsub.s32 %v1229, %v1231
        %v1233 = vrot.slane %v1225, %v1232
        %v1235 = vunpack.c.l.s4 1934713408
        %v1236 = vunpack.c.0.s8 %v1235
        %v1237 = vlaneseq
        %v1238 = vshrl.u32 %v1237, 7
        %v1239 = vsub.s32 %v1236, %v1238
        %v1240 = vrot.slane %v1226, %v1239
        %v1241 = vcombine.low %v1217, %v1233
        %v1242 = vcombine.high %v1217, %v1233
        %v1243 = vcombine.low %v1224, %v1240
        %v1244 = vcombine.high %v1224, %v1240
        %v1245 = vpack.c.bf16 %v1241, %v1241
        %v1246 = vpack.c.bf16 %v1242, %v1242
        %v1247 = vpack.c.bf16 %v1243, %v1243
        %v1248 = vpack.c.bf16 %v1244, %v1244
        %v1250 = vlaneseq
        %v1251 = vshrl.u32 %v1250, 7
        %v1252 = vsub.s32 0, %v1251
        %v1253 = vrot.slane %v688, %v1252
        %vm1255 = vcmask 64512
        %v1257 = vsel %vm1255, %v934, 0
        %v1260 = vsel %vm1255, %v1093, 0
        %1262 = vmatprep.subr.bf16.mxu0 0
        %1263 = vmatpush1.bf16.xpose.msra.mxu0 %v1260
        %1264 = vmatprep.subr.bf16.mxu0 0
        %1265 = vmatpush1.bf16.xpose.msra.mxu0 0
        %1266 = vmatprep.subr.bf16.mxu0 0
        %1267 = vmatpush1.bf16.xpose.msra.mxu0 0
        %1268 = vmatprep.subr.bf16.mxu0 0
        %1269 = vmatpush1.bf16.xpose.msra.mxu0 0
        %1270 = vmatprep.subr.bf16.mxu0 0
        %1271 = vmatpush1.bf16.xpose.msra.mxu0 0
        %1272 = vmatprep.subr.bf16.mxu0 0
        %1273 = vmatpush1.bf16.xpose.msra.mxu0 0
        %1274 = vmatprep.subr.bf16.mxu0 0
        %1275 = vmatpush1.bf16.xpose.msra.mxu0 0
        %1276 = vmatprep.subr.bf16.mxu0 0
        %1277 = vmatpush1.bf16.xpose.msra.mxu0 0
        %1278 = vmatprep.subr.bf16.mxu0 0
        %1279 = vmatpush1.bf16.xpose.msra.mxu0 0
        %1280 = vmatprep.subr.bf16.mxu0 0
        %1281 = vmatpush1.bf16.xpose.msra.mxu0 0
        %1282 = vmatprep.subr.bf16.mxu0 0
        %1283 = vmatpush1.bf16.xpose.msra.mxu0 0
        %1284 = vmatprep.subr.bf16.mxu0 0
        %1285 = vmatpush1.bf16.xpose.msra.mxu0 0
        %1286 = vmatprep.subr.bf16.mxu0 0
        %1287 = vmatpush1.bf16.xpose.msra.mxu0 0
        %1288 = vmatprep.subr.bf16.mxu0 0
        %1289 = vmatpush1.bf16.xpose.msra.mxu0 0
        %1290 = vmatprep.subr.bf16.mxu0 0
        %1291 = vmatpush1.bf16.xpose.msra.mxu0 0
        %1292 = vmatprep.subr.bf16.mxu0 0
        %1293 = vmatpush1.bf16.xpose.msra.mxu0 0
        %1294 = vmatprep.mubr.bf16.mxu0 0
        %1295 = vmatmul.mubr.bf16.gmra.mrb[0].mxu0 %v1257
        %v1296 = vpop.f32.mrb[0].mxu0
        %v1297 = vadd.f32 %v1253, %v1296
        %v1298 = vpop.f32.mrb[0].mxu0
        %v1299 = vpop.f32.mrb[0].mxu0
        %v1300 = vpop.f32.mrb[0].mxu0
        %1301 = vdwg.mxu0
        %v1303 = vsel %vm1255, %v935, 0
        %v1306 = vsel %vm1255, %v1094, 0
        %1308 = vmatprep.subr.bf16.mxu0 0
        %1309 = vmatpush1.bf16.xpose.msra.mxu0 %v1306
        %1310 = vmatprep.subr.bf16.mxu0 0
        %1311 = vmatpush1.bf16.xpose.msra.mxu0 0
        %1312 = vmatprep.subr.bf16.mxu0 0
        %1313 = vmatpush1.bf16.xpose.msra.mxu0 0
        %1314 = vmatprep.subr.bf16.mxu0 0
        %1315 = vmatpush1.bf16.xpose.msra.mxu0 0
        %1316 = vmatprep.subr.bf16.mxu0 0
        %1317 = vmatpush1.bf16.xpose.msra.mxu0 0
        %1318 = vmatprep.subr.bf16.mxu0 0
        %1319 = vmatpush1.bf16.xpose.msra.mxu0 0
        %1320 = vmatprep.subr.bf16.mxu0 0
        %1321 = vmatpush1.bf16.xpose.msra.mxu0 0
        %1322 = vmatprep.subr.bf16.mxu0 0
        %1323 = vmatpush1.bf16.xpose.msra.mxu0 0
        %1324 = vmatprep.subr.bf16.mxu0 0
        %1325 = vmatpush1.bf16.xpose.msra.mxu0 0
        %1326 = vmatprep.subr.bf16.mxu0 0
        %1327 = vmatpush1.bf16.xpose.msra.mxu0 0
        %1328 = vmatprep.subr.bf16.mxu0 0
        %1329 = vmatpush1.bf16.xpose.msra.mxu0 0
        %1330 = vmatprep.subr.bf16.mxu0 0
        %1331 = vmatpush1.bf16.xpose.msra.mxu0 0
        %1332 = vmatprep.subr.bf16.mxu0 0
        %1333 = vmatpush1.bf16.xpose.msra.mxu0 0
        %1334 = vmatprep.subr.bf16.mxu0 0
        %1335 = vmatpush1.bf16.xpose.msra.mxu0 0
        %1336 = vmatprep.subr.bf16.mxu0 0
        %1337 = vmatpush1.bf16.xpose.msra.mxu0 0
        %1338 = vmatprep.subr.bf16.mxu0 0
        %1339 = vmatpush1.bf16.xpose.msra.mxu0 0
        %1340 = vmatprep.mubr.bf16.mxu0 0
        %1341 = vmatmul.mubr.bf16.gmra.mrb[0].mxu0 %v1303
        %v1342 = vpop.f32.mrb[0].mxu0
        %v1343 = vadd.f32 %v1253, %v1342
        %v1344 = vpop.f32.mrb[0].mxu0
        %v1345 = vpop.f32.mrb[0].mxu0
        %v1346 = vpop.f32.mrb[0].mxu0
        %1347 = vdwg.mxu0
        %v1349 = vsel %vm1255, %v936, 0
        %v1352 = vsel %vm1255, %v1095, 0
        %1354 = vmatprep.subr.bf16.mxu0 0
        %1355 = vmatpush1.bf16.xpose.msra.mxu0 %v1352
        %1356 = vmatprep.subr.bf16.mxu0 0
        %1357 = vmatpush1.bf16.xpose.msra.mxu0 0
        %1358 = vmatprep.subr.bf16.mxu0 0
        %1359 = vmatpush1.bf16.xpose.msra.mxu0 0
        %1360 = vmatprep.subr.bf16.mxu0 0
        %1361 = vmatpush1.bf16.xpose.msra.mxu0 0
        %1362 = vmatprep.subr.bf16.mxu0 0
        %1363 = vmatpush1.bf16.xpose.msra.mxu0 0
        %1364 = vmatprep.subr.bf16.mxu0 0
        %1365 = vmatpush1.bf16.xpose.msra.mxu0 0
        %1366 = vmatprep.subr.bf16.mxu0 0
        %1367 = vmatpush1.bf16.xpose.msra.mxu0 0
        %1368 = vmatprep.subr.bf16.mxu0 0
        %1369 = vmatpush1.bf16.xpose.msra.mxu0 0
        %1370 = vmatprep.subr.bf16.mxu0 0
        %1371 = vmatpush1.bf16.xpose.msra.mxu0 0
        %1372 = vmatprep.subr.bf16.mxu0 0
        %1373 = vmatpush1.bf16.xpose.msra.mxu0 0
        %1374 = vmatprep.subr.bf16.mxu0 0
        %1375 = vmatpush1.bf16.xpose.msra.mxu0 0
        %1376 = vmatprep.subr.bf16.mxu0 0
        %1377 = vmatpush1.bf16.xpose.msra.mxu0 0
        %1378 = vmatprep.subr.bf16.mxu0 0
        %1379 = vmatpush1.bf16.xpose.msra.mxu0 0
        %1380 = vmatprep.subr.bf16.mxu0 0
        %1381 = vmatpush1.bf16.xpose.msra.mxu0 0
        %1382 = vmatprep.subr.bf16.mxu0 0
        %1383 = vmatpush1.bf16.xpose.msra.mxu0 0
        %1384 = vmatprep.subr.bf16.mxu0 0
        %1385 = vmatpush1.bf16.xpose.msra.mxu0 0
        %1386 = vmatprep.mubr.bf16.mxu0 0
        %1387 = vmatmul.mubr.bf16.gmra.mrb[0].mxu0 %v1349
        %v1388 = vpop.f32.mrb[0].mxu0
        %v1389 = vadd.f32 %v1253, %v1388
        %v1390 = vpop.f32.mrb[0].mxu0
        %v1391 = vpop.f32.mrb[0].mxu0
        %v1392 = vpop.f32.mrb[0].mxu0
        %1393 = vdwg.mxu0
        %v1395 = vsel %vm1255, %v937, 0
        %v1398 = vsel %vm1255, %v1096, 0
        %1400 = vmatprep.subr.bf16.mxu0 0
        %1401 = vmatpush1.bf16.xpose.msra.mxu0 %v1398
        %1402 = vmatprep.subr.bf16.mxu0 0
        %1403 = vmatpush1.bf16.xpose.msra.mxu0 0
        %1404 = vmatprep.subr.bf16.mxu0 0
        %1405 = vmatpush1.bf16.xpose.msra.mxu0 0
        %1406 = vmatprep.subr.bf16.mxu0 0
        %1407 = vmatpush1.bf16.xpose.msra.mxu0 0
        %1408 = vmatprep.subr.bf16.mxu0 0
        %1409 = vmatpush1.bf16.xpose.msra.mxu0 0
        %1410 = vmatprep.subr.bf16.mxu0 0
        %1411 = vmatpush1.bf16.xpose.msra.mxu0 0
        %1412 = vmatprep.subr.bf16.mxu0 0
        %1413 = vmatpush1.bf16.xpose.msra.mxu0 0
        %1414 = vmatprep.subr.bf16.mxu0 0
        %1415 = vmatpush1.bf16.xpose.msra.mxu0 0
        %1416 = vmatprep.subr.bf16.mxu0 0
        %1417 = vmatpush1.bf16.xpose.msra.mxu0 0
        %1418 = vmatprep.subr.bf16.mxu0 0
        %1419 = vmatpush1.bf16.xpose.msra.mxu0 0
        %1420 = vmatprep.subr.bf16.mxu0 0
        %1421 = vmatpush1.bf16.xpose.msra.mxu0 0
        %1422 = vmatprep.subr.bf16.mxu0 0
        %1423 = vmatpush1.bf16.xpose.msra.mxu0 0
        %1424 = vmatprep.subr.bf16.mxu0 0
        %1425 = vmatpush1.bf16.xpose.msra.mxu0 0
        %1426 = vmatprep.subr.bf16.mxu0 0
        %1427 = vmatpush1.bf16.xpose.msra.mxu0 0
        %1428 = vmatprep.subr.bf16.mxu0 0
        %1429 = vmatpush1.bf16.xpose.msra.mxu0 0
        %1430 = vmatprep.subr.bf16.mxu0 0
        %1431 = vmatpush1.bf16.xpose.msra.mxu0 0
        %1432 = vmatprep.mubr.bf16.mxu0 0
        %1433 = vmatmul.mubr.bf16.gmra.mrb[0].mxu0 %v1395
        %v1434 = vpop.f32.mrb[0].mxu0
        %v1435 = vadd.f32 %v1253, %v1434
        %v1436 = vpop.f32.mrb[0].mxu0
        %v1437 = vpop.f32.mrb[0].mxu0
        %v1438 = vpop.f32.mrb[0].mxu0
        %1439 = vdwg.mxu0
        %v1440 = vsel %vm1255, %v1297, -inf
        %1441 = vmax.xlane.f32.xlu0 %v1440
        %v1442 = vpop.xlane.xlu0 %1441
        %v1443 = vsel %vm1255, %v1343, -inf
        %1444 = vmax.xlane.f32.xlu0 %v1443
        %v1445 = vpop.xlane.xlu0 %1444
        %v1446 = vsel %vm1255, %v1389, -inf
        %1447 = vmax.xlane.f32.xlu0 %v1446
        %v1448 = vpop.xlane.xlu0 %1447
        %v1449 = vsel %vm1255, %v1435, -inf
        %1450 = vmax.xlane.f32.xlu0 %v1449
        %v1451 = vpop.xlane.xlu0 %1450
        %v1452 = vsub.f32 %v1297, %v1442
        %v1453 = vsub.f32 %v1343, %v1445
        %v1454 = vsub.f32 %v1389, %v1448
        %v1455 = vsub.f32 %v1435, %v1451
        %v1456 = vmul.f32 %v1452, 1.442695
        %v1457 = vpow.pop %v1456
        %v1458 = vmul.f32 %v1453, 1.442695
        %v1459 = vpow.pop %v1458
        %v1460 = vmul.f32 %v1454, 1.442695
        %v1461 = vpow.pop %v1460
        %v1462 = vmul.f32 %v1455, 1.442695
        %v1463 = vpow.pop %v1462
        %v1464 = vsel %vm1255, %v1457, 0.0
        %1465 = vadd.xlane.f32.xlu0 %v1464
        %v1466 = vpop.xlane.xlu0 %1465
        %v1467 = vsel %vm1255, %v1459, 0.0
        %1468 = vadd.xlane.f32.xlu0 %v1467
        %v1469 = vpop.xlane.xlu0 %1468
        %v1470 = vsel %vm1255, %v1461, 0.0
        %1471 = vadd.xlane.f32.xlu0 %v1470
        %v1472 = vpop.xlane.xlu0 %1471
        %v1473 = vsel %vm1255, %v1463, 0.0
        %1474 = vadd.xlane.f32.xlu0 %v1473
        %v1475 = vpop.xlane.xlu0 %1474
        %v1476 = vrcp.pop %v1466
        %v1477 = vmul.f32 %v1457, %v1476
        %v1478 = vrcp.pop %v1469
        %v1479 = vmul.f32 %v1459, %v1478
        %v1480 = vrcp.pop %v1472
        %v1481 = vmul.f32 %v1461, %v1480
        %v1482 = vrcp.pop %v1475
        %v1483 = vmul.f32 %v1463, %v1482
        %v1484 = vpack.c.bf16 %v1477, %v1477
        %v1485 = vpack.c.bf16 %v1479, %v1479
        %v1486 = vpack.c.bf16 %v1481, %v1481
        %v1487 = vpack.c.bf16 %v1483, %v1483
        %v1489 = vsel %vm1255, %v1484, 0
        %vm1491 = vcmask 1043456
        %v1493 = vsel %vm1491, %v1245, 0
        %1495 = vmatprep.subr.bf16.mxu0 0
        %1496 = vmatpush1.bf16.msra.mxu0 %v1493
        %1497 = vmatprep.subr.bf16.mxu0 0
        %1498 = vmatpush1.bf16.msra.mxu0 0
        %1499 = vmatprep.subr.bf16.mxu0 0
        %1500 = vmatpush1.bf16.msra.mxu0 0
        %1501 = vmatprep.subr.bf16.mxu0 0
        %1502 = vmatpush1.bf16.msra.mxu0 0
        %1503 = vmatprep.subr.bf16.mxu0 0
        %1504 = vmatpush1.bf16.msra.mxu0 0
        %1505 = vmatprep.subr.bf16.mxu0 0
        %1506 = vmatpush1.bf16.msra.mxu0 0
        %1507 = vmatprep.subr.bf16.mxu0 0
        %1508 = vmatpush1.bf16.msra.mxu0 0
        %1509 = vmatprep.subr.bf16.mxu0 0
        %1510 = vmatpush1.bf16.msra.mxu0 0
        %1511 = vmatprep.subr.bf16.mxu0 0
        %1512 = vmatpush1.bf16.msra.mxu0 0
        %1513 = vmatprep.subr.bf16.mxu0 0
        %1514 = vmatpush1.bf16.msra.mxu0 0
        %1515 = vmatprep.subr.bf16.mxu0 0
        %1516 = vmatpush1.bf16.msra.mxu0 0
        %1517 = vmatprep.subr.bf16.mxu0 0
        %1518 = vmatpush1.bf16.msra.mxu0 0
        %1519 = vmatprep.subr.bf16.mxu0 0
        %1520 = vmatpush1.bf16.msra.mxu0 0
        %1521 = vmatprep.subr.bf16.mxu0 0
        %1522 = vmatpush1.bf16.msra.mxu0 0
        %1523 = vmatprep.subr.bf16.mxu0 0
        %1524 = vmatpush1.bf16.msra.mxu0 0
        %1525 = vmatprep.subr.bf16.mxu0 0
        %1526 = vmatpush1.bf16.msra.mxu0 0
        %1527 = vmatprep.mubr.bf16.mxu0 0
        %1528 = vmatmul.mubr.bf16.gmra.mrb[0].mxu0 %v1489
        %v1529 = vpop.f32.mrb[0].mxu0
        %v1530 = vadd.f32 0.0, %v1529
        %v1531 = vpop.f32.mrb[0].mxu0
        %v1532 = vpop.f32.mrb[0].mxu0
        %v1533 = vpop.f32.mrb[0].mxu0
        %1534 = vdwg.mxu0
        %v1536 = vsel %vm1255, %v1485, 0
        %v1539 = vsel %vm1491, %v1246, 0
        %1541 = vmatprep.subr.bf16.mxu0 0
        %1542 = vmatpush1.bf16.msra.mxu0 %v1539
        %1543 = vmatprep.subr.bf16.mxu0 0
        %1544 = vmatpush1.bf16.msra.mxu0 0
        %1545 = vmatprep.subr.bf16.mxu0 0
        %1546 = vmatpush1.bf16.msra.mxu0 0
        %1547 = vmatprep.subr.bf16.mxu0 0
        %1548 = vmatpush1.bf16.msra.mxu0 0
        %1549 = vmatprep.subr.bf16.mxu0 0
        %1550 = vmatpush1.bf16.msra.mxu0 0
        %1551 = vmatprep.subr.bf16.mxu0 0
        %1552 = vmatpush1.bf16.msra.mxu0 0
        %1553 = vmatprep.subr.bf16.mxu0 0
        %1554 = vmatpush1.bf16.msra.mxu0 0
        %1555 = vmatprep.subr.bf16.mxu0 0
        %1556 = vmatpush1.bf16.msra.mxu0 0
        %1557 = vmatprep.subr.bf16.mxu0 0
        %1558 = vmatpush1.bf16.msra.mxu0 0
        %1559 = vmatprep.subr.bf16.mxu0 0
        %1560 = vmatpush1.bf16.msra.mxu0 0
        %1561 = vmatprep.subr.bf16.mxu0 0
        %1562 = vmatpush1.bf16.msra.mxu0 0
        %1563 = vmatprep.subr.bf16.mxu0 0
        %1564 = vmatpush1.bf16.msra.mxu0 0
        %1565 = vmatprep.subr.bf16.mxu0 0
        %1566 = vmatpush1.bf16.msra.mxu0 0
        %1567 = vmatprep.subr.bf16.mxu0 0
        %1568 = vmatpush1.bf16.msra.mxu0 0
        %1569 = vmatprep.subr.bf16.mxu0 0
        %1570 = vmatpush1.bf16.msra.mxu0 0
        %1571 = vmatprep.subr.bf16.mxu0 0
        %1572 = vmatpush1.bf16.msra.mxu0 0
        %1573 = vmatprep.mubr.bf16.mxu0 0
        %1574 = vmatmul.mubr.bf16.gmra.mrb[0].mxu0 %v1536
        %v1575 = vpop.f32.mrb[0].mxu0
        %v1576 = vadd.f32 0.0, %v1575
        %v1577 = vpop.f32.mrb[0].mxu0
        %v1578 = vpop.f32.mrb[0].mxu0
        %v1579 = vpop.f32.mrb[0].mxu0
        %1580 = vdwg.mxu0
        %v1582 = vsel %vm1255, %v1486, 0
        %v1585 = vsel %vm1491, %v1247, 0
        %1587 = vmatprep.subr.bf16.mxu0 0
        %1588 = vmatpush1.bf16.msra.mxu0 %v1585
        %1589 = vmatprep.subr.bf16.mxu0 0
        %1590 = vmatpush1.bf16.msra.mxu0 0
        %1591 = vmatprep.subr.bf16.mxu0 0
        %1592 = vmatpush1.bf16.msra.mxu0 0
        %1593 = vmatprep.subr.bf16.mxu0 0
        %1594 = vmatpush1.bf16.msra.mxu0 0
        %1595 = vmatprep.subr.bf16.mxu0 0
        %1596 = vmatpush1.bf16.msra.mxu0 0
        %1597 = vmatprep.subr.bf16.mxu0 0
        %1598 = vmatpush1.bf16.msra.mxu0 0
        %1599 = vmatprep.subr.bf16.mxu0 0
        %1600 = vmatpush1.bf16.msra.mxu0 0
        %1601 = vmatprep.subr.bf16.mxu0 0
        %1602 = vmatpush1.bf16.msra.mxu0 0
        %1603 = vmatprep.subr.bf16.mxu0 0
        %1604 = vmatpush1.bf16.msra.mxu0 0
        %1605 = vmatprep.subr.bf16.mxu0 0
        %1606 = vmatpush1.bf16.msra.mxu0 0
        %1607 = vmatprep.subr.bf16.mxu0 0
        %1608 = vmatpush1.bf16.msra.mxu0 0
        %1609 = vmatprep.subr.bf16.mxu0 0
        %1610 = vmatpush1.bf16.msra.mxu0 0
        %1611 = vmatprep.subr.bf16.mxu0 0
        %1612 = vmatpush1.bf16.msra.mxu0 0
        %1613 = vmatprep.subr.bf16.mxu0 0
        %1614 = vmatpush1.bf16.msra.mxu0 0
        %1615 = vmatprep.subr.bf16.mxu0 0
        %1616 = vmatpush1.bf16.msra.mxu0 0
        %1617 = vmatprep.subr.bf16.mxu0 0
        %1618 = vmatpush1.bf16.msra.mxu0 0
        %1619 = vmatprep.mubr.bf16.mxu0 0
        %1620 = vmatmul.mubr.bf16.gmra.mrb[0].mxu0 %v1582
        %v1621 = vpop.f32.mrb[0].mxu0
        %v1622 = vadd.f32 0.0, %v1621
        %v1623 = vpop.f32.mrb[0].mxu0
        %v1624 = vpop.f32.mrb[0].mxu0
        %v1625 = vpop.f32.mrb[0].mxu0
        %1626 = vdwg.mxu0
        %v1628 = vsel %vm1255, %v1487, 0
        %v1631 = vsel %vm1491, %v1248, 0
        %1633 = vmatprep.subr.bf16.mxu0 0
        %1634 = vmatpush1.bf16.msra.mxu0 %v1631
        %1635 = vmatprep.subr.bf16.mxu0 0
        %1636 = vmatpush1.bf16.msra.mxu0 0
        %1637 = vmatprep.subr.bf16.mxu0 0
        %1638 = vmatpush1.bf16.msra.mxu0 0
        %1639 = vmatprep.subr.bf16.mxu0 0
        %1640 = vmatpush1.bf16.msra.mxu0 0
        %1641 = vmatprep.subr.bf16.mxu0 0
        %1642 = vmatpush1.bf16.msra.mxu0 0
        %1643 = vmatprep.subr.bf16.mxu0 0
        %1644 = vmatpush1.bf16.msra.mxu0 0
        %1645 = vmatprep.subr.bf16.mxu0 0
        %1646 = vmatpush1.bf16.msra.mxu0 0
        %1647 = vmatprep.subr.bf16.mxu0 0
        %1648 = vmatpush1.bf16.msra.mxu0 0
        %1649 = vmatprep.subr.bf16.mxu0 0
        %1650 = vmatpush1.bf16.msra.mxu0 0
        %1651 = vmatprep.subr.bf16.mxu0 0
        %1652 = vmatpush1.bf16.msra.mxu0 0
        %1653 = vmatprep.subr.bf16.mxu0 0
        %1654 = vmatpush1.bf16.msra.mxu0 0
        %1655 = vmatprep.subr.bf16.mxu0 0
        %1656 = vmatpush1.bf16.msra.mxu0 0
        %1657 = vmatprep.subr.bf16.mxu0 0
        %1658 = vmatpush1.bf16.msra.mxu0 0
        %1659 = vmatprep.subr.bf16.mxu0 0
        %1660 = vmatpush1.bf16.msra.mxu0 0
        %1661 = vmatprep.subr.bf16.mxu0 0
        %1662 = vmatpush1.bf16.msra.mxu0 0
        %1663 = vmatprep.subr.bf16.mxu0 0
        %1664 = vmatpush1.bf16.msra.mxu0 0
        %1665 = vmatprep.mubr.bf16.mxu0 0
        %1666 = vmatmul.mubr.bf16.gmra.mrb[0].mxu0 %v1628
        %v1667 = vpop.f32.mrb[0].mxu0
        %v1668 = vadd.f32 0.0, %v1667
        %v1669 = vpop.f32.mrb[0].mxu0
        %v1670 = vpop.f32.mrb[0].mxu0
        %v1671 = vpop.f32.mrb[0].mxu0
        %1672 = vdwg.mxu0
        %v1673 = vcombine.low %v1530, %v1622
        %v1674 = vcombine.high %v1530, %v1622
        %v1676 = vunpack.c.l.s4 1983009808
        %v1677 = vunpack.c.0.s8 %v1676
        %v1678 = vlaneseq
        %v1679 = vshrl.u32 %v1678, 7
        %v1680 = vsub.s32 %v1677, %v1679
        %v1681 = vrot.slane %v1673, %v1680
        %v1683 = vunpack.c.l.s4 1983009808
        %v1684 = vunpack.c.0.s8 %v1683
        %v1685 = vlaneseq
        %v1686 = vshrl.u32 %v1685, 7
        %v1687 = vsub.s32 %v1684, %v1686
        %v1688 = vrot.slane %v1674, %v1687
        %v1689 = vcombine.low %v1576, %v1668
        %v1690 = vcombine.high %v1576, %v1668
        %v1692 = vunpack.c.l.s4 1983009808
        %v1693 = vunpack.c.0.s8 %v1692
        %v1694 = vlaneseq
        %v1695 = vshrl.u32 %v1694, 7
        %v1696 = vsub.s32 %v1693, %v1695
        %v1697 = vrot.slane %v1689, %v1696
        %v1699 = vunpack.c.l.s4 1983009808
        %v1700 = vunpack.c.0.s8 %v1699
        %v1701 = vlaneseq
        %v1702 = vshrl.u32 %v1701, 7
        %v1703 = vsub.s32 %v1700, %v1702
        %v1704 = vrot.slane %v1690, %v1703
        %v1705 = vcombine.low %v1681, %v1697
        %v1706 = vcombine.high %v1681, %v1697
        %v1708 = vunpack.c.l.s4 1934713408
        %v1709 = vunpack.c.0.s8 %v1708
        %v1710 = vlaneseq
        %v1711 = vshrl.u32 %v1710, 7
        %v1712 = vsub.s32 %v1709, %v1711
        %v1713 = vrot.slane %v1705, %v1712
        %v1715 = vunpack.c.l.s4 1934713408
        %v1716 = vunpack.c.0.s8 %v1715
        %v1717 = vlaneseq
        %v1718 = vshrl.u32 %v1717, 7
        %v1719 = vsub.s32 %v1716, %v1718
        %v1720 = vrot.slane %v1706, %v1719
        %v1721 = vcombine.low %v1688, %v1704
        %v1722 = vcombine.high %v1688, %v1704
        %v1724 = vunpack.c.l.s4 1934713408
        %v1725 = vunpack.c.0.s8 %v1724
        %v1726 = vlaneseq
        %v1727 = vshrl.u32 %v1726, 7
        %v1728 = vsub.s32 %v1725, %v1727
        %v1729 = vrot.slane %v1721, %v1728
        %v1731 = vunpack.c.l.s4 1934713408
        %v1732 = vunpack.c.0.s8 %v1731
        %v1733 = vlaneseq
        %v1734 = vshrl.u32 %v1733, 7
        %v1735 = vsub.s32 %v1732, %v1734
        %v1736 = vrot.slane %v1722, %v1735
        %v1737 = vcombine.high %v1713, 0.0
        %v1738 = vcombine.high %v1720, 0.0
        %v1739 = vcombine.high %v1729, 0.0
        %v1740 = vcombine.high %v1736, 0.0
        %v1741 = vcombine.low %v1713, %v1720
        %v1743 = vunpack.c.l.s4 1983009808
        %v1744 = vunpack.c.0.s8 %v1743
        %v1745 = vlaneseq
        %v1746 = vshrl.u32 %v1745, 7
        %v1747 = vsub.s32 %v1744, %v1746
        %v1748 = vrot.slane %v1741, %v1747
        %v1749 = vcombine.low %v1737, %v1738
        %v1751 = vunpack.c.l.s4 1983009808
        %v1752 = vunpack.c.0.s8 %v1751
        %v1753 = vlaneseq
        %v1754 = vshrl.u32 %v1753, 7
        %v1755 = vsub.s32 %v1752, %v1754
        %v1756 = vrot.slane %v1749, %v1755
        %v1757 = vcombine.low %v1729, %v1736
        %v1759 = vunpack.c.l.s4 1983009808
        %v1760 = vunpack.c.0.s8 %v1759
        %v1761 = vlaneseq
        %v1762 = vshrl.u32 %v1761, 7
        %v1763 = vsub.s32 %v1760, %v1762
        %v1764 = vrot.slane %v1757, %v1763
        %v1765 = vcombine.low %v1739, %v1740
        %v1767 = vunpack.c.l.s4 1983009808
        %v1768 = vunpack.c.0.s8 %v1767
        %v1769 = vlaneseq
        %v1770 = vshrl.u32 %v1769, 7
        %v1771 = vsub.s32 %v1768, %v1770
        %v1772 = vrot.slane %v1765, %v1771
        %v1773 = vcombine.low %v1748, %v1756
        %v1774 = vcombine.high %v1748, %v1756
        %v1776 = vunpack.c.l.s4 1934713408
        %v1777 = vunpack.c.0.s8 %v1776
        %v1778 = vlaneseq
        %v1779 = vshrl.u32 %v1778, 7
        %v1780 = vsub.s32 %v1777, %v1779
        %v1781 = vrot.slane %v1773, %v1780
        %v1783 = vunpack.c.l.s4 1934713408
        %v1784 = vunpack.c.0.s8 %v1783
        %v1785 = vlaneseq
        %v1786 = vshrl.u32 %v1785, 7
        %v1787 = vsub.s32 %v1784, %v1786
        %v1788 = vrot.slane %v1774, %v1787
        %v1789 = vcombine.low %v1764, %v1772
        %v1790 = vcombine.high %v1764, %v1772
        %v1792 = vunpack.c.l.s4 1934713408
        %v1793 = vunpack.c.0.s8 %v1792
        %v1794 = vlaneseq
        %v1795 = vshrl.u32 %v1794, 7
        %v1796 = vsub.s32 %v1793, %v1795
        %v1797 = vrot.slane %v1789, %v1796
        %v1799 = vunpack.c.l.s4 1934713408
        %v1800 = vunpack.c.0.s8 %v1799
        %v1801 = vlaneseq
        %v1802 = vshrl.u32 %v1801, 7
        %v1803 = vsub.s32 %v1800, %v1802
        %v1804 = vrot.slane %v1790, %v1803
        %v1805 = vcombine.low %v1781, %v1797
        %v1806 = vcombine.high %v1781, %v1797
        %v1807 = vcombine.low %v1788, %v1804
        %v1808 = vcombine.high %v1788, %v1804
        %1810 = vrot.lane.b32.xlu0 %v1806, 8
        %v1811 = vpop.permute.xlu0 %1810
        %1814 = vrot.lane.b32.xlu0 %v1807, 16
        %v1815 = vpop.permute.xlu0 %1814
        %1818 = vrot.lane.b32.xlu0 %v1808, 24
        %v1819 = vpop.permute.xlu0 %1818
        %v1821 = vsel %vm1255, %v1805, %v1811
        %vm1822 = vcmask 130048
        %v1823 = vsel %vm1822, %v1821, %v1815
        %vm1824 = vcmask 195584
        %v1825 = vsel %vm1824, %v1823, %v1819
        %v1826 = vpack.c.bf16 %v1825, %v1825
        %v1827 = vld [vmem:[%s6] sm:$0xf]
        %v1828 = vld [vmem:[%s6 + $0x4] sm:$0xf]
        %v1829 = vld [vmem:[%s6 + $0x8] sm:$0xf]
        %v1830 = vld [vmem:[%s6 + $0xc] sm:$0xf]
        %v1831 = vld [vmem:[#allocation8] sm:$0x1]
        %v1833 = vlaneseq
        %v1834 = vshrl.u32 %v1833, 7
        %v1835 = vsub.s32 0, %v1834
        %v1836 = vrot.slane %v1831, %v1835
        %v1842 = vunpack.c.l.b16 %v1827
        %v1843 = vunpack.c.l.b16 %v1828
        %v1844 = vunpack.c.l.b16 %v1829
        %v1845 = vunpack.c.l.b16 %v1830
        %v1846 = vpack.c.b16 %v1843, %v1842
        %v1847 = vpack.c.b16 %v1845, %v1844
        %v1851 = vsel %vm691, %v1826, 0
        %1853 = vmatprep.subr.bf16.mxu0 0
        %1854 = vmatpush1.bf16.msra.mxu0 %v1846
        %1855 = vmatprep.subr.bf16.mxu0 0
        %1856 = vmatpush1.bf16.msra.mxu0 %v1847
        %1857 = vmatprep.subr.bf16.mxu0 0
        %1858 = vmatpush1.bf16.msra.mxu0 0
        %1859 = vmatprep.subr.bf16.mxu0 0
        %1860 = vmatpush1.bf16.msra.mxu0 0
        %1861 = vmatprep.subr.bf16.mxu0 0
        %1862 = vmatpush1.bf16.msra.mxu0 0
        %1863 = vmatprep.subr.bf16.mxu0 0
        %1864 = vmatpush1.bf16.msra.mxu0 0
        %1865 = vmatprep.subr.bf16.mxu0 0
        %1866 = vmatpush1.bf16.msra.mxu0 0
        %1867 = vmatprep.subr.bf16.mxu0 0
        %1868 = vmatpush1.bf16.msra.mxu0 0
        %1869 = vmatprep.subr.bf16.mxu0 0
        %1870 = vmatpush1.bf16.msra.mxu0 0
        %1871 = vmatprep.subr.bf16.mxu0 0
        %1872 = vmatpush1.bf16.msra.mxu0 0
        %1873 = vmatprep.subr.bf16.mxu0 0
        %1874 = vmatpush1.bf16.msra.mxu0 0
        %1875 = vmatprep.subr.bf16.mxu0 0
        %1876 = vmatpush1.bf16.msra.mxu0 0
        %1877 = vmatprep.subr.bf16.mxu0 0
        %1878 = vmatpush1.bf16.msra.mxu0 0
        %1879 = vmatprep.subr.bf16.mxu0 0
        %1880 = vmatpush1.bf16.msra.mxu0 0
        %1881 = vmatprep.subr.bf16.mxu0 0
        %1882 = vmatpush1.bf16.msra.mxu0 0
        %1883 = vmatprep.subr.bf16.mxu0 0
        %1884 = vmatpush1.bf16.msra.mxu0 0
        %1885 = vmatprep.mubr.bf16.mxu0 0
        %1886 = vmatmul.mubr.bf16.gmra.mrb[0].mxu0 %v1851
        %v1887 = vpop.f32.mrb[0].mxu0
        %v1888 = vadd.f32 %v1836, %v1887
        %v1889 = vpop.f32.mrb[0].mxu0
        %v1890 = vpop.f32.mrb[0].mxu0
        %v1891 = vpop.f32.mrb[0].mxu0
        %1892 = vdwg.mxu0
        %v1893 = vadd.f32 %v1888, %v719
        %v1894 = vld [vmem:[#allocation10] sm:$0x1]
        %v1895 = vld [vmem:[#allocation11] sm:$0x1]
        %v1896 = vsel %vm691, %v1893, 0.0
        %1897 = vadd.xlane.f32.xlu0 %v1896
        %v1898 = vpop.xlane.xlu0 %1897
        %v1899 = vmul.f32 %v1898, %v695
        %v1900 = vsub.f32 %v1893, %v1899
        %v1901 = vmul.f32 %v1900, %v1900
        %v1902 = vsel %vm691, %v1901, 0.0
        %1903 = vadd.xlane.f32.xlu0 %v1902
        %v1904 = vpop.xlane.xlu0 %1903
        %v1905 = vmul.f32 %v1904, %v695
        %v1906 = vadd.f32 %v1905, 1e-05
        %v1907 = vrsqrt.pop %v1906
        %v1908 = vmul.f32 %v1900, %v1907
        %v1910 = vlaneseq
        %v1911 = vshrl.u32 %v1910, 7
        %v1912 = vsub.s32 0, %v1911
        %v1913 = vrot.slane %v1894, %v1912
        %v1915 = vmul.f32 %v1908, %v1913
        %v1917 = vlaneseq
        %v1918 = vshrl.u32 %v1917, 7
        %v1919 = vsub.s32 0, %v1918
        %v1920 = vrot.slane %v1895, %v1919
        %v1922 = vadd.f32 %v1915, %v1920
        %v1923 = vadd.f32 %v719, %v1922
        %v1924 = vld [vmem:[%s10] sm:$0x1]
        %v1925 = vld [vmem:[%s11] sm:$0x1]
        %v1926 = vsel %vm691, %v1923, 0.0
        %1927 = vadd.xlane.f32.xlu0 %v1926
        %v1928 = vpop.xlane.xlu0 %1927
        %v1929 = vmul.f32 %v1928, %v695
        %v1930 = vsub.f32 %v1923, %v1929
        %v1931 = vmul.f32 %v1930, %v1930
        %v1932 = vsel %vm691, %v1931, 0.0
        %1933 = vadd.xlane.f32.xlu0 %v1932
        %v1934 = vpop.xlane.xlu0 %1933
        %v1935 = vmul.f32 %v1934, %v695
        %v1936 = vadd.f32 %v1935, 1e-05
        %v1937 = vrsqrt.pop %v1936
        %v1938 = vmul.f32 %v1930, %v1937
        %v1940 = vlaneseq
        %v1941 = vshrl.u32 %v1940, 7
        %v1942 = vsub.s32 0, %v1941
        %v1943 = vrot.slane %v1924, %v1942
        %v1945 = vmul.f32 %v1938, %v1943
        %v1947 = vlaneseq
        %v1948 = vshrl.u32 %v1947, 7
        %v1949 = vsub.s32 0, %v1948
        %v1950 = vrot.slane %v1925, %v1949
        %v1952 = vadd.f32 %v1945, %v1950
        %v1953 = vpack.c.bf16 %v1952, %v1952
        %v1954 = vld [vmem:[%s12] sm:$0xf]
        %v1955 = vld [vmem:[%s12 + $0x4] sm:$0xf]
        %v1956 = vld [vmem:[%s12 + $0x8] sm:$0xf]
        %v1957 = vld [vmem:[%s12 + $0xc] sm:$0xf]
        %v1958 = vld [vmem:[%s13] sm:$0x1]
        %v1960 = vlaneseq
        %v1961 = vshrl.u32 %v1960, 7
        %v1962 = vsub.s32 0, %v1961
        %v1963 = vrot.slane %v1958, %v1962
        %v1969 = vunpack.c.l.b16 %v1954
        %v1970 = vunpack.c.l.b16 %v1955
        %v1971 = vunpack.c.l.b16 %v1956
        %v1972 = vunpack.c.l.b16 %v1957
        %v1973 = vpack.c.b16 %v1970, %v1969
        %v1974 = vpack.c.b16 %v1972, %v1971
        %v1978 = vsel %vm691, %v1953, 0
        %1980 = vmatprep.subr.bf16.mxu0 0
        %1981 = vmatpush1.bf16.msra.mxu0 %v1973
        %1982 = vmatprep.subr.bf16.mxu0 0
        %1983 = vmatpush1.bf16.msra.mxu0 %v1974
        %1984 = vmatprep.subr.bf16.mxu0 0
        %1985 = vmatpush1.bf16.msra.mxu0 0
        %1986 = vmatprep.subr.bf16.mxu0 0
        %1987 = vmatpush1.bf16.msra.mxu0 0
        %1988 = vmatprep.subr.bf16.mxu0 0
        %1989 = vmatpush1.bf16.msra.mxu0 0
        %1990 = vmatprep.subr.bf16.mxu0 0
        %1991 = vmatpush1.bf16.msra.mxu0 0
        %1992 = vmatprep.subr.bf16.mxu0 0
        %1993 = vmatpush1.bf16.msra.mxu0 0
        %1994 = vmatprep.subr.bf16.mxu0 0
        %1995 = vmatpush1.bf16.msra.mxu0 0
        %1996 = vmatprep.subr.bf16.mxu0 0
        %1997 = vmatpush1.bf16.msra.mxu0 0
        %1998 = vmatprep.subr.bf16.mxu0 0
        %1999 = vmatpush1.bf16.msra.mxu0 0
        %2000 = vmatprep.subr.bf16.mxu0 0
        %2001 = vmatpush1.bf16.msra.mxu0 0
        %2002 = vmatprep.subr.bf16.mxu0 0
        %2003 = vmatpush1.bf16.msra.mxu0 0
        %2004 = vmatprep.subr.bf16.mxu0 0
        %2005 = vmatpush1.bf16.msra.mxu0 0
        %2006 = vmatprep.subr.bf16.mxu0 0
        %2007 = vmatpush1.bf16.msra.mxu0 0
        %2008 = vmatprep.subr.bf16.mxu0 0
        %2009 = vmatpush1.bf16.msra.mxu0 0
        %2010 = vmatprep.subr.bf16.mxu0 0
        %2011 = vmatpush1.bf16.msra.mxu0 0
        %2012 = vmatprep.mubr.bf16.mxu0 0
        %2013 = vmatmul.mubr.bf16.gmra.mrb[0].mxu0 %v1978
        %v2014 = vpop.f32.mrb[0].mxu0
        %v2015 = vadd.f32 %v1963, %v2014
        %v2016 = vpop.f32.mrb[0].mxu0
        %v2017 = vpop.f32.mrb[0].mxu0
        %v2018 = vpop.f32.mrb[0].mxu0
        %2019 = vdwg.mxu0
        %v2020 = vmax.f32 %v2015, 0.0
        %v2021 = vpack.c.bf16 %v2020, %v2020
        %v2022 = vld [vmem:[%s14] sm:$0xf]
        %v2023 = vld [vmem:[%s14 + $0x4] sm:$0xf]
        %v2024 = vld [vmem:[%s14 + $0x8] sm:$0xf]
        %v2025 = vld [vmem:[%s14 + $0xc] sm:$0xf]
        %v2026 = vld [vmem:[%s14 + $0x10] sm:$0xf]
        %v2027 = vld [vmem:[%s14 + $0x14] sm:$0xf]
        %v2028 = vld [vmem:[%s14 + $0x18] sm:$0xf]
        %v2029 = vld [vmem:[%s14 + $0x1c] sm:$0xf]
        %v2030 = vld [vmem:[%s15] sm:$0x1]
        %v2032 = vlaneseq
        %v2033 = vshrl.u32 %v2032, 7
        %v2034 = vsub.s32 0, %v2033
        %v2035 = vrot.slane %v2030, %v2034
        %v2045 = vunpack.c.l.b16 %v2022
        %v2046 = vunpack.c.l.b16 %v2023
        %v2047 = vunpack.c.l.b16 %v2024
        %v2048 = vunpack.c.l.b16 %v2025
        %v2049 = vunpack.c.l.b16 %v2026
        %v2050 = vunpack.c.l.b16 %v2027
        %v2051 = vunpack.c.l.b16 %v2028
        %v2052 = vunpack.c.l.b16 %v2029
        %v2053 = vpack.c.b16 %v2046, %v2045
        %v2054 = vpack.c.b16 %v2048, %v2047
        %v2055 = vpack.c.b16 %v2050, %v2049
        %v2056 = vpack.c.b16 %v2052, %v2051
        %vm2061 = vcmask 523264
        %v2063 = vsel %vm2061, %v2021, 0
        %2065 = vmatprep.subr.bf16.mxu0 0
        %2066 = vmatpush1.bf16.msra.mxu0 %v2053
        %2067 = vmatprep.subr.bf16.mxu0 0
        %2068 = vmatpush1.bf16.msra.mxu0 %v2054
        %2069 = vmatprep.subr.bf16.mxu0 0
        %2070 = vmatpush1.bf16.msra.mxu0 %v2055
        %2071 = vmatprep.subr.bf16.mxu0 0
        %2072 = vmatpush1.bf16.msra.mxu0 %v2056
        %2073 = vmatprep.subr.bf16.mxu0 0
        %2074 = vmatpush1.bf16.msra.mxu0 0
        %2075 = vmatprep.subr.bf16.mxu0 0
        %2076 = vmatpush1.bf16.msra.mxu0 0
        %2077 = vmatprep.subr.bf16.mxu0 0
        %2078 = vmatpush1.bf16.msra.mxu0 0
        %2079 = vmatprep.subr.bf16.mxu0 0
        %2080 = vmatpush1.bf16.msra.mxu0 0
        %2081 = vmatprep.subr.bf16.mxu0 0
        %2082 = vmatpush1.bf16.msra.mxu0 0
        %2083 = vmatprep.subr.bf16.mxu0 0
        %2084 = vmatpush1.bf16.msra.mxu0 0
        %2085 = vmatprep.subr.bf16.mxu0 0
        %2086 = vmatpush1.bf16.msra.mxu0 0
        %2087 = vmatprep.subr.bf16.mxu0 0
        %2088 = vmatpush1.bf16.msra.mxu0 0
        %2089 = vmatprep.subr.bf16.mxu0 0
        %2090 = vmatpush1.bf16.msra.mxu0 0
        %2091 = vmatprep.subr.bf16.mxu0 0
        %2092 = vmatpush1.bf16.msra.mxu0 0
        %2093 = vmatprep.subr.bf16.mxu0 0
        %2094 = vmatpush1.bf16.msra.mxu0 0
        %2095 = vmatprep.subr.bf16.mxu0 0
        %2096 = vmatpush1.bf16.msra.mxu0 0
        %2097 = vmatprep.mubr.bf16.mxu0 0
        %2098 = vmatmul.mubr.bf16.gmra.mrb[0].mxu0 %v2063
        %v2099 = vpop.f32.mrb[0].mxu0
        %v2100 = vadd.f32 %v2035, %v2099
        %v2101 = vpop.f32.mrb[0].mxu0
        %v2102 = vpop.f32.mrb[0].mxu0
        %v2103 = vpop.f32.mrb[0].mxu0
        %2104 = vdwg.mxu0
        %v2105 = vadd.f32 %v1952, %v2100
        %v2106 = vld [vmem:[%s16] sm:$0x1]
        %v2107 = vld [vmem:[%s17] sm:$0x1]
        %v2108 = vsel %vm691, %v2105, 0.0
        %2109 = vadd.xlane.f32.xlu0 %v2108
        %v2110 = vpop.xlane.xlu0 %2109
        %v2111 = vmul.f32 %v2110, %v695
        %v2112 = vsub.f32 %v2105, %v2111
        %v2113 = vmul.f32 %v2112, %v2112
        %v2114 = vsel %vm691, %v2113, 0.0
        %2115 = vadd.xlane.f32.xlu0 %v2114
        %v2116 = vpop.xlane.xlu0 %2115
        %v2117 = vmul.f32 %v2116, %v695
        %v2118 = vadd.f32 %v2117, 1e-05
        %v2119 = vrsqrt.pop %v2118
        %v2120 = vmul.f32 %v2112, %v2119
        %v2122 = vlaneseq
        %v2123 = vshrl.u32 %v2122, 7
        %v2124 = vsub.s32 0, %v2123
        %v2125 = vrot.slane %v2106, %v2124
        %v2127 = vmul.f32 %v2120, %v2125
        %v2129 = vlaneseq
        %v2130 = vshrl.u32 %v2129, 7
        %v2131 = vsub.s32 0, %v2130
        %v2132 = vrot.slane %v2107, %v2131
        %v2134 = vadd.f32 %v2127, %v2132
        %2135 = vst.msk [vmem:[%s675] sm:$0xff] %vm691, %v2134
        %s2136 = sand.u32 %s448, 1
        %s2137 = scalar_lea.sflag [#allocation4], %s2136
        %s2138 = sand.u32 %s448, 1
        %s2139 = smul.addr %s2138, 8
        %s2140 = scalar_lea.vmem [#allocation13], %s2139
        // Predicated region
        $region117: #{tpu_custom_call.1} parent=91 // pred_check
          %p2141 = pneg %p458
        $region118: #{tpu_custom_call.1} parent=91 // pred_check_branch
          %2143 = sbr.rel (%p2141) target = $region120
        $region119: #{tpu_custom_call.1} parent=91 // pred_region
          %s2145 = ssub.s32 128, 128
          %2146 = vsyncadd %s2137, %s2145
          %s2147 = sadd.s32 %s41, %s40
          %s2148 = smul.addr %s2147, 128
          %s2149 = scalar_lea.hbm %s18, %s2148
          %s2151 = sshll.u32 %s2140, 4
          %s2152 = int_to_ptr.vmem [resolvable:$true] %s2151
          %2154 = dma.vmem_to_hbm [thread:$0]  %s2152, 128, %s2149, %s2137
        $region120: #{tpu_custom_call.1} parent=91 // pred_fallthru
          _
      $region92: #{tpu_custom_call.1} parent=5 // pred_fallthru
        _
      %p2155 = scmp.le.s32.totalorder 2, %s31
      // Predicated region
      $region121: #{tpu_custom_call.1} parent=5 // pred_check
        %p2156 = pneg %p2155
      $region122: #{tpu_custom_call.1} parent=5 // pred_check_branch
        %2158 = sbr.rel (%p2156) target = $region124
      $region123: #{tpu_custom_call.1} parent=5 // pred_region
        %s2159 = ssub.s32 %s31, 2
        // Predicated region
        $region125: #{tpu_custom_call.1} parent=123 // pred_check
          %p2160 = pneg %p464
        $region126: #{tpu_custom_call.1} parent=123 // pred_check_branch
          %2162 = sbr.rel (%p2160) target = $region128
        $region127: #{tpu_custom_call.1} parent=123 // pred_region
          %s2163 = sand.u32 %s449, 1
          %s2164 = scalar_lea.sflag [#allocation4], %s2163
          %s2165 = sand.u32 %s449, 1
          %s2166 = smul.addr %s2165, 8
          %s2167 = scalar_lea.vmem [#allocation13], %s2166
          %2168 = dma.done %s2164, 128
        $region128: #{tpu_custom_call.1} parent=123 // pred_fallthru
          _
      $region124: #{tpu_custom_call.1} parent=5 // pred_fallthru
        _
    $region6: #{tpu_custom_call.1} parent=1 // loop_footer
      %s35 = sadd.s32 1, %s31
    $region7: #{tpu_custom_call.1} parent=1 // loop_footer_branch
      %30 = sbr.rel target = $region3
    $region8: #{tpu_custom_call.1} parent=1 // loop_exit
      _
    %2169 = vsyncpa [#allocation3], 1
    %s2170 = scalar_lea.sflag [#allocation3], 1
    %2171 = vsyncpa %s2170, 1
    %2172 = vsyncpa [#allocation6], 1
    %2173 = vsyncpa [#allocation9], 1
    %2174 = vsyncpa [#allocation12], 1
    %2175 = vsyncpa [#allocation4], 1
    %s2176 = scalar_lea.sflag [#allocation4], 1
    %2177 = vsyncpa %s2176, 1

// kernel: tpu_custom_call.1
$region0: #{tpu_custom_call.1}
  #allocation0 [shape = 'u32[]', space=smem, size = 0x4, offset = 0x4, fixed_abs, tag = 'smem constant byte address 0x4 - core index']
  #allocation1 [shape = 'u32[144,128]{1,0:T(1,128)}', space=vmem, size = 0x12000, scoped, tag = 'internal scratch']
  %s0 = inlined_call_operand.vmem [shape: f32[2,8,32], index: 0, kind: input, shape index: {}]
  %s1 = inlined_call_operand.vmem [shape: f32[2,1,8], index: 1, kind: input, shape index: {}]
  %s2 = inlined_call_operand.hbm [shape: f32[1,32], index: 2, kind: input, shape index: {}]
  %s3 = inlined_call_operand.hbm [shape: f32[1,32], index: 3, kind: input, shape index: {}]
  %s4 = inlined_call_operand.vmem [shape: bf16[32,96], index: 4, kind: input, shape index: {}]
  %s5 = inlined_call_operand.hbm [shape: f32[1,96], index: 5, kind: input, shape index: {}]
  %s6 = inlined_call_operand.vmem [shape: bf16[32,32], index: 6, kind: input, shape index: {}]
  %s7 = inlined_call_operand.hbm [shape: f32[1,32], index: 7, kind: input, shape index: {}]
  %s8 = inlined_call_operand.hbm [shape: f32[1,32], index: 8, kind: input, shape index: {}]
  %s9 = inlined_call_operand.hbm [shape: f32[1,32], index: 9, kind: input, shape index: {}]
  %s10 = inlined_call_operand.vmem [shape: f32[1,32], index: 10, kind: input, shape index: {}]
  %s11 = inlined_call_operand.vmem [shape: f32[1,32], index: 11, kind: input, shape index: {}]
  %s12 = inlined_call_operand.vmem [shape: bf16[32,64], index: 12, kind: input, shape index: {}]
  %s13 = inlined_call_operand.vmem [shape: f32[1,64], index: 13, kind: input, shape index: {}]
  %s14 = inlined_call_operand.vmem [shape: bf16[64,32], index: 14, kind: input, shape index: {}]
  %s15 = inlined_call_operand.vmem [shape: f32[1,32], index: 15, kind: input, shape index: {}]
  %s16 = inlined_call_operand.vmem [shape: f32[1,32], index: 16, kind: input, shape index: {}]
  %s17 = inlined_call_operand.vmem [shape: f32[1,32], index: 17, kind: input, shape index: {}]
  %s18 = inlined_call_operand.hbm [shape: f32[2,8,32], index: 18, kind: output, shape index: {}]
  %s19 = sld [smem:[#allocation0]]
  $region129: #{tpu_custom_call.1} parent=0
    _
  %s21 = ssub.s32 1, %s19
  %s22 = scalar_select 0, %s21, %s19
  $region1: #{tpu_custom_call.1} parent=0
    #allocation2 [shape = 'u8[512]{0}', space=vmem, size = 0x400, scoped, tag = 'input window, operand 2, single buffered']
    #allocation3 [shape = 's32[2]{0}', space=sflag, size = 0x8, scoped, tag = 'scoped memory for tpu_custom_call.1']
    #allocation4 [shape = 's32[2]{0}', space=sflag, size = 0x8, scoped, tag = 'scoped memory for tpu_custom_call.1']
    #allocation5 [shape = 'u8[512]{0}', space=vmem, size = 0x400, scoped, tag = 'input window, operand 3, single buffered']
    #allocation6 [shape = 's32[1]{0}', space=sflag, size = 0x4, scoped, tag = 'scoped memory for tpu_custom_call.1']
    #allocation7 [shape = 'u8[512]{0}', space=vmem, size = 0x400, scoped, tag = 'input window, operand 5, single buffered']
    #allocation8 [shape = 'u8[512]{0}', space=vmem, size = 0x400, scoped, tag = 'input window, operand 7, single buffered']
    #allocation9 [shape = 's32[1]{0}', space=sflag, size = 0x4, scoped, tag = 'scoped memory for tpu_custom_call.1']
    #allocation10 [shape = 'u8[512]{0}', space=vmem, size = 0x400, scoped, tag = 'input window, operand 8, single buffered']
    #allocation11 [shape = 'u8[512]{0}', space=vmem, size = 0x400, scoped, tag = 'input window, operand 9, single buffered']
    #allocation12 [shape = 's32[1]{0}', space=sflag, size = 0x4, scoped, tag = 'scoped memory for tpu_custom_call.1']
    #allocation13 [shape = 'u8[8192]{0}', space=vmem, size = 0x2000, scoped, tag = 'output window, operand 0']
    %23 = vsyncpa [#allocation3], 0
    %24 = vsyncpa [#allocation6], 0
    %25 = vsyncpa [#allocation9], 0
    %26 = vsyncpa [#allocation12], 0
    %27 = vsyncpa [#allocation4], 0
    %s28 = scalar_lea.sflag [#allocation4], 1
    %29 = vsyncpa %s28, 0
    loop: start=0, step=1, limit=4
    $region2: #{tpu_custom_call.1} parent=1 // loop_pre_header
      _
    $region3: #{tpu_custom_call.1} parent=1 // loop_header
      %s31 = sphi 0, %s35
      %p32 = scmp.ge.s32.totalorder %s31, 4
      %s38 = sphi 0, %s50
      %s39 = sphi 0, %s46
      %s40 = sphi 0, %s38
      %s41 = sphi 0, %s39
      %s42 = sphi 0, %s40
      %s43 = sphi 0, %s41
      %s55 = sphi 0, %s57
      %s58 = sphi 0, %s55
      %s59 = sphi 0, %s58
      %s75 = sphi 0, %s59
      %s81 = sphi 0, %s83
      %s84 = sphi 0, %s81
      %s85 = sphi 0, %s84
      %s101 = sphi 0, %s85
      %s105 = sphi 0, %s105
      %s107 = sphi 0, %s105
      %s108 = sphi 0, %s107
      %s122 = sphi 0, %s108
      %s126 = sphi 0, %s126
      %s128 = sphi 0, %s126
      %s129 = sphi 0, %s128
      %s143 = sphi 0, %s129
      %s147 = sphi 0, %s147
      %s149 = sphi 0, %s147
      %s150 = sphi 0, %s149
      %s164 = sphi 0, %s150
      %s168 = sphi 0, %s168
      %s170 = sphi 0, %s168
      %s171 = sphi 0, %s170
      %s185 = sphi 0, %s171
      %s189 = sphi 0, %s189
      %s191 = sphi 0, %s189
      %s192 = sphi 0, %s191
      %s206 = sphi 0, %s192
      %s210 = sphi 0, %s210
      %s212 = sphi 0, %s210
      %s213 = sphi 0, %s212
      %s227 = sphi 0, %s213
      %s231 = sphi 0, %s231
      %s233 = sphi 0, %s231
      %s234 = sphi 0, %s233
      %s248 = sphi 0, %s234
      %s252 = sphi 0, %s252
      %s254 = sphi 0, %s252
      %s255 = sphi 0, %s254
      %s269 = sphi 0, %s255
      %s273 = sphi 0, %s273
      %s275 = sphi 0, %s273
      %s276 = sphi 0, %s275
      %s290 = sphi 0, %s276
      %s294 = sphi 0, %s294
      %s296 = sphi 0, %s294
      %s297 = sphi 0, %s296
      %s311 = sphi 0, %s297
      %s315 = sphi 0, %s315
      %s317 = sphi 0, %s315
      %s318 = sphi 0, %s317
      %s332 = sphi 0, %s318
      %s336 = sphi 0, %s336
      %s338 = sphi 0, %s336
      %s339 = sphi 0, %s338
      %s353 = sphi 0, %s339
      %s357 = sphi 0, %s357
      %s359 = sphi 0, %s357
      %s360 = sphi 0, %s359
      %s374 = sphi 0, %s360
      %s378 = sphi 0, %s378
      %s380 = sphi 0, %s378
      %s381 = sphi 0, %s380
      %s395 = sphi 0, %s381
      %s399 = sphi 0, %s399
      %s401 = sphi 0, %s399
      %s402 = sphi 0, %s401
      %s416 = sphi 0, %s402
      %s420 = sphi 0, %s420
      %s422 = sphi 0, %s420
      %s423 = sphi 0, %s422
      %s437 = sphi 0, %s423
      %s445 = sphi 0, %s447
      %s448 = sphi 0, %s445
      %s449 = sphi 0, %s448
      %s465 = sphi 0, %s449
    $region4: #{tpu_custom_call.1} parent=1 // loop_header_branch
      %34 = sbr.rel (%p32) target = $region8
    $region5: #{tpu_custom_call.1} parent=1 // loop_body
      %s36 = ssub.s32 %s31, 1
      %s37 = ssub.s32 %s31, 2
      %s44 = sadd.s32 1, %s39
      %p45 = scmp.ge.s32.totalorder %s44, 1
      %s46 = scalar_select %p45, 0, %s44
      %s47 = sadd.s32 1, %s38
      %s48 = scalar_select %p45, %s47, %s38
      %p49 = scmp.ge.s32.totalorder %s48, 2
      %s50 = scalar_select %p49, 0, %s48
      %s51 = ssub.s32 %s38, %s50
      %s52 = ssub.s32 %s39, %s46
      %s53 = sor.u32 %s51, %s52
      %p54 = scmp.eq.s32.totalorder %s53, 0
      %s56 = sadd.s32 %s55, 1
      %s57 = scalar_select %p54, %s55, %s56
      %p60 = pneg %p54
      %p61 = scmp.eq.s32.totalorder %s31, 1
      %p62 = por %p60, %p61
      %p63 = scmp.ne.s32.totalorder %s55, %s58
      %p64 = scmp.eq.s32.totalorder %s31, 0
      %p65 = por %p63, %p64
      %p66 = scmp.ne.s32.totalorder %s55, %s58
      %p67 = scmp.eq.s32.totalorder %s36, 1
      %p68 = por %p66, %p67
      %p69 = scmp.ne.s32.totalorder %s58, %s59
      %p70 = scmp.eq.s32.totalorder %s36, 0
      %p71 = por %p69, %p70
      %p72 = scmp.ne.s32.totalorder %s58, %s59
      %p73 = scmp.eq.s32.totalorder %s37, 1
      %p74 = por %p72, %p73
      %p76 = scmp.ne.s32.totalorder %s59, %s75
      %p77 = scmp.eq.s32.totalorder %s37, 0
      %p78 = por %p76, %p77
      %s79 = ssub.s32 %s38, %s50
      %p80 = scmp.eq.s32.totalorder %s79, 0
      %s82 = sadd.s32 %s81, 1
      %s83 = scalar_select %p80, %s81, %s82
      %p86 = pneg %p80
      %p87 = scmp.eq.s32.totalorder %s31, 1
      %p88 = por %p86, %p87
      %p89 = scmp.ne.s32.totalorder %s81, %s84
      %p90 = scmp.eq.s32.totalorder %s31, 0
      %p91 = por %p89, %p90
      %p92 = scmp.ne.s32.totalorder %s81, %s84
      %p93 = scmp.eq.s32.totalorder %s36, 1
      %p94 = por %p92, %p93
      %p95 = scmp.ne.s32.totalorder %s84, %s85
      %p96 = scmp.eq.s32.totalorder %s36, 0
      %p97 = por %p95, %p96
      %p98 = scmp.ne.s32.totalorder %s84, %s85
      %p99 = scmp.eq.s32.totalorder %s37, 1
      %p100 = por %p98, %p99
      %p102 = scmp.ne.s32.totalorder %s85, %s101
      %p103 = scmp.eq.s32.totalorder %s37, 0
      %p104 = por %p102, %p103
      %s106 = sadd.s32 %s105, 1
      %p109 = scmp.eq.s32.totalorder %s31, 1
      %p110 = scmp.ne.s32.totalorder %s105, %s107
      %p111 = scmp.eq.s32.totalorder %s31, 0
      %p112 = por %p110, %p111
      %p113 = scmp.ne.s32.totalorder %s105, %s107
      %p114 = scmp.eq.s32.totalorder %s36, 1
      %p115 = por %p113, %p114
      %p116 = scmp.ne.s32.totalorder %s107, %s108
      %p117 = scmp.eq.s32.totalorder %s36, 0
      %p118 = por %p116, %p117
      %p119 = scmp.ne.s32.totalorder %s107, %s108
      %p120 = scmp.eq.s32.totalorder %s37, 1
      %p121 = por %p119, %p120
      %p123 = scmp.ne.s32.totalorder %s108, %s122
      %p124 = scmp.eq.s32.totalorder %s37, 0
      %p125 = por %p123, %p124
      %s127 = sadd.s32 %s126, 1
      %p130 = scmp.eq.s32.totalorder %s31, 1
      %p131 = scmp.ne.s32.totalorder %s126, %s128
      %p132 = scmp.eq.s32.totalorder %s31, 0
      %p133 = por %p131, %p132
      %p134 = scmp.ne.s32.totalorder %s126, %s128
      %p135 = scmp.eq.s32.totalorder %s36, 1
      %p136 = por %p134, %p135
      %p137 = scmp.ne.s32.totalorder %s128, %s129
      %p138 = scmp.eq.s32.totalorder %s36, 0
      %p139 = por %p137, %p138
      %p140 = scmp.ne.s32.totalorder %s128, %s129
      %p141 = scmp.eq.s32.totalorder %s37, 1
      %p142 = por %p140, %p141
      %p144 = scmp.ne.s32.totalorder %s129, %s143
      %p145 = scmp.eq.s32.totalorder %s37, 0
      %p146 = por %p144, %p145
      %s148 = sadd.s32 %s147, 1
      %p151 = scmp.eq.s32.totalorder %s31, 1
      %p152 = scmp.ne.s32.totalorder %s147, %s149
      %p153 = scmp.eq.s32.totalorder %s31, 0
      %p154 = por %p152, %p153
      %p155 = scmp.ne.s32.totalorder %s147, %s149
      %p156 = scmp.eq.s32.totalorder %s36, 1
      %p157 = por %p155, %p156
      %p158 = scmp.ne.s32.totalorder %s149, %s150
      %p159 = scmp.eq.s32.totalorder %s36, 0
      %p160 = por %p158, %p159
      %p161 = scmp.ne.s32.totalorder %s149, %s150
      %p162 = scmp.eq.s32.totalorder %s37, 1
      %p163 = por %p161, %p162
      %p165 = scmp.ne.s32.totalorder %s150, %s164
      %p166 = scmp.eq.s32.totalorder %s37, 0
      %p167 = por %p165, %p166
      %s169 = sadd.s32 %s168, 1
      %p172 = scmp.eq.s32.totalorder %s31, 1
      %p173 = scmp.ne.s32.totalorder %s168, %s170
      %p174 = scmp.eq.s32.totalorder %s31, 0
      %p175 = por %p173, %p174
      %p176 = scmp.ne.s32.totalorder %s168, %s170
      %p177 = scmp.eq.s32.totalorder %s36, 1
      %p178 = por %p176, %p177
      %p179 = scmp.ne.s32.totalorder %s170, %s171
      %p180 = scmp.eq.s32.totalorder %s36, 0
      %p181 = por %p179, %p180
      %p182 = scmp.ne.s32.totalorder %s170, %s171
      %p183 = scmp.eq.s32.totalorder %s37, 1
      %p184 = por %p182, %p183
      %p186 = scmp.ne.s32.totalorder %s171, %s185
      %p187 = scmp.eq.s32.totalorder %s37, 0
      %p188 = por %p186, %p187
      %s190 = sadd.s32 %s189, 1
      %p193 = scmp.eq.s32.totalorder %s31, 1
      %p194 = scmp.ne.s32.totalorder %s189, %s191
      %p195 = scmp.eq.s32.totalorder %s31, 0
      %p196 = por %p194, %p195
      %p197 = scmp.ne.s32.totalorder %s189, %s191
      %p198 = scmp.eq.s32.totalorder %s36, 1
      %p199 = por %p197, %p198
      %p200 = scmp.ne.s32.totalorder %s191, %s192
      %p201 = scmp.eq.s32.totalorder %s36, 0
      %p202 = por %p200, %p201
      %p203 = scmp.ne.s32.totalorder %s191, %s192
      %p204 = scmp.eq.s32.totalorder %s37, 1
      %p205 = por %p203, %p204
      %p207 = scmp.ne.s32.totalorder %s192, %s206
      %p208 = scmp.eq.s32.totalorder %s37, 0
      %p209 = por %p207, %p208
      %s211 = sadd.s32 %s210, 1
      %p214 = scmp.eq.s32.totalorder %s31, 1
      %p215 = scmp.ne.s32.totalorder %s210, %s212
      %p216 = scmp.eq.s32.totalorder %s31, 0
      %p217 = por %p215, %p216
      %p218 = scmp.ne.s32.totalorder %s210, %s212
      %p219 = scmp.eq.s32.totalorder %s36, 1
      %p220 = por %p218, %p219
      %p221 = scmp.ne.s32.totalorder %s212, %s213
      %p222 = scmp.eq.s32.totalorder %s36, 0
      %p223 = por %p221, %p222
      %p224 = scmp.ne.s32.totalorder %s212, %s213
      %p225 = scmp.eq.s32.totalorder %s37, 1
      %p226 = por %p224, %p225
      %p228 = scmp.ne.s32.totalorder %s213, %s227
      %p229 = scmp.eq.s32.totalorder %s37, 0
      %p230 = por %p228, %p229
      %s232 = sadd.s32 %s231, 1
      %p235 = scmp.eq.s32.totalorder %s31, 1
      %p236 = scmp.ne.s32.totalorder %s231, %s233
      %p237 = scmp.eq.s32.totalorder %s31, 0
      %p238 = por %p236, %p237
      %p239 = scmp.ne.s32.totalorder %s231, %s233
      %p240 = scmp.eq.s32.totalorder %s36, 1
      %p241 = por %p239, %p240
      %p242 = scmp.ne.s32.totalorder %s233, %s234
      %p243 = scmp.eq.s32.totalorder %s36, 0
      %p244 = por %p242, %p243
      %p245 = scmp.ne.s32.totalorder %s233, %s234
      %p246 = scmp.eq.s32.totalorder %s37, 1
      %p247 = por %p245, %p246
      %p249 = scmp.ne.s32.totalorder %s234, %s248
      %p250 = scmp.eq.s32.totalorder %s37, 0
      %p251 = por %p249, %p250
      %s253 = sadd.s32 %s252, 1
      %p256 = scmp.eq.s32.totalorder %s31, 1
      %p257 = scmp.ne.s32.totalorder %s252, %s254
      %p258 = scmp.eq.s32.totalorder %s31, 0
      %p259 = por %p257, %p258
      %p260 = scmp.ne.s32.totalorder %s252, %s254
      %p261 = scmp.eq.s32.totalorder %s36, 1
      %p262 = por %p260, %p261
      %p263 = scmp.ne.s32.totalorder %s254, %s255
      %p264 = scmp.eq.s32.totalorder %s36, 0
      %p265 = por %p263, %p264
      %p266 = scmp.ne.s32.totalorder %s254, %s255
      %p267 = scmp.eq.s32.totalorder %s37, 1
      %p268 = por %p266, %p267
      %p270 = scmp.ne.s32.totalorder %s255, %s269
      %p271 = scmp.eq.s32.totalorder %s37, 0
      %p272 = por %p270, %p271
      %s274 = sadd.s32 %s273, 1
      %p277 = scmp.eq.s32.totalorder %s31, 1
      %p278 = scmp.ne.s32.totalorder %s273, %s275
      %p279 = scmp.eq.s32.totalorder %s31, 0
      %p280 = por %p278, %p279
      %p281 = scmp.ne.s32.totalorder %s273, %s275
      %p282 = scmp.eq.s32.totalorder %s36, 1
      %p283 = por %p281, %p282
      %p284 = scmp.ne.s32.totalorder %s275, %s276
      %p285 = scmp.eq.s32.totalorder %s36, 0
      %p286 = por %p284, %p285
      %p287 = scmp.ne.s32.totalorder %s275, %s276
      %p288 = scmp.eq.s32.totalorder %s37, 1
      %p289 = por %p287, %p288
      %p291 = scmp.ne.s32.totalorder %s276, %s290
      %p292 = scmp.eq.s32.totalorder %s37, 0
      %p293 = por %p291, %p292
      %s295 = sadd.s32 %s294, 1
      %p298 = scmp.eq.s32.totalorder %s31, 1
      %p299 = scmp.ne.s32.totalorder %s294, %s296
      %p300 = scmp.eq.s32.totalorder %s31, 0
      %p301 = por %p299, %p300
      %p302 = scmp.ne.s32.totalorder %s294, %s296
      %p303 = scmp.eq.s32.totalorder %s36, 1
      %p304 = por %p302, %p303
      %p305 = scmp.ne.s32.totalorder %s296, %s297
      %p306 = scmp.eq.s32.totalorder %s36, 0
      %p307 = por %p305, %p306
      %p308 = scmp.ne.s32.totalorder %s296, %s297
      %p309 = scmp.eq.s32.totalorder %s37, 1
      %p310 = por %p308, %p309
      %p312 = scmp.ne.s32.totalorder %s297, %s311
      %p313 = scmp.eq.s32.totalorder %s37, 0
      %p314 = por %p312, %p313
      %s316 = sadd.s32 %s315, 1
      %p319 = scmp.eq.s32.totalorder %s31, 1
      %p320 = scmp.ne.s32.totalorder %s315, %s317
      %p321 = scmp.eq.s32.totalorder %s31, 0
      %p322 = por %p320, %p321
      %p323 = scmp.ne.s32.totalorder %s315, %s317
      %p324 = scmp.eq.s32.totalorder %s36, 1
      %p325 = por %p323, %p324
      %p326 = scmp.ne.s32.totalorder %s317, %s318
      %p327 = scmp.eq.s32.totalorder %s36, 0
      %p328 = por %p326, %p327
      %p329 = scmp.ne.s32.totalorder %s317, %s318
      %p330 = scmp.eq.s32.totalorder %s37, 1
      %p331 = por %p329, %p330
      %p333 = scmp.ne.s32.totalorder %s318, %s332
      %p334 = scmp.eq.s32.totalorder %s37, 0
      %p335 = por %p333, %p334
      %s337 = sadd.s32 %s336, 1
      %p340 = scmp.eq.s32.totalorder %s31, 1
      %p341 = scmp.ne.s32.totalorder %s336, %s338
      %p342 = scmp.eq.s32.totalorder %s31, 0
      %p343 = por %p341, %p342
      %p344 = scmp.ne.s32.totalorder %s336, %s338
      %p345 = scmp.eq.s32.totalorder %s36, 1
      %p346 = por %p344, %p345
      %p347 = scmp.ne.s32.totalorder %s338, %s339
      %p348 = scmp.eq.s32.totalorder %s36, 0
      %p349 = por %p347, %p348
      %p350 = scmp.ne.s32.totalorder %s338, %s339
      %p351 = scmp.eq.s32.totalorder %s37, 1
      %p352 = por %p350, %p351
      %p354 = scmp.ne.s32.totalorder %s339, %s353
      %p355 = scmp.eq.s32.totalorder %s37, 0
      %p356 = por %p354, %p355
      %s358 = sadd.s32 %s357, 1
      %p361 = scmp.eq.s32.totalorder %s31, 1
      %p362 = scmp.ne.s32.totalorder %s357, %s359
      %p363 = scmp.eq.s32.totalorder %s31, 0
      %p364 = por %p362, %p363
      %p365 = scmp.ne.s32.totalorder %s357, %s359
      %p366 = scmp.eq.s32.totalorder %s36, 1
      %p367 = por %p365, %p366
      %p368 = scmp.ne.s32.totalorder %s359, %s360
      %p369 = scmp.eq.s32.totalorder %s36, 0
      %p370 = por %p368, %p369
      %p371 = scmp.ne.s32.totalorder %s359, %s360
      %p372 = scmp.eq.s32.totalorder %s37, 1
      %p373 = por %p371, %p372
      %p375 = scmp.ne.s32.totalorder %s360, %s374
      %p376 = scmp.eq.s32.totalorder %s37, 0
      %p377 = por %p375, %p376
      %s379 = sadd.s32 %s378, 1
      %p382 = scmp.eq.s32.totalorder %s31, 1
      %p383 = scmp.ne.s32.totalorder %s378, %s380
      %p384 = scmp.eq.s32.totalorder %s31, 0
      %p385 = por %p383, %p384
      %p386 = scmp.ne.s32.totalorder %s378, %s380
      %p387 = scmp.eq.s32.totalorder %s36, 1
      %p388 = por %p386, %p387
      %p389 = scmp.ne.s32.totalorder %s380, %s381
      %p390 = scmp.eq.s32.totalorder %s36, 0
      %p391 = por %p389, %p390
      %p392 = scmp.ne.s32.totalorder %s380, %s381
      %p393 = scmp.eq.s32.totalorder %s37, 1
      %p394 = por %p392, %p393
      %p396 = scmp.ne.s32.totalorder %s381, %s395
      %p397 = scmp.eq.s32.totalorder %s37, 0
      %p398 = por %p396, %p397
      %s400 = sadd.s32 %s399, 1
      %p403 = scmp.eq.s32.totalorder %s31, 1
      %p404 = scmp.ne.s32.totalorder %s399, %s401
      %p405 = scmp.eq.s32.totalorder %s31, 0
      %p406 = por %p404, %p405
      %p407 = scmp.ne.s32.totalorder %s399, %s401
      %p408 = scmp.eq.s32.totalorder %s36, 1
      %p409 = por %p407, %p408
      %p410 = scmp.ne.s32.totalorder %s401, %s402
      %p411 = scmp.eq.s32.totalorder %s36, 0
      %p412 = por %p410, %p411
      %p413 = scmp.ne.s32.totalorder %s401, %s402
      %p414 = scmp.eq.s32.totalorder %s37, 1
      %p415 = por %p413, %p414
      %p417 = scmp.ne.s32.totalorder %s402, %s416
      %p418 = scmp.eq.s32.totalorder %s37, 0
      %p419 = por %p417, %p418
      %s421 = sadd.s32 %s420, 1
      %p424 = scmp.eq.s32.totalorder %s31, 1
      %p425 = scmp.ne.s32.totalorder %s420, %s422
      %p426 = scmp.eq.s32.totalorder %s31, 0
      %p427 = por %p425, %p426
      %p428 = scmp.ne.s32.totalorder %s420, %s422
      %p429 = scmp.eq.s32.totalorder %s36, 1
      %p430 = por %p428, %p429
      %p431 = scmp.ne.s32.totalorder %s422, %s423
      %p432 = scmp.eq.s32.totalorder %s36, 0
      %p433 = por %p431, %p432
      %p434 = scmp.ne.s32.totalorder %s422, %s423
      %p435 = scmp.eq.s32.totalorder %s37, 1
      %p436 = por %p434, %p435
      %p438 = scmp.ne.s32.totalorder %s423, %s437
      %p439 = scmp.eq.s32.totalorder %s37, 0
      %p440 = por %p438, %p439
      %s441 = ssub.s32 %s38, %s50
      %s442 = ssub.s32 %s39, %s46
      %s443 = sor.u32 %s441, %s442
      %p444 = scmp.eq.s32.totalorder %s443, 0
      %s446 = sadd.s32 %s445, 1
      %s447 = scalar_select %p444, %s445, %s446
      %p450 = pneg %p444
      %p451 = scmp.eq.s32.totalorder %s31, 1
      %p452 = por %p450, %p451
      %p453 = scmp.ne.s32.totalorder %s445, %s448
      %p454 = scmp.eq.s32.totalorder %s31, 0
      %p455 = por %p453, %p454
      %p456 = scmp.ne.s32.totalorder %s445, %s448
      %p457 = scmp.eq.s32.totalorder %s36, 1
      %p458 = por %p456, %p457
      %p459 = scmp.ne.s32.totalorder %s448, %s449
      %p460 = scmp.eq.s32.totalorder %s36, 0
      %p461 = por %p459, %p460
      %p462 = scmp.ne.s32.totalorder %s448, %s449
      %p463 = scmp.eq.s32.totalorder %s37, 1
      %p464 = por %p462, %p463
      %p466 = scmp.ne.s32.totalorder %s449, %s465
      %p467 = scmp.eq.s32.totalorder %s37, 0
      %p468 = por %p466, %p467
      %p469 = scmp.le.s32.totalorder 1, %s31
      %p470 = scmp.lt.s32.totalorder %s31, 3
      %p471 = pnand %p469, %p470
      %p472 = pneg %p471
      // Predicated region
      $region9: #{tpu_custom_call.1} parent=5 // pred_check
        _
      $region10: #{tpu_custom_call.1} parent=5 // pred_check_branch
        %474 = sbr.rel (%p471) target = $region12
      $region11: #{tpu_custom_call.1} parent=5 // pred_region
        %s475 = ssub.s32 %s31, 1
        // Predicated region
        $region13: #{tpu_custom_call.1} parent=11 // pred_check
          %p476 = pneg %p118
        $region14: #{tpu_custom_call.1} parent=11 // pred_check_branch
          %478 = sbr.rel (%p476) target = $region16
        $region15: #{tpu_custom_call.1} parent=11 // pred_region
          %s480 = ssub.s32 16, 16
          %481 = vsyncadd [#allocation3], %s480
          %s483 = sshll.u32 [#allocation2], 4
          %s484 = int_to_ptr.vmem [resolvable:$true] %s483
          %486 = dma.hbm_to_vmem [thread:$0]  %s2, 16, %s484, [#allocation3]
        $region16: #{tpu_custom_call.1} parent=11 // pred_fallthru
          _
        // Predicated region
        $region17: #{tpu_custom_call.1} parent=11 // pred_check
          %p487 = pneg %p139
        $region18: #{tpu_custom_call.1} parent=11 // pred_check_branch
          %489 = sbr.rel (%p487) target = $region20
        $region19: #{tpu_custom_call.1} parent=11 // pred_region
          %s491 = ssub.s32 16, 16
          %492 = vsyncadd [#allocation6], %s491
          %s494 = sshll.u32 [#allocation5], 4
          %s495 = int_to_ptr.vmem [resolvable:$true] %s494
          %497 = dma.hbm_to_vmem [thread:$0]  %s3, 16, %s495, [#allocation6]
        $region20: #{tpu_custom_call.1} parent=11 // pred_fallthru
          _
        // Predicated region
        $region21: #{tpu_custom_call.1} parent=11 // pred_check
          %p498 = pneg %p160
        $region22: #{tpu_custom_call.1} parent=11 // pred_check_branch
          %500 = sbr.rel (%p498) target = $region24
        $region23: #{tpu_custom_call.1} parent=11 // pred_region
          _
        $region24: #{tpu_custom_call.1} parent=11 // pred_fallthru
          _
        // Predicated region
        $region25: #{tpu_custom_call.1} parent=11 // pred_check
          %p501 = pneg %p181
        $region26: #{tpu_custom_call.1} parent=11 // pred_check_branch
          %503 = sbr.rel (%p501) target = $region28
        $region27: #{tpu_custom_call.1} parent=11 // pred_region
          %s505 = ssub.s32 16, 16
          %506 = vsyncadd [#allocation6], %s505
          %s508 = sshll.u32 [#allocation7], 4
          %s509 = int_to_ptr.vmem [resolvable:$true] %s508
          %511 = dma.hbm_to_vmem [thread:$0]  %s5, 16, %s509, [#allocation6]
        $region28: #{tpu_custom_call.1} parent=11 // pred_fallthru
          _
        // Predicated region
        $region29: #{tpu_custom_call.1} parent=11 // pred_check
          %p512 = pneg %p202
        $region30: #{tpu_custom_call.1} parent=11 // pred_check_branch
          %514 = sbr.rel (%p512) target = $region32
        $region31: #{tpu_custom_call.1} parent=11 // pred_region
          _
        $region32: #{tpu_custom_call.1} parent=11 // pred_fallthru
          _
        // Predicated region
        $region33: #{tpu_custom_call.1} parent=11 // pred_check
          %p515 = pneg %p223
        $region34: #{tpu_custom_call.1} parent=11 // pred_check_branch
          %517 = sbr.rel (%p515) target = $region36
        $region35: #{tpu_custom_call.1} parent=11 // pred_region
          %s519 = ssub.s32 16, 16
          %520 = vsyncadd [#allocation9], %s519
          %s522 = sshll.u32 [#allocation8], 4
          %s523 = int_to_ptr.vmem [resolvable:$true] %s522
          %525 = dma.hbm_to_vmem [thread:$0]  %s7, 16, %s523, [#allocation9]
        $region36: #{tpu_custom_call.1} parent=11 // pred_fallthru
          _
        // Predicated region
        $region37: #{tpu_custom_call.1} parent=11 // pred_check
          %p526 = pneg %p244
        $region38: #{tpu_custom_call.1} parent=11 // pred_check_branch
          %528 = sbr.rel (%p526) target = $region40
        $region39: #{tpu_custom_call.1} parent=11 // pred_region
          %s530 = ssub.s32 16, 16
          %531 = vsyncadd [#allocation9], %s530
          %s533 = sshll.u32 [#allocation10], 4
          %s534 = int_to_ptr.vmem [resolvable:$true] %s533
          %536 = dma.hbm_to_vmem [thread:$0]  %s8, 16, %s534, [#allocation9]
        $region40: #{tpu_custom_call.1} parent=11 // pred_fallthru
          _
        // Predicated region
        $region41: #{tpu_custom_call.1} parent=11 // pred_check
          %p537 = pneg %p265
        $region42: #{tpu_custom_call.1} parent=11 // pred_check_branch
          %539 = sbr.rel (%p537) target = $region44
        $region43: #{tpu_custom_call.1} parent=11 // pred_region
          %s541 = ssub.s32 16, 16
          %542 = vsyncadd [#allocation12], %s541
          %s544 = sshll.u32 [#allocation11], 4
          %s545 = int_to_ptr.vmem [resolvable:$true] %s544
          %547 = dma.hbm_to_vmem [thread:$0]  %s9, 16, %s545, [#allocation12]
        $region44: #{tpu_custom_call.1} parent=11 // pred_fallthru
          _
        // Predicated region
        $region45: #{tpu_custom_call.1} parent=11 // pred_check
          %p548 = pneg %p286
        $region46: #{tpu_custom_call.1} parent=11 // pred_check_branch
          %550 = sbr.rel (%p548) target = $region48
        $region47: #{tpu_custom_call.1} parent=11 // pred_region
          _
        $region48: #{tpu_custom_call.1} parent=11 // pred_fallthru
          _
        // Predicated region
        $region49: #{tpu_custom_call.1} parent=11 // pred_check
          %p551 = pneg %p307
        $region50: #{tpu_custom_call.1} parent=11 // pred_check_branch
          %553 = sbr.rel (%p551) target = $region52
        $region51: #{tpu_custom_call.1} parent=11 // pred_region
          _
        $region52: #{tpu_custom_call.1} parent=11 // pred_fallthru
          _
        // Predicated region
        $region53: #{tpu_custom_call.1} parent=11 // pred_check
          %p554 = pneg %p328
        $region54: #{tpu_custom_call.1} parent=11 // pred_check_branch
          %556 = sbr.rel (%p554) target = $region56
        $region55: #{tpu_custom_call.1} parent=11 // pred_region
          _
        $region56: #{tpu_custom_call.1} parent=11 // pred_fallthru
          _
        // Predicated region
        $region57: #{tpu_custom_call.1} parent=11 // pred_check
          %p557 = pneg %p349
        $region58: #{tpu_custom_call.1} parent=11 // pred_check_branch
          %559 = sbr.rel (%p557) target = $region60
        $region59: #{tpu_custom_call.1} parent=11 // pred_region
          _
        $region60: #{tpu_custom_call.1} parent=11 // pred_fallthru
          _
        // Predicated region
        $region61: #{tpu_custom_call.1} parent=11 // pred_check
          %p560 = pneg %p370
        $region62: #{tpu_custom_call.1} parent=11 // pred_check_branch
          %562 = sbr.rel (%p560) target = $region64
        $region63: #{tpu_custom_call.1} parent=11 // pred_region
          _
        $region64: #{tpu_custom_call.1} parent=11 // pred_fallthru
          _
        // Predicated region
        $region65: #{tpu_custom_call.1} parent=11 // pred_check
          %p563 = pneg %p391
        $region66: #{tpu_custom_call.1} parent=11 // pred_check_branch
          %565 = sbr.rel (%p563) target = $region68
        $region67: #{tpu_custom_call.1} parent=11 // pred_region
          _
        $region68: #{tpu_custom_call.1} parent=11 // pred_fallthru
          _
        // Predicated region
        $region69: #{tpu_custom_call.1} parent=11 // pred_check
          %p566 = pneg %p412
        $region70: #{tpu_custom_call.1} parent=11 // pred_check_branch
          %568 = sbr.rel (%p566) target = $region72
        $region71: #{tpu_custom_call.1} parent=11 // pred_region
          _
        $region72: #{tpu_custom_call.1} parent=11 // pred_fallthru
          _
        // Predicated region
        $region73: #{tpu_custom_call.1} parent=11 // pred_check
          %p569 = pneg %p433
        $region74: #{tpu_custom_call.1} parent=11 // pred_check_branch
          %571 = sbr.rel (%p569) target = $region76
        $region75: #{tpu_custom_call.1} parent=11 // pred_region
          _
        $region76: #{tpu_custom_call.1} parent=11 // pred_fallthru
          _
      $region12: #{tpu_custom_call.1} parent=5 // pred_fallthru
        _
      %p572 = scmp.lt.s32.totalorder %s31, 2
      // Predicated region
      $region77: #{tpu_custom_call.1} parent=5 // pred_check
        %p573 = pneg %p572
      $region78: #{tpu_custom_call.1} parent=5 // pred_check_branch
        %575 = sbr.rel (%p573) target = $region80
      $region79: #{tpu_custom_call.1} parent=5 // pred_region
        // Predicated region
        $region81: #{tpu_custom_call.1} parent=79 // pred_check
          %p576 = pneg %p65
        $region82: #{tpu_custom_call.1} parent=79 // pred_check_branch
          %578 = sbr.rel (%p576) target = $region84
        $region83: #{tpu_custom_call.1} parent=79 // pred_region
          %p579 = scmp.lt.s32.totalorder %s38, 1
          %s580 = scalar_select %p579, %s38, 1
          %p581 = scmp.lt.s32.totalorder %s39, 0
          %s582 = scalar_select %p581, %s39, 0
          %s583 = sadd.s32 %s582, %s580
          %s584 = smul.addr %s583, 8
          %s585 = scalar_lea.vmem %s0, %s584
        $region84: #{tpu_custom_call.1} parent=79 // pred_fallthru
          _
        // Predicated region
        $region85: #{tpu_custom_call.1} parent=79 // pred_check
          %p586 = pneg %p91
        $region86: #{tpu_custom_call.1} parent=79 // pred_check_branch
          %588 = sbr.rel (%p586) target = $region88
        $region87: #{tpu_custom_call.1} parent=79 // pred_region
          %p589 = scmp.lt.s32.totalorder %s38, 1
          %s590 = scalar_select %p589, %s38, 1
          %s591 = scalar_lea.vmem %s1, %s590
        $region88: #{tpu_custom_call.1} parent=79 // pred_fallthru
          _
      $region80: #{tpu_custom_call.1} parent=5 // pred_fallthru
        _
      %p592 = scmp.le.s32.totalorder 1, %s31
      %p593 = scmp.lt.s32.totalorder %s31, 3
      %p594 = pnand %p592, %p593
      %p595 = pneg %p594
      // Predicated region
      $region89: #{tpu_custom_call.1} parent=5 // pred_check
        _
      $region90: #{tpu_custom_call.1} parent=5 // pred_check_branch
        %597 = sbr.rel (%p594) target = $region92
      $region91: #{tpu_custom_call.1} parent=5 // pred_region
        %s598 = ssub.s32 %s31, 1
        // Predicated region
        $region93: #{tpu_custom_call.1} parent=91 // pred_check
          %p599 = pneg %p118
        $region94: #{tpu_custom_call.1} parent=91 // pred_check_branch
          %601 = sbr.rel (%p599) target = $region96
        $region95: #{tpu_custom_call.1} parent=91 // pred_region
          %602 = dma.done [#allocation3], 16
        $region96: #{tpu_custom_call.1} parent=91 // pred_fallthru
          _
        // Predicated region
        $region97: #{tpu_custom_call.1} parent=91 // pred_check
          %p603 = pneg %p139
        $region98: #{tpu_custom_call.1} parent=91 // pred_check_branch
          %605 = sbr.rel (%p603) target = $region100
        $region99: #{tpu_custom_call.1} parent=91 // pred_region
          %606 = dma.done [#allocation6], 16
        $region100: #{tpu_custom_call.1} parent=91 // pred_fallthru
          _
        // Predicated region
        $region101: #{tpu_custom_call.1} parent=91 // pred_check
          %p607 = pneg %p181
        $region102: #{tpu_custom_call.1} parent=91 // pred_check_branch
          %609 = sbr.rel (%p607) target = $region104
        $region103: #{tpu_custom_call.1} parent=91 // pred_region
          %610 = dma.done [#allocation6], 16
        $region104: #{tpu_custom_call.1} parent=91 // pred_fallthru
          _
        // Predicated region
        $region105: #{tpu_custom_call.1} parent=91 // pred_check
          %p611 = pneg %p223
        $region106: #{tpu_custom_call.1} parent=91 // pred_check_branch
          %613 = sbr.rel (%p611) target = $region108
        $region107: #{tpu_custom_call.1} parent=91 // pred_region
          %614 = dma.done [#allocation9], 16
        $region108: #{tpu_custom_call.1} parent=91 // pred_fallthru
          _
        // Predicated region
        $region109: #{tpu_custom_call.1} parent=91 // pred_check
          %p615 = pneg %p244
        $region110: #{tpu_custom_call.1} parent=91 // pred_check_branch
          %617 = sbr.rel (%p615) target = $region112
        $region111: #{tpu_custom_call.1} parent=91 // pred_region
          %618 = dma.done [#allocation9], 16
        $region112: #{tpu_custom_call.1} parent=91 // pred_fallthru
          _
        // Predicated region
        $region113: #{tpu_custom_call.1} parent=91 // pred_check
          %p619 = pneg %p265
        $region114: #{tpu_custom_call.1} parent=91 // pred_check_branch
          %621 = sbr.rel (%p619) target = $region116
        $region115: #{tpu_custom_call.1} parent=91 // pred_region
          %622 = dma.done [#allocation12], 16
        $region116: #{tpu_custom_call.1} parent=91 // pred_fallthru
          _
        %p623 = scmp.lt.s32.totalorder %s40, 1
        %s624 = scalar_select %p623, %s40, 1
        %p625 = scmp.lt.s32.totalorder %s41, 0
        %s626 = scalar_select %p625, %s41, 0
        %s627 = sadd.s32 %s626, %s624
        %s628 = smul.addr %s627, 8
        %s629 = scalar_lea.vmem %s0, %s628
        %p630 = pneg %p71
        %p631 = pneg %p68
        %p632 = scmp.lt.s32.totalorder %s40, 1
        %s633 = scalar_select %p632, %s40, 1
        %s634 = scalar_lea.vmem %s1, %s633
        %p635 = pneg %p97
        %p636 = pneg %p94
        %p637 = pneg %p118
        %p638 = pneg %p115
        %p639 = pneg %p139
        %p640 = pneg %p136
        %p641 = pneg %p160
        %p642 = pneg %p157
        %p643 = pneg %p181
        %p644 = pneg %p178
        %p645 = pneg %p202
        %p646 = pneg %p199
        %p647 = pneg %p223
        %p648 = pneg %p220
        %p649 = pneg %p244
        %p650 = pneg %p241
        %p651 = pneg %p265
        %p652 = pneg %p262
        %p653 = pneg %p286
        %p654 = pneg %p283
        %p655 = pneg %p307
        %p656 = pneg %p304
        %p657 = pneg %p328
        %p658 = pneg %p325
        %p659 = pneg %p349
        %p660 = pneg %p346
        %p661 = pneg %p370
        %p662 = pneg %p367
        %p663 = pneg %p391
        %p664 = pneg %p388
        %p665 = pneg %p412
        %p666 = pneg %p409
        %p667 = pneg %p433
        %p668 = pneg %p430
        %p669 = pneg %p461
        %p670 = pneg %p458
        %s671 = sand.u32 %s448, 1
        %s672 = scalar_lea.sflag [#allocation4], %s671
        %s673 = sand.u32 %s448, 1
        %s674 = smul.addr %s673, 8
        %s675 = scalar_lea.vmem [#allocation13], %s674
        %p676 = scmp.lt.s32.totalorder %s40, 1
        %s677 = scalar_select %p676, %s40, 1
        %p678 = scmp.lt.s32.totalorder %s41, 0
        %s679 = scalar_select %p678, %s41, 0
        %s680 = sadd.s32 %s679, %s677
        %s681 = smul.addr %s680, 8
        %s682 = scalar_lea.vmem %s0, %s681
        %p683 = scmp.lt.s32.totalorder %s40, 1
        %s684 = scalar_select %p683, %s40, 1
        %s685 = scalar_lea.vmem %s1, %s684
        %v687 = vld [vmem:[%s682] sm:$0xff]
        %v688 = vld [vmem:[%s685] sm:$0x1]
        %v689 = vld [vmem:[#allocation2] sm:$0x1]
        %v690 = vld [vmem:[#allocation5] sm:$0x1]
        %vm691 = vcmask 261120
        %v692 = vsel %vm691, %v687, 0.0
        %693 = vadd.xlane.f32.xlu0 %v692
        %v694 = vpop.xlane.xlu0 %693
        %v695 = vrcp.pop 32.0
        %v696 = vmul.f32 %v694, %v695
        %v697 = vsub.f32 %v687, %v696
        %v698 = vmul.f32 %v697, %v697
        %v699 = vsel %vm691, %v698, 0.0
        %700 = vadd.xlane.f32.xlu0 %v699
        %v701 = vpop.xlane.xlu0 %700
        %v702 = vmul.f32 %v701, %v695
        %v703 = vadd.f32 %v702, 1e-05
        %v704 = vrsqrt.pop %v703
        %v705 = vmul.f32 %v697, %v704
        %v707 = vlaneseq
        %v708 = vshrl.u32 %v707, 7
        %v709 = vsub.s32 0, %v708
        %v710 = vrot.slane %v689, %v709
        %v712 = vmul.f32 %v705, %v710
        %v714 = vlaneseq
        %v715 = vshrl.u32 %v714, 7
        %v716 = vsub.s32 0, %v715
        %v717 = vrot.slane %v690, %v716
        %v719 = vadd.f32 %v712, %v717
        %v720 = vpack.c.bf16 %v719, %v719
        %v721 = vld [vmem:[%s4] sm:$0xf]
        %v722 = vld [vmem:[%s4 + $0x4] sm:$0xf]
        %v723 = vld [vmem:[%s4 + $0x8] sm:$0xf]
        %v724 = vld [vmem:[%s4 + $0xc] sm:$0xf]
        %v725 = vld [vmem:[#allocation7] sm:$0x1]
        %v727 = vlaneseq
        %v728 = vshrl.u32 %v727, 7
        %v729 = vsub.s32 0, %v728
        %v730 = vrot.slane %v725, %v729
        %v736 = vunpack.c.l.b16 %v721
        %v737 = vunpack.c.l.b16 %v722
        %v738 = vunpack.c.l.b16 %v723
        %v739 = vunpack.c.l.b16 %v724
        %v740 = vpack.c.b16 %v737, %v736
        %v741 = vpack.c.b16 %v739, %v738
        %v745 = vsel %vm691, %v720, 0
        %747 = vmatprep.subr.bf16.mxu0 0
        %748 = vmatpush1.bf16.msra.mxu0 %v740
        %749 = vmatprep.subr.bf16.mxu0 0
        %750 = vmatpush1.bf16.msra.mxu0 %v741
        %751 = vmatprep.subr.bf16.mxu0 0
        %752 = vmatpush1.bf16.msra.mxu0 0
        %753 = vmatprep.subr.bf16.mxu0 0
        %754 = vmatpush1.bf16.msra.mxu0 0
        %755 = vmatprep.subr.bf16.mxu0 0
        %756 = vmatpush1.bf16.msra.mxu0 0
        %757 = vmatprep.subr.bf16.mxu0 0
        %758 = vmatpush1.bf16.msra.mxu0 0
        %759 = vmatprep.subr.bf16.mxu0 0
        %760 = vmatpush1.bf16.msra.mxu0 0
        %761 = vmatprep.subr.bf16.mxu0 0
        %762 = vmatpush1.bf16.msra.mxu0 0
        %763 = vmatprep.subr.bf16.mxu0 0
        %764 = vmatpush1.bf16.msra.mxu0 0
        %765 = vmatprep.subr.bf16.mxu0 0
        %766 = vmatpush1.bf16.msra.mxu0 0
        %767 = vmatprep.subr.bf16.mxu0 0
        %768 = vmatpush1.bf16.msra.mxu0 0
        %769 = vmatprep.subr.bf16.mxu0 0
        %770 = vmatpush1.bf16.msra.mxu0 0
        %771 = vmatprep.subr.bf16.mxu0 0
        %772 = vmatpush1.bf16.msra.mxu0 0
        %773 = vmatprep.subr.bf16.mxu0 0
        %774 = vmatpush1.bf16.msra.mxu0 0
        %775 = vmatprep.subr.bf16.mxu0 0
        %776 = vmatpush1.bf16.msra.mxu0 0
        %777 = vmatprep.subr.bf16.mxu0 0
        %778 = vmatpush1.bf16.msra.mxu0 0
        %779 = vmatprep.mubr.bf16.mxu0 0
        %780 = vmatmul.mubr.bf16.gmra.mrb[0].mxu0 %v745
        %v781 = vpop.f32.mrb[0].mxu0
        %v782 = vadd.f32 %v730, %v781
        %v783 = vpop.f32.mrb[0].mxu0
        %v784 = vpop.f32.mrb[0].mxu0
        %v785 = vpop.f32.mrb[0].mxu0
        %786 = vdwg.mxu0
        %v787 = vmul.f32 %v782, 0.35355338
        %789 = vrot.lane.b32.xlu0 %v787, 120
        %v790 = vpop.permute.xlu0 %789
        %792 = vrot.lane.b32.xlu0 %v787, 112
        %v793 = vpop.permute.xlu0 %792
        %795 = vrot.lane.b32.xlu0 %v787, 104
        %v796 = vpop.permute.xlu0 %795
        %v798 = vcombine.low %v787, %v793
        %v799 = vcombine.high %v787, %v793
        %v801 = vunpack.c.l.s4 1983009808
        %v802 = vunpack.c.0.s8 %v801
        %v803 = vlaneseq
        %v804 = vshrl.u32 %v803, 7
        %v805 = vsub.s32 %v802, %v804
        %v806 = vrot.slane %v798, %v805
        %v808 = vunpack.c.l.s4 1983009808
        %v809 = vunpack.c.0.s8 %v808
        %v810 = vlaneseq
        %v811 = vshrl.u32 %v810, 7
        %v812 = vsub.s32 %v809, %v811
        %v813 = vrot.slane %v799, %v812
        %v814 = vcombine.low %v790, %v796
        %v815 = vcombine.high %v790, %v796
        %v817 = vunpack.c.l.s4 1983009808
        %v818 = vunpack.c.0.s8 %v817
        %v819 = vlaneseq
        %v820 = vshrl.u32 %v819, 7
        %v821 = vsub.s32 %v818, %v820
        %v822 = vrot.slane %v814, %v821
        %v824 = vunpack.c.l.s4 1983009808
        %v825 = vunpack.c.0.s8 %v824
        %v826 = vlaneseq
        %v827 = vshrl.u32 %v826, 7
        %v828 = vsub.s32 %v825, %v827
        %v829 = vrot.slane %v815, %v828
        %v830 = vcombine.low %v806, %v822
        %v831 = vcombine.high %v806, %v822
        %v833 = vunpack.c.l.s4 1934713408
        %v834 = vunpack.c.0.s8 %v833
        %v835 = vlaneseq
        %v836 = vshrl.u32 %v835, 7
        %v837 = vsub.s32 %v834, %v836
        %v838 = vrot.slane %v830, %v837
        %v840 = vunpack.c.l.s4 1934713408
        %v841 = vunpack.c.0.s8 %v840
        %v842 = vlaneseq
        %v843 = vshrl.u32 %v842, 7
        %v844 = vsub.s32 %v841, %v843
        %v845 = vrot.slane %v831, %v844
        %v846 = vcombine.low %v813, %v829
        %v847 = vcombine.high %v813, %v829
        %v849 = vunpack.c.l.s4 1934713408
        %v850 = vunpack.c.0.s8 %v849
        %v851 = vlaneseq
        %v852 = vshrl.u32 %v851, 7
        %v853 = vsub.s32 %v850, %v852
        %v854 = vrot.slane %v846, %v853
        %v856 = vunpack.c.l.s4 1934713408
        %v857 = vunpack.c.0.s8 %v856
        %v858 = vlaneseq
        %v859 = vshrl.u32 %v858, 7
        %v860 = vsub.s32 %v857, %v859
        %v861 = vrot.slane %v847, %v860
        %v862 = vcombine.high %v838, 0.0
        %v863 = vcombine.high %v845, 0.0
        %v864 = vcombine.high %v854, 0.0
        %v865 = vcombine.high %v861, 0.0
        %v866 = vcombine.low %v838, %v845
        %v868 = vunpack.c.l.s4 1983009808
        %v869 = vunpack.c.0.s8 %v868
        %v870 = vlaneseq
        %v871 = vshrl.u32 %v870, 7
        %v872 = vsub.s32 %v869, %v871
        %v873 = vrot.slane %v866, %v872
        %v874 = vcombine.low %v862, %v863
        %v876 = vunpack.c.l.s4 1983009808
        %v877 = vunpack.c.0.s8 %v876
        %v878 = vlaneseq
        %v879 = vshrl.u32 %v878, 7
        %v880 = vsub.s32 %v877, %v879
        %v881 = vrot.slane %v874, %v880
        %v882 = vcombine.low %v854, %v861
        %v884 = vunpack.c.l.s4 1983009808
        %v885 = vunpack.c.0.s8 %v884
        %v886 = vlaneseq
        %v887 = vshrl.u32 %v886, 7
        %v888 = vsub.s32 %v885, %v887
        %v889 = vrot.slane %v882, %v888
        %v890 = vcombine.low %v864, %v865
        %v892 = vunpack.c.l.s4 1983009808
        %v893 = vunpack.c.0.s8 %v892
        %v894 = vlaneseq
        %v895 = vshrl.u32 %v894, 7
        %v896 = vsub.s32 %v893, %v895
        %v897 = vrot.slane %v890, %v896
        %v898 = vcombine.low %v873, %v881
        %v899 = vcombine.high %v873, %v881
        %v901 = vunpack.c.l.s4 1934713408
        %v902 = vunpack.c.0.s8 %v901
        %v903 = vlaneseq
        %v904 = vshrl.u32 %v903, 7
        %v905 = vsub.s32 %v902, %v904
        %v906 = vrot.slane %v898, %v905
        %v908 = vunpack.c.l.s4 1934713408
        %v909 = vunpack.c.0.s8 %v908
        %v910 = vlaneseq
        %v911 = vshrl.u32 %v910, 7
        %v912 = vsub.s32 %v909, %v911
        %v913 = vrot.slane %v899, %v912
        %v914 = vcombine.low %v889, %v897
        %v915 = vcombine.high %v889, %v897
        %v917 = vunpack.c.l.s4 1934713408
        %v918 = vunpack.c.0.s8 %v917
        %v919 = vlaneseq
        %v920 = vshrl.u32 %v919, 7
        %v921 = vsub.s32 %v918, %v920
        %v922 = vrot.slane %v914, %v921
        %v924 = vunpack.c.l.s4 1934713408
        %v925 = vunpack.c.0.s8 %v924
        %v926 = vlaneseq
        %v927 = vshrl.u32 %v926, 7
        %v928 = vsub.s32 %v925, %v927
        %v929 = vrot.slane %v915, %v928
        %v930 = vcombine.low %v906, %v922
        %v931 = vcombine.high %v906, %v922
        %v932 = vcombine.low %v913, %v929
        %v933 = vcombine.high %v913, %v929
        %v934 = vpack.c.bf16 %v930, %v930
        %v935 = vpack.c.bf16 %v931, %v931
        %v936 = vpack.c.bf16 %v932, %v932
        %v937 = vpack.c.bf16 %v933, %v933
        %939 = vrot.lane.b32.xlu0 %v782, 120
        %v940 = vpop.permute.xlu0 %939
        %941 = vrot.lane.b32.xlu0 %v782, 112
        %v942 = vpop.permute.xlu0 %941
        %943 = vrot.lane.b32.xlu0 %v782, 104
        %v944 = vpop.permute.xlu0 %943
        %945 = vrot.lane.b32.xlu0 %v782, 96
        %v946 = vpop.permute.xlu0 %945
        %947 = vrot.lane.b32.xlu0 %v940, 96
        %v948 = vpop.permute.xlu0 %947
        %949 = vrot.lane.b32.xlu0 %v942, 96
        %v950 = vpop.permute.xlu0 %949
        %951 = vrot.lane.b32.xlu0 %v944, 96
        %v952 = vpop.permute.xlu0 %951
        %v957 = vcombine.low %v946, %v950
        %v958 = vcombine.high %v946, %v950
        %v960 = vunpack.c.l.s4 1983009808
        %v961 = vunpack.c.0.s8 %v960
        %v962 = vlaneseq
        %v963 = vshrl.u32 %v962, 7
        %v964 = vsub.s32 %v961, %v963
        %v965 = vrot.slane %v957, %v964
        %v967 = vunpack.c.l.s4 1983009808
        %v968 = vunpack.c.0.s8 %v967
        %v969 = vlaneseq
        %v970 = vshrl.u32 %v969, 7
        %v971 = vsub.s32 %v968, %v970
        %v972 = vrot.slane %v958, %v971
        %v973 = vcombine.low %v948, %v952
        %v974 = vcombine.high %v948, %v952
        %v976 = vunpack.c.l.s4 1983009808
        %v977 = vunpack.c.0.s8 %v976
        %v978 = vlaneseq
        %v979 = vshrl.u32 %v978, 7
        %v980 = vsub.s32 %v977, %v979
        %v981 = vrot.slane %v973, %v980
        %v983 = vunpack.c.l.s4 1983009808
        %v984 = vunpack.c.0.s8 %v983
        %v985 = vlaneseq
        %v986 = vshrl.u32 %v985, 7
        %v987 = vsub.s32 %v984, %v986
        %v988 = vrot.slane %v974, %v987
        %v989 = vcombine.low %v965, %v981
        %v990 = vcombine.high %v965, %v981
        %v992 = vunpack.c.l.s4 1934713408
        %v993 = vunpack.c.0.s8 %v992
        %v994 = vlaneseq
        %v995 = vshrl.u32 %v994, 7
        %v996 = vsub.s32 %v993, %v995
        %v997 = vrot.slane %v989, %v996
        %v999 = vunpack.c.l.s4 1934713408
        %v1000 = vunpack.c.0.s8 %v999
        %v1001 = vlaneseq
        %v1002 = vshrl.u32 %v1001, 7
        %v1003 = vsub.s32 %v1000, %v1002
        %v1004 = vrot.slane %v990, %v1003
        %v1005 = vcombine.low %v972, %v988
        %v1006 = vcombine.high %v972, %v988
        %v1008 = vunpack.c.l.s4 1934713408
        %v1009 = vunpack.c.0.s8 %v1008
        %v1010 = vlaneseq
        %v1011 = vshrl.u32 %v1010, 7
        %v1012 = vsub.s32 %v1009, %v1011
        %v1013 = vrot.slane %v1005, %v1012
        %v1015 = vunpack.c.l.s4 1934713408
        %v1016 = vunpack.c.0.s8 %v1015
        %v1017 = vlaneseq
        %v1018 = vshrl.u32 %v1017, 7
        %v1019 = vsub.s32 %v1016, %v1018
        %v1020 = vrot.slane %v1006, %v1019
        %v1021 = vcombine.high %v997, 0.0
        %v1022 = vcombine.high %v1004, 0.0
        %v1023 = vcombine.high %v1013, 0.0
        %v1024 = vcombine.high %v1020, 0.0
        %v1025 = vcombine.low %v997, %v1004
        %v1027 = vunpack.c.l.s4 1983009808
        %v1028 = vunpack.c.0.s8 %v1027
        %v1029 = vlaneseq
        %v1030 = vshrl.u32 %v1029, 7
        %v1031 = vsub.s32 %v1028, %v1030
        %v1032 = vrot.slane %v1025, %v1031
        %v1033 = vcombine.low %v1021, %v1022
        %v1035 = vunpack.c.l.s4 1983009808
        %v1036 = vunpack.c.0.s8 %v1035
        %v1037 = vlaneseq
        %v1038 = vshrl.u32 %v1037, 7
        %v1039 = vsub.s32 %v1036, %v1038
        %v1040 = vrot.slane %v1033, %v1039
        %v1041 = vcombine.low %v1013, %v1020
        %v1043 = vunpack.c.l.s4 1983009808
        %v1044 = vunpack.c.0.s8 %v1043
        %v1045 = vlaneseq
        %v1046 = vshrl.u32 %v1045, 7
        %v1047 = vsub.s32 %v1044, %v1046
        %v1048 = vrot.slane %v1041, %v1047
        %v1049 = vcombine.low %v1023, %v1024
        %v1051 = vunpack.c.l.s4 1983009808
        %v1052 = vunpack.c.0.s8 %v1051
        %v1053 = vlaneseq
        %v1054 = vshrl.u32 %v1053, 7
        %v1055 = vsub.s32 %v1052, %v1054
        %v1056 = vrot.slane %v1049, %v1055
        %v1057 = vcombine.low %v1032, %v1040
        %v1058 = vcombine.high %v1032, %v1040
        %v1060 = vunpack.c.l.s4 1934713408
        %v1061 = vunpack.c.0.s8 %v1060
        %v1062 = vlaneseq
        %v1063 = vshrl.u32 %v1062, 7
        %v1064 = vsub.s32 %v1061, %v1063
        %v1065 = vrot.slane %v1057, %v1064
        %v1067 = vunpack.c.l.s4 1934713408
        %v1068 = vunpack.c.0.s8 %v1067
        %v1069 = vlaneseq
        %v1070 = vshrl.u32 %v1069, 7
        %v1071 = vsub.s32 %v1068, %v1070
        %v1072 = vrot.slane %v1058, %v1071
        %v1073 = vcombine.low %v1048, %v1056
        %v1074 = vcombine.high %v1048, %v1056
        %v1076 = vunpack.c.l.s4 1934713408
        %v1077 = vunpack.c.0.s8 %v1076
        %v1078 = vlaneseq
        %v1079 = vshrl.u32 %v1078, 7
        %v1080 = vsub.s32 %v1077, %v1079
        %v1081 = vrot.slane %v1073, %v1080
        %v1083 = vunpack.c.l.s4 1934713408
        %v1084 = vunpack.c.0.s8 %v1083
        %v1085 = vlaneseq
        %v1086 = vshrl.u32 %v1085, 7
        %v1087 = vsub.s32 %v1084, %v1086
        %v1088 = vrot.slane %v1074, %v1087
        %v1089 = vcombine.low %v1065, %v1081
        %v1090 = vcombine.high %v1065, %v1081
        %v1091 = vcombine.low %v1072, %v1088
        %v1092 = vcombine.high %v1072, %v1088
        %v1093 = vpack.c.bf16 %v1089, %v1089
        %v1094 = vpack.c.bf16 %v1090, %v1090
        %v1095 = vpack.c.bf16 %v1091, %v1091
        %v1096 = vpack.c.bf16 %v1092, %v1092
        %1097 = vrot.lane.b32.xlu0 %v782, 64
        %v1098 = vpop.permute.xlu0 %1097
        %1099 = vrot.lane.b32.xlu0 %v940, 64
        %v1100 = vpop.permute.xlu0 %1099
        %1101 = vrot.lane.b32.xlu0 %v942, 64
        %v1102 = vpop.permute.xlu0 %1101
        %1103 = vrot.lane.b32.xlu0 %v944, 64
        %v1104 = vpop.permute.xlu0 %1103
        %v1109 = vcombine.low %v1098, %v1102
        %v1110 = vcombine.high %v1098, %v1102
        %v1112 = vunpack.c.l.s4 1983009808
        %v1113 = vunpack.c.0.s8 %v1112
        %v1114 = vlaneseq
        %v1115 = vshrl.u32 %v1114, 7
        %v1116 = vsub.s32 %v1113, %v1115
        %v1117 = vrot.slane %v1109, %v1116
        %v1119 = vunpack.c.l.s4 1983009808
        %v1120 = vunpack.c.0.s8 %v1119
        %v1121 = vlaneseq
        %v1122 = vshrl.u32 %v1121, 7
        %v1123 = vsub.s32 %v1120, %v1122
        %v1124 = vrot.slane %v1110, %v1123
        %v1125 = vcombine.low %v1100, %v1104
        %v1126 = vcombine.high %v1100, %v1104
        %v1128 = vunpack.c.l.s4 1983009808
        %v1129 = vunpack.c.0.s8 %v1128
        %v1130 = vlaneseq
        %v1131 = vshrl.u32 %v1130, 7
        %v1132 = vsub.s32 %v1129, %v1131
        %v1133 = vrot.slane %v1125, %v1132
        %v1135 = vunpack.c.l.s4 1983009808
        %v1136 = vunpack.c.0.s8 %v1135
        %v1137 = vlaneseq
        %v1138 = vshrl.u32 %v1137, 7
        %v1139 = vsub.s32 %v1136, %v1138
        %v1140 = vrot.slane %v1126, %v1139
        %v1141 = vcombine.low %v1117, %v1133
        %v1142 = vcombine.high %v1117, %v1133
        %v1144 = vunpack.c.l.s4 1934713408
        %v1145 = vunpack.c.0.s8 %v1144
        %v1146 = vlaneseq
        %v1147 = vshrl.u32 %v1146, 7
        %v1148 = vsub.s32 %v1145, %v1147
        %v1149 = vrot.slane %v1141, %v1148
        %v1151 = vunpack.c.l.s4 1934713408
        %v1152 = vunpack.c.0.s8 %v1151
        %v1153 = vlaneseq
        %v1154 = vshrl.u32 %v1153, 7
        %v1155 = vsub.s32 %v1152, %v1154
        %v1156 = vrot.slane %v1142, %v1155
        %v1157 = vcombine.low %v1124, %v1140
        %v1158 = vcombine.high %v1124, %v1140
        %v1160 = vunpack.c.l.s4 1934713408
        %v1161 = vunpack.c.0.s8 %v1160
        %v1162 = vlaneseq
        %v1163 = vshrl.u32 %v1162, 7
        %v1164 = vsub.s32 %v1161, %v1163
        %v1165 = vrot.slane %v1157, %v1164
        %v1167 = vunpack.c.l.s4 1934713408
        %v1168 = vunpack.c.0.s8 %v1167
        %v1169 = vlaneseq
        %v1170 = vshrl.u32 %v1169, 7
        %v1171 = vsub.s32 %v1168, %v1170
        %v1172 = vrot.slane %v1158, %v1171
        %v1173 = vcombine.high %v1149, 0.0
        %v1174 = vcombine.high %v1156, 0.0
        %v1175 = vcombine.high %v1165, 0.0
        %v1176 = vcombine.high %v1172, 0.0
        %v1177 = vcombine.low %v1149, %v1156
        %v1179 = vunpack.c.l.s4 1983009808
        %v1180 = vunpack.c.0.s8 %v1179
        %v1181 = vlaneseq
        %v1182 = vshrl.u32 %v1181, 7
        %v1183 = vsub.s32 %v1180, %v1182
        %v1184 = vrot.slane %v1177, %v1183
        %v1185 = vcombine.low %v1173, %v1174
        %v1187 = vunpack.c.l.s4 1983009808
        %v1188 = vunpack.c.0.s8 %v1187
        %v1189 = vlaneseq
        %v1190 = vshrl.u32 %v1189, 7
        %v1191 = vsub.s32 %v1188, %v1190
        %v1192 = vrot.slane %v1185, %v1191
        %v1193 = vcombine.low %v1165, %v1172
        %v1195 = vunpack.c.l.s4 1983009808
        %v1196 = vunpack.c.0.s8 %v1195
        %v1197 = vlaneseq
        %v1198 = vshrl.u32 %v1197, 7
        %v1199 = vsub.s32 %v1196, %v1198
        %v1200 = vrot.slane %v1193, %v1199
        %v1201 = vcombine.low %v1175, %v1176
        %v1203 = vunpack.c.l.s4 1983009808
        %v1204 = vunpack.c.0.s8 %v1203
        %v1205 = vlaneseq
        %v1206 = vshrl.u32 %v1205, 7
        %v1207 = vsub.s32 %v1204, %v1206
        %v1208 = vrot.slane %v1201, %v1207
        %v1209 = vcombine.low %v1184, %v1192
        %v1210 = vcombine.high %v1184, %v1192
        %v1212 = vunpack.c.l.s4 1934713408
        %v1213 = vunpack.c.0.s8 %v1212
        %v1214 = vlaneseq
        %v1215 = vshrl.u32 %v1214, 7
        %v1216 = vsub.s32 %v1213, %v1215
        %v1217 = vrot.slane %v1209, %v1216
        %v1219 = vunpack.c.l.s4 1934713408
        %v1220 = vunpack.c.0.s8 %v1219
        %v1221 = vlaneseq
        %v1222 = vshrl.u32 %v1221, 7
        %v1223 = vsub.s32 %v1220, %v1222
        %v1224 = vrot.slane %v1210, %v1223
        %v1225 = vcombine.low %v1200, %v1208
        %v1226 = vcombine.high %v1200, %v1208
        %v1228 = vunpack.c.l.s4 1934713408
        %v1229 = vunpack.c.0.s8 %v1228
        %v1230 = vlaneseq
        %v1231 = vshrl.u32 %v1230, 7
        %v1232 = vsub.s32 %v1229, %v1231
        %v1233 = vrot.slane %v1225, %v1232
        %v1235 = vunpack.c.l.s4 1934713408
        %v1236 = vunpack.c.0.s8 %v1235
        %v1237 = vlaneseq
        %v1238 = vshrl.u32 %v1237, 7
        %v1239 = vsub.s32 %v1236, %v1238
        %v1240 = vrot.slane %v1226, %v1239
        %v1241 = vcombine.low %v1217, %v1233
        %v1242 = vcombine.high %v1217, %v1233
        %v1243 = vcombine.low %v1224, %v1240
        %v1244 = vcombine.high %v1224, %v1240
        %v1245 = vpack.c.bf16 %v1241, %v1241
        %v1246 = vpack.c.bf16 %v1242, %v1242
        %v1247 = vpack.c.bf16 %v1243, %v1243
        %v1248 = vpack.c.bf16 %v1244, %v1244
        %v1250 = vlaneseq
        %v1251 = vshrl.u32 %v1250, 7
        %v1252 = vsub.s32 0, %v1251
        %v1253 = vrot.slane %v688, %v1252
        %vm1255 = vcmask 64512
        %v1257 = vsel %vm1255, %v934, 0
        %v1260 = vsel %vm1255, %v1093, 0
        %1262 = vmatprep.subr.bf16.mxu0 0
        %1263 = vmatpush1.bf16.xpose.msra.mxu0 %v1260
        %1264 = vmatprep.subr.bf16.mxu0 0
        %1265 = vmatpush1.bf16.xpose.msra.mxu0 0
        %1266 = vmatprep.subr.bf16.mxu0 0
        %1267 = vmatpush1.bf16.xpose.msra.mxu0 0
        %1268 = vmatprep.subr.bf16.mxu0 0
        %1269 = vmatpush1.bf16.xpose.msra.mxu0 0
        %1270 = vmatprep.subr.bf16.mxu0 0
        %1271 = vmatpush1.bf16.xpose.msra.mxu0 0
        %1272 = vmatprep.subr.bf16.mxu0 0
        %1273 = vmatpush1.bf16.xpose.msra.mxu0 0
        %1274 = vmatprep.subr.bf16.mxu0 0
        %1275 = vmatpush1.bf16.xpose.msra.mxu0 0
        %1276 = vmatprep.subr.bf16.mxu0 0
        %1277 = vmatpush1.bf16.xpose.msra.mxu0 0
        %1278 = vmatprep.subr.bf16.mxu0 0
        %1279 = vmatpush1.bf16.xpose.msra.mxu0 0
        %1280 = vmatprep.subr.bf16.mxu0 0
        %1281 = vmatpush1.bf16.xpose.msra.mxu0 0
        %1282 = vmatprep.subr.bf16.mxu0 0
        %1283 = vmatpush1.bf16.xpose.msra.mxu0 0
        %1284 = vmatprep.subr.bf16.mxu0 0
        %1285 = vmatpush1.bf16.xpose.msra.mxu0 0
        %1286 = vmatprep.subr.bf16.mxu0 0
        %1287 = vmatpush1.bf16.xpose.msra.mxu0 0
        %1288 = vmatprep.subr.bf16.mxu0 0
        %1289 = vmatpush1.bf16.xpose.msra.mxu0 0
        %1290 = vmatprep.subr.bf16.mxu0 0
        %1291 = vmatpush1.bf16.xpose.msra.mxu0 0
        %1292 = vmatprep.subr.bf16.mxu0 0
        %1293 = vmatpush1.bf16.xpose.msra.mxu0 0
        %1294 = vmatprep.mubr.bf16.mxu0 0
        %1295 = vmatmul.mubr.bf16.gmra.mrb[0].mxu0 %v1257
        %v1296 = vpop.f32.mrb[0].mxu0
        %v1297 = vadd.f32 %v1253, %v1296
        %v1298 = vpop.f32.mrb[0].mxu0
        %v1299 = vpop.f32.mrb[0].mxu0
        %v1300 = vpop.f32.mrb[0].mxu0
        %1301 = vdwg.mxu0
        %v1303 = vsel %vm1255, %v935, 0
        %v1306 = vsel %vm1255, %v1094, 0
        %1308 = vmatprep.subr.bf16.mxu0 0
        %1309 = vmatpush1.bf16.xpose.msra.mxu0 %v1306
        %1310 = vmatprep.subr.bf16.mxu0 0
        %1311 = vmatpush1.bf16.xpose.msra.mxu0 0
        %1312 = vmatprep.subr.bf16.mxu0 0
        %1313 = vmatpush1.bf16.xpose.msra.mxu0 0
        %1314 = vmatprep.subr.bf16.mxu0 0
        %1315 = vmatpush1.bf16.xpose.msra.mxu0 0
        %1316 = vmatprep.subr.bf16.mxu0 0
        %1317 = vmatpush1.bf16.xpose.msra.mxu0 0
        %1318 = vmatprep.subr.bf16.mxu0 0
        %1319 = vmatpush1.bf16.xpose.msra.mxu0 0
        %1320 = vmatprep.subr.bf16.mxu0 0
        %1321 = vmatpush1.bf16.xpose.msra.mxu0 0
        %1322 = vmatprep.subr.bf16.mxu0 0
        %1323 = vmatpush1.bf16.xpose.msra.mxu0 0
        %1324 = vmatprep.subr.bf16.mxu0 0
        %1325 = vmatpush1.bf16.xpose.msra.mxu0 0
        %1326 = vmatprep.subr.bf16.mxu0 0
        %1327 = vmatpush1.bf16.xpose.msra.mxu0 0
        %1328 = vmatprep.subr.bf16.mxu0 0
        %1329 = vmatpush1.bf16.xpose.msra.mxu0 0
        %1330 = vmatprep.subr.bf16.mxu0 0
        %1331 = vmatpush1.bf16.xpose.msra.mxu0 0
        %1332 = vmatprep.subr.bf16.mxu0 0
        %1333 = vmatpush1.bf16.xpose.msra.mxu0 0
        %1334 = vmatprep.subr.bf16.mxu0 0
        %1335 = vmatpush1.bf16.xpose.msra.mxu0 0
        %1336 = vmatprep.subr.bf16.mxu0 0
        %1337 = vmatpush1.bf16.xpose.msra.mxu0 0
        %1338 = vmatprep.subr.bf16.mxu0 0
        %1339 = vmatpush1.bf16.xpose.msra.mxu0 0
        %1340 = vmatprep.mubr.bf16.mxu0 0
        %1341 = vmatmul.mubr.bf16.gmra.mrb[0].mxu0 %v1303
        %v1342 = vpop.f32.mrb[0].mxu0
        %v1343 = vadd.f32 %v1253, %v1342
        %v1344 = vpop.f32.mrb[0].mxu0
        %v1345 = vpop.f32.mrb[0].mxu0
        %v1346 = vpop.f32.mrb[0].mxu0
        %1347 = vdwg.mxu0
        %v1349 = vsel %vm1255, %v936, 0
        %v1352 = vsel %vm1255, %v1095, 0
        %1354 = vmatprep.subr.bf16.mxu0 0
        %1355 = vmatpush1.bf16.xpose.msra.mxu0 %v1352
        %1356 = vmatprep.subr.bf16.mxu0 0
        %1357 = vmatpush1.bf16.xpose.msra.mxu0 0
        %1358 = vmatprep.subr.bf16.mxu0 0
        %1359 = vmatpush1.bf16.xpose.msra.mxu0 0
        %1360 = vmatprep.subr.bf16.mxu0 0
        %1361 = vmatpush1.bf16.xpose.msra.mxu0 0
        %1362 = vmatprep.subr.bf16.mxu0 0
        %1363 = vmatpush1.bf16.xpose.msra.mxu0 0
        %1364 = vmatprep.subr.bf16.mxu0 0
        %1365 = vmatpush1.bf16.xpose.msra.mxu0 0
        %1366 = vmatprep.subr.bf16.mxu0 0
        %1367 = vmatpush1.bf16.xpose.msra.mxu0 0
        %1368 = vmatprep.subr.bf16.mxu0 0
        %1369 = vmatpush1.bf16.xpose.msra.mxu0 0
        %1370 = vmatprep.subr.bf16.mxu0 0
        %1371 = vmatpush1.bf16.xpose.msra.mxu0 0
        %1372 = vmatprep.subr.bf16.mxu0 0
        %1373 = vmatpush1.bf16.xpose.msra.mxu0 0
        %1374 = vmatprep.subr.bf16.mxu0 0
        %1375 = vmatpush1.bf16.xpose.msra.mxu0 0
        %1376 = vmatprep.subr.bf16.mxu0 0
        %1377 = vmatpush1.bf16.xpose.msra.mxu0 0
        %1378 = vmatprep.subr.bf16.mxu0 0
        %1379 = vmatpush1.bf16.xpose.msra.mxu0 0
        %1380 = vmatprep.subr.bf16.mxu0 0
        %1381 = vmatpush1.bf16.xpose.msra.mxu0 0
        %1382 = vmatprep.subr.bf16.mxu0 0
        %1383 = vmatpush1.bf16.xpose.msra.mxu0 0
        %1384 = vmatprep.subr.bf16.mxu0 0
        %1385 = vmatpush1.bf16.xpose.msra.mxu0 0
        %1386 = vmatprep.mubr.bf16.mxu0 0
        %1387 = vmatmul.mubr.bf16.gmra.mrb[0].mxu0 %v1349
        %v1388 = vpop.f32.mrb[0].mxu0
        %v1389 = vadd.f32 %v1253, %v1388
        %v1390 = vpop.f32.mrb[0].mxu0
        %v1391 = vpop.f32.mrb[0].mxu0
        %v1392 = vpop.f32.mrb[0].mxu0
        %1393 = vdwg.mxu0
        %v1395 = vsel %vm1255, %v937, 0
        %v1398 = vsel %vm1255, %v1096, 0
        %1400 = vmatprep.subr.bf16.mxu0 0
        %1401 = vmatpush1.bf16.xpose.msra.mxu0 %v1398
        %1402 = vmatprep.subr.bf16.mxu0 0
        %1403 = vmatpush1.bf16.xpose.msra.mxu0 0
        %1404 = vmatprep.subr.bf16.mxu0 0
        %1405 = vmatpush1.bf16.xpose.msra.mxu0 0
        %1406 = vmatprep.subr.bf16.mxu0 0
        %1407 = vmatpush1.bf16.xpose.msra.mxu0 0
        %1408 = vmatprep.subr.bf16.mxu0 0
        %1409 = vmatpush1.bf16.xpose.msra.mxu0 0
        %1410 = vmatprep.subr.bf16.mxu0 0
        %1411 = vmatpush1.bf16.xpose.msra.mxu0 0
        %1412 = vmatprep.subr.bf16.mxu0 0
        %1413 = vmatpush1.bf16.xpose.msra.mxu0 0
        %1414 = vmatprep.subr.bf16.mxu0 0
        %1415 = vmatpush1.bf16.xpose.msra.mxu0 0
        %1416 = vmatprep.subr.bf16.mxu0 0
        %1417 = vmatpush1.bf16.xpose.msra.mxu0 0
        %1418 = vmatprep.subr.bf16.mxu0 0
        %1419 = vmatpush1.bf16.xpose.msra.mxu0 0
        %1420 = vmatprep.subr.bf16.mxu0 0
        %1421 = vmatpush1.bf16.xpose.msra.mxu0 0
        %1422 = vmatprep.subr.bf16.mxu0 0
        %1423 = vmatpush1.bf16.xpose.msra.mxu0 0
        %1424 = vmatprep.subr.bf16.mxu0 0
        %1425 = vmatpush1.bf16.xpose.msra.mxu0 0
        %1426 = vmatprep.subr.bf16.mxu0 0
        %1427 = vmatpush1.bf16.xpose.msra.mxu0 0
        %1428 = vmatprep.subr.bf16.mxu0 0
        %1429 = vmatpush1.bf16.xpose.msra.mxu0 0
        %1430 = vmatprep.subr.bf16.mxu0 0
        %1431 = vmatpush1.bf16.xpose.msra.mxu0 0
        %1432 = vmatprep.mubr.bf16.mxu0 0
        %1433 = vmatmul.mubr.bf16.gmra.mrb[0].mxu0 %v1395
        %v1434 = vpop.f32.mrb[0].mxu0
        %v1435 = vadd.f32 %v1253, %v1434
        %v1436 = vpop.f32.mrb[0].mxu0
        %v1437 = vpop.f32.mrb[0].mxu0
        %v1438 = vpop.f32.mrb[0].mxu0
        %1439 = vdwg.mxu0
        %v1440 = vsel %vm1255, %v1297, -inf
        %1441 = vmax.xlane.f32.xlu0 %v1440
        %v1442 = vpop.xlane.xlu0 %1441
        %v1443 = vsel %vm1255, %v1343, -inf
        %1444 = vmax.xlane.f32.xlu0 %v1443
        %v1445 = vpop.xlane.xlu0 %1444
        %v1446 = vsel %vm1255, %v1389, -inf
        %1447 = vmax.xlane.f32.xlu0 %v1446
        %v1448 = vpop.xlane.xlu0 %1447
        %v1449 = vsel %vm1255, %v1435, -inf
        %1450 = vmax.xlane.f32.xlu0 %v1449
        %v1451 = vpop.xlane.xlu0 %1450
        %v1452 = vsub.f32 %v1297, %v1442
        %v1453 = vsub.f32 %v1343, %v1445
        %v1454 = vsub.f32 %v1389, %v1448
        %v1455 = vsub.f32 %v1435, %v1451
        %v1456 = vmul.f32 %v1452, 1.442695
        %v1457 = vpow.pop %v1456
        %v1458 = vmul.f32 %v1453, 1.442695
        %v1459 = vpow.pop %v1458
        %v1460 = vmul.f32 %v1454, 1.442695
        %v1461 = vpow.pop %v1460
        %v1462 = vmul.f32 %v1455, 1.442695
        %v1463 = vpow.pop %v1462
        %v1464 = vsel %vm1255, %v1457, 0.0
        %1465 = vadd.xlane.f32.xlu0 %v1464
        %v1466 = vpop.xlane.xlu0 %1465
        %v1467 = vsel %vm1255, %v1459, 0.0
        %1468 = vadd.xlane.f32.xlu0 %v1467
        %v1469 = vpop.xlane.xlu0 %1468
        %v1470 = vsel %vm1255, %v1461, 0.0
        %1471 = vadd.xlane.f32.xlu0 %v1470
        %v1472 = vpop.xlane.xlu0 %1471
        %v1473 = vsel %vm1255, %v1463, 0.0
        %1474 = vadd.xlane.f32.xlu0 %v1473
        %v1475 = vpop.xlane.xlu0 %1474
        %v1476 = vrcp.pop %v1466
        %v1477 = vmul.f32 %v1457, %v1476
        %v1478 = vrcp.pop %v1469
        %v1479 = vmul.f32 %v1459, %v1478
        %v1480 = vrcp.pop %v1472
        %v1481 = vmul.f32 %v1461, %v1480
        %v1482 = vrcp.pop %v1475
        %v1483 = vmul.f32 %v1463, %v1482
        %v1484 = vpack.c.bf16 %v1477, %v1477
        %v1485 = vpack.c.bf16 %v1479, %v1479
        %v1486 = vpack.c.bf16 %v1481, %v1481
        %v1487 = vpack.c.bf16 %v1483, %v1483
        %v1489 = vsel %vm1255, %v1484, 0
        %vm1491 = vcmask 1043456
        %v1493 = vsel %vm1491, %v1245, 0
        %1495 = vmatprep.subr.bf16.mxu0 0
        %1496 = vmatpush1.bf16.msra.mxu0 %v1493
        %1497 = vmatprep.subr.bf16.mxu0 0
        %1498 = vmatpush1.bf16.msra.mxu0 0
        %1499 = vmatprep.subr.bf16.mxu0 0
        %1500 = vmatpush1.bf16.msra.mxu0 0
        %1501 = vmatprep.subr.bf16.mxu0 0
        %1502 = vmatpush1.bf16.msra.mxu0 0
        %1503 = vmatprep.subr.bf16.mxu0 0
        %1504 = vmatpush1.bf16.msra.mxu0 0
        %1505 = vmatprep.subr.bf16.mxu0 0
        %1506 = vmatpush1.bf16.msra.mxu0 0
        %1507 = vmatprep.subr.bf16.mxu0 0
        %1508 = vmatpush1.bf16.msra.mxu0 0
        %1509 = vmatprep.subr.bf16.mxu0 0
        %1510 = vmatpush1.bf16.msra.mxu0 0
        %1511 = vmatprep.subr.bf16.mxu0 0
        %1512 = vmatpush1.bf16.msra.mxu0 0
        %1513 = vmatprep.subr.bf16.mxu0 0
        %1514 = vmatpush1.bf16.msra.mxu0 0
        %1515 = vmatprep.subr.bf16.mxu0 0
        %1516 = vmatpush1.bf16.msra.mxu0 0
        %1517 = vmatprep.subr.bf16.mxu0 0
        %1518 = vmatpush1.bf16.msra.mxu0 0
        %1519 = vmatprep.subr.bf16.mxu0 0
        %1520 = vmatpush1.bf16.msra.mxu0 0
        %1521 = vmatprep.subr.bf16.mxu0 0
        %1522 = vmatpush1.bf16.msra.mxu0 0
        %1523 = vmatprep.subr.bf16.mxu0 0
        %1524 = vmatpush1.bf16.msra.mxu0 0
        %1525 = vmatprep.subr.bf16.mxu0 0
        %1526 = vmatpush1.bf16.msra.mxu0 0
        %1527 = vmatprep.mubr.bf16.mxu0 0
        %1528 = vmatmul.mubr.bf16.gmra.mrb[0].mxu0 %v1489
        %v1529 = vpop.f32.mrb[0].mxu0
        %v1530 = vadd.f32 0.0, %v1529
        %v1531 = vpop.f32.mrb[0].mxu0
        %v1532 = vpop.f32.mrb[0].mxu0
        %v1533 = vpop.f32.mrb[0].mxu0
        %1534 = vdwg.mxu0
        %v1536 = vsel %vm1255, %v1485, 0
        %v1539 = vsel %vm1491, %v1246, 0
        %1541 = vmatprep.subr.bf16.mxu0 0
        %1542 = vmatpush1.bf16.msra.mxu0 %v1539
        %1543 = vmatprep.subr.bf16.mxu0 0
        %1544 = vmatpush1.bf16.msra.mxu0 0
        %1545 = vmatprep.subr.bf16.mxu0 0
        %1546 = vmatpush1.bf16.msra.mxu0 0
        %1547 = vmatprep.subr.bf16.mxu0 0
        %1548 = vmatpush1.bf16.msra.mxu0 0
        %1549 = vmatprep.subr.bf16.mxu0 0
        %1550 = vmatpush1.bf16.msra.mxu0 0
        %1551 = vmatprep.subr.bf16.mxu0 0
        %1552 = vmatpush1.bf16.msra.mxu0 0
        %1553 = vmatprep.subr.bf16.mxu0 0
        %1554 = vmatpush1.bf16.msra.mxu0 0
        %1555 = vmatprep.subr.bf16.mxu0 0
        %1556 = vmatpush1.bf16.msra.mxu0 0
        %1557 = vmatprep.subr.bf16.mxu0 0
        %1558 = vmatpush1.bf16.msra.mxu0 0
        %1559 = vmatprep.subr.bf16.mxu0 0
        %1560 = vmatpush1.bf16.msra.mxu0 0
        %1561 = vmatprep.subr.bf16.mxu0 0
        %1562 = vmatpush1.bf16.msra.mxu0 0
        %1563 = vmatprep.subr.bf16.mxu0 0
        %1564 = vmatpush1.bf16.msra.mxu0 0
        %1565 = vmatprep.subr.bf16.mxu0 0
        %1566 = vmatpush1.bf16.msra.mxu0 0
        %1567 = vmatprep.subr.bf16.mxu0 0
        %1568 = vmatpush1.bf16.msra.mxu0 0
        %1569 = vmatprep.subr.bf16.mxu0 0
        %1570 = vmatpush1.bf16.msra.mxu0 0
        %1571 = vmatprep.subr.bf16.mxu0 0
        %1572 = vmatpush1.bf16.msra.mxu0 0
        %1573 = vmatprep.mubr.bf16.mxu0 0
        %1574 = vmatmul.mubr.bf16.gmra.mrb[0].mxu0 %v1536
        %v1575 = vpop.f32.mrb[0].mxu0
        %v1576 = vadd.f32 0.0, %v1575
        %v1577 = vpop.f32.mrb[0].mxu0
        %v1578 = vpop.f32.mrb[0].mxu0
        %v1579 = vpop.f32.mrb[0].mxu0
        %1580 = vdwg.mxu0
        %v1582 = vsel %vm1255, %v1486, 0
        %v1585 = vsel %vm1491, %v1247, 0
        %1587 = vmatprep.subr.bf16.mxu0 0
        %1588 = vmatpush1.bf16.msra.mxu0 %v1585
        %1589 = vmatprep.subr.bf16.mxu0 0
        %1590 = vmatpush1.bf16.msra.mxu0 0
        %1591 = vmatprep.subr.bf16.mxu0 0
        %1592 = vmatpush1.bf16.msra.mxu0 0
        %1593 = vmatprep.subr.bf16.mxu0 0
        %1594 = vmatpush1.bf16.msra.mxu0 0
        %1595 = vmatprep.subr.bf16.mxu0 0
        %1596 = vmatpush1.bf16.msra.mxu0 0
        %1597 = vmatprep.subr.bf16.mxu0 0
        %1598 = vmatpush1.bf16.msra.mxu0 0
        %1599 = vmatprep.subr.bf16.mxu0 0
        %1600 = vmatpush1.bf16.msra.mxu0 0
        %1601 = vmatprep.subr.bf16.mxu0 0
        %1602 = vmatpush1.bf16.msra.mxu0 0
        %1603 = vmatprep.subr.bf16.mxu0 0
        %1604 = vmatpush1.bf16.msra.mxu0 0
        %1605 = vmatprep.subr.bf16.mxu0 0
        %1606 = vmatpush1.bf16.msra.mxu0 0
        %1607 = vmatprep.subr.bf16.mxu0 0
        %1608 = vmatpush1.bf16.msra.mxu0 0
        %1609 = vmatprep.subr.bf16.mxu0 0
        %1610 = vmatpush1.bf16.msra.mxu0 0
        %1611 = vmatprep.subr.bf16.mxu0 0
        %1612 = vmatpush1.bf16.msra.mxu0 0
        %1613 = vmatprep.subr.bf16.mxu0 0
        %1614 = vmatpush1.bf16.msra.mxu0 0
        %1615 = vmatprep.subr.bf16.mxu0 0
        %1616 = vmatpush1.bf16.msra.mxu0 0
        %1617 = vmatprep.subr.bf16.mxu0 0
        %1618 = vmatpush1.bf16.msra.mxu0 0
        %1619 = vmatprep.mubr.bf16.mxu0 0
        %1620 = vmatmul.mubr.bf16.gmra.mrb[0].mxu0 %v1582
        %v1621 = vpop.f32.mrb[0].mxu0
        %v1622 = vadd.f32 0.0, %v1621
        %v1623 = vpop.f32.mrb[0].mxu0
        %v1624 = vpop.f32.mrb[0].mxu0
        %v1625 = vpop.f32.mrb[0].mxu0
        %1626 = vdwg.mxu0
        %v1628 = vsel %vm1255, %v1487, 0
        %v1631 = vsel %vm1491, %v1248, 0
        %1633 = vmatprep.subr.bf16.mxu0 0
        %1634 = vmatpush1.bf16.msra.mxu0 %v1631
        %1635 = vmatprep.subr.bf16.mxu0 0
        %1636 = vmatpush1.bf16.msra.mxu0 0
        %1637 = vmatprep.subr.bf16.mxu0 0
        %1638 = vmatpush1.bf16.msra.mxu0 0
        %1639 = vmatprep.subr.bf16.mxu0 0
        %1640 = vmatpush1.bf16.msra.mxu0 0
        %1641 = vmatprep.subr.bf16.mxu0 0
        %1642 = vmatpush1.bf16.msra.mxu0 0
        %1643 = vmatprep.subr.bf16.mxu0 0
        %1644 = vmatpush1.bf16.msra.mxu0 0
        %1645 = vmatprep.subr.bf16.mxu0 0
        %1646 = vmatpush1.bf16.msra.mxu0 0
        %1647 = vmatprep.subr.bf16.mxu0 0
        %1648 = vmatpush1.bf16.msra.mxu0 0
        %1649 = vmatprep.subr.bf16.mxu0 0
        %1650 = vmatpush1.bf16.msra.mxu0 0
        %1651 = vmatprep.subr.bf16.mxu0 0
        %1652 = vmatpush1.bf16.msra.mxu0 0
        %1653 = vmatprep.subr.bf16.mxu0 0
        %1654 = vmatpush1.bf16.msra.mxu0 0
        %1655 = vmatprep.subr.bf16.mxu0 0
        %1656 = vmatpush1.bf16.msra.mxu0 0
        %1657 = vmatprep.subr.bf16.mxu0 0
        %1658 = vmatpush1.bf16.msra.mxu0 0
        %1659 = vmatprep.subr.bf16.mxu0 0
        %1660 = vmatpush1.bf16.msra.mxu0 0
        %1661 = vmatprep.subr.bf16.mxu0 0
        %1662 = vmatpush1.bf16.msra.mxu0 0
        %1663 = vmatprep.subr.bf16.mxu0 0
        %1664 = vmatpush1.bf16.msra.mxu0 0
        %1665 = vmatprep.mubr.bf16.mxu0 0
        %1666 = vmatmul.mubr.bf16.gmra.mrb[0].mxu0 %v1628
        %v1667 = vpop.f32.mrb[0].mxu0
        %v1668 = vadd.f32 0.0, %v1667
        %v1669 = vpop.f32.mrb[0].mxu0
        %v1670 = vpop.f32.mrb[0].mxu0
        %v1671 = vpop.f32.mrb[0].mxu0
        %1672 = vdwg.mxu0
        %v1673 = vcombine.low %v1530, %v1622
        %v1674 = vcombine.high %v1530, %v1622
        %v1676 = vunpack.c.l.s4 1983009808
        %v1677 = vunpack.c.0.s8 %v1676
        %v1678 = vlaneseq
        %v1679 = vshrl.u32 %v1678, 7
        %v1680 = vsub.s32 %v1677, %v1679
        %v1681 = vrot.slane %v1673, %v1680
        %v1683 = vunpack.c.l.s4 1983009808
        %v1684 = vunpack.c.0.s8 %v1683
        %v1685 = vlaneseq
        %v1686 = vshrl.u32 %v1685, 7
        %v1687 = vsub.s32 %v1684, %v1686
        %v1688 = vrot.slane %v1674, %v1687
        %v1689 = vcombine.low %v1576, %v1668
        %v1690 = vcombine.high %v1576, %v1668
        %v1692 = vunpack.c.l.s4 1983009808
        %v1693 = vunpack.c.0.s8 %v1692
        %v1694 = vlaneseq
        %v1695 = vshrl.u32 %v1694, 7
        %v1696 = vsub.s32 %v1693, %v1695
        %v1697 = vrot.slane %v1689, %v1696
        %v1699 = vunpack.c.l.s4 1983009808
        %v1700 = vunpack.c.0.s8 %v1699
        %v1701 = vlaneseq
        %v1702 = vshrl.u32 %v1701, 7
        %v1703 = vsub.s32 %v1700, %v1702
        %v1704 = vrot.slane %v1690, %v1703
        %v1705 = vcombine.low %v1681, %v1697
        %v1706 = vcombine.high %v1681, %v1697
        %v1708 = vunpack.c.l.s4 1934713408
        %v1709 = vunpack.c.0.s8 %v1708
        %v1710 = vlaneseq
        %v1711 = vshrl.u32 %v1710, 7
        %v1712 = vsub.s32 %v1709, %v1711
        %v1713 = vrot.slane %v1705, %v1712
        %v1715 = vunpack.c.l.s4 1934713408
        %v1716 = vunpack.c.0.s8 %v1715
        %v1717 = vlaneseq
        %v1718 = vshrl.u32 %v1717, 7
        %v1719 = vsub.s32 %v1716, %v1718
        %v1720 = vrot.slane %v1706, %v1719
        %v1721 = vcombine.low %v1688, %v1704
        %v1722 = vcombine.high %v1688, %v1704
        %v1724 = vunpack.c.l.s4 1934713408
        %v1725 = vunpack.c.0.s8 %v1724
        %v1726 = vlaneseq
        %v1727 = vshrl.u32 %v1726, 7
        %v1728 = vsub.s32 %v1725, %v1727
        %v1729 = vrot.slane %v1721, %v1728
        %v1731 = vunpack.c.l.s4 1934713408
        %v1732 = vunpack.c.0.s8 %v1731
        %v1733 = vlaneseq
        %v1734 = vshrl.u32 %v1733, 7
        %v1735 = vsub.s32 %v1732, %v1734
        %v1736 = vrot.slane %v1722, %v1735
        %v1737 = vcombine.high %v1713, 0.0
        %v1738 = vcombine.high %v1720, 0.0
        %v1739 = vcombine.high %v1729, 0.0
        %v1740 = vcombine.high %v1736, 0.0
        %v1741 = vcombine.low %v1713, %v1720
        %v1743 = vunpack.c.l.s4 1983009808
        %v1744 = vunpack.c.0.s8 %v1743
        %v1745 = vlaneseq
        %v1746 = vshrl.u32 %v1745, 7
        %v1747 = vsub.s32 %v1744, %v1746
        %v1748 = vrot.slane %v1741, %v1747
        %v1749 = vcombine.low %v1737, %v1738
        %v1751 = vunpack.c.l.s4 1983009808
        %v1752 = vunpack.c.0.s8 %v1751
        %v1753 = vlaneseq
        %v1754 = vshrl.u32 %v1753, 7
        %v1755 = vsub.s32 %v1752, %v1754
        %v1756 = vrot.slane %v1749, %v1755
        %v1757 = vcombine.low %v1729, %v1736
        %v1759 = vunpack.c.l.s4 1983009808
        %v1760 = vunpack.c.0.s8 %v1759
        %v1761 = vlaneseq
        %v1762 = vshrl.u32 %v1761, 7
        %v1763 = vsub.s32 %v1760, %v1762
        %v1764 = vrot.slane %v1757, %v1763
        %v1765 = vcombine.low %v1739, %v1740
        %v1767 = vunpack.c.l.s4 1983009808
        %v1768 = vunpack.c.0.s8 %v1767
        %v1769 = vlaneseq
        %v1770 = vshrl.u32 %v1769, 7
        %v1771 = vsub.s32 %v1768, %v1770
        %v1772 = vrot.slane %v1765, %v1771
        %v1773 = vcombine.low %v1748, %v1756
        %v1774 = vcombine.high %v1748, %v1756
        %v1776 = vunpack.c.l.s4 1934713408
        %v1777 = vunpack.c.0.s8 %v1776
        %v1778 = vlaneseq
        %v1779 = vshrl.u32 %v1778, 7
        %v1780 = vsub.s32 %v1777, %v1779
        %v1781 = vrot.slane %v1773, %v1780
        %v1783 = vunpack.c.l.s4 1934713408
        %v1784 = vunpack.c.0.s8 %v1783
        %v1785 = vlaneseq
        %v1786 = vshrl.u32 %v1785, 7
        %v1787 = vsub.s32 %v1784, %v1786
        %v1788 = vrot.slane %v1774, %v1787
        %v1789 = vcombine.low %v1764, %v1772
        %v1790 = vcombine.high %v1764, %v1772
        %v1792 = vunpack.c.l.s4 1934713408
        %v1793 = vunpack.c.0.s8 %v1792
        %v1794 = vlaneseq
        %v1795 = vshrl.u32 %v1794, 7
        %v1796 = vsub.s32 %v1793, %v1795
        %v1797 = vrot.slane %v1789, %v1796
        %v1799 = vunpack.c.l.s4 1934713408
        %v1800 = vunpack.c.0.s8 %v1799
        %v1801 = vlaneseq
        %v1802 = vshrl.u32 %v1801, 7
        %v1803 = vsub.s32 %v1800, %v1802
        %v1804 = vrot.slane %v1790, %v1803
        %v1805 = vcombine.low %v1781, %v1797
        %v1806 = vcombine.high %v1781, %v1797
        %v1807 = vcombine.low %v1788, %v1804
        %v1808 = vcombine.high %v1788, %v1804
        %1810 = vrot.lane.b32.xlu0 %v1806, 8
        %v1811 = vpop.permute.xlu0 %1810
        %1814 = vrot.lane.b32.xlu0 %v1807, 16
        %v1815 = vpop.permute.xlu0 %1814
        %1818 = vrot.lane.b32.xlu0 %v1808, 24
        %v1819 = vpop.permute.xlu0 %1818
        %v1821 = vsel %vm1255, %v1805, %v1811
        %vm1822 = vcmask 130048
        %v1823 = vsel %vm1822, %v1821, %v1815
        %vm1824 = vcmask 195584
        %v1825 = vsel %vm1824, %v1823, %v1819
        %v1826 = vpack.c.bf16 %v1825, %v1825
        %v1827 = vld [vmem:[%s6] sm:$0xf]
        %v1828 = vld [vmem:[%s6 + $0x4] sm:$0xf]
        %v1829 = vld [vmem:[%s6 + $0x8] sm:$0xf]
        %v1830 = vld [vmem:[%s6 + $0xc] sm:$0xf]
        %v1831 = vld [vmem:[#allocation8] sm:$0x1]
        %v1833 = vlaneseq
        %v1834 = vshrl.u32 %v1833, 7
        %v1835 = vsub.s32 0, %v1834
        %v1836 = vrot.slane %v1831, %v1835
        %v1842 = vunpack.c.l.b16 %v1827
        %v1843 = vunpack.c.l.b16 %v1828
        %v1844 = vunpack.c.l.b16 %v1829
        %v1845 = vunpack.c.l.b16 %v1830
        %v1846 = vpack.c.b16 %v1843, %v1842
        %v1847 = vpack.c.b16 %v1845, %v1844
        %v1851 = vsel %vm691, %v1826, 0
        %1853 = vmatprep.subr.bf16.mxu0 0
        %1854 = vmatpush1.bf16.msra.mxu0 %v1846
        %1855 = vmatprep.subr.bf16.mxu0 0
        %1856 = vmatpush1.bf16.msra.mxu0 %v1847
        %1857 = vmatprep.subr.bf16.mxu0 0
        %1858 = vmatpush1.bf16.msra.mxu0 0
        %1859 = vmatprep.subr.bf16.mxu0 0
        %1860 = vmatpush1.bf16.msra.mxu0 0
        %1861 = vmatprep.subr.bf16.mxu0 0
        %1862 = vmatpush1.bf16.msra.mxu0 0
        %1863 = vmatprep.subr.bf16.mxu0 0
        %1864 = vmatpush1.bf16.msra.mxu0 0
        %1865 = vmatprep.subr.bf16.mxu0 0
        %1866 = vmatpush1.bf16.msra.mxu0 0
        %1867 = vmatprep.subr.bf16.mxu0 0
        %1868 = vmatpush1.bf16.msra.mxu0 0
        %1869 = vmatprep.subr.bf16.mxu0 0
        %1870 = vmatpush1.bf16.msra.mxu0 0
        %1871 = vmatprep.subr.bf16.mxu0 0
        %1872 = vmatpush1.bf16.msra.mxu0 0
        %1873 = vmatprep.subr.bf16.mxu0 0
        %1874 = vmatpush1.bf16.msra.mxu0 0
        %1875 = vmatprep.subr.bf16.mxu0 0
        %1876 = vmatpush1.bf16.msra.mxu0 0
        %1877 = vmatprep.subr.bf16.mxu0 0
        %1878 = vmatpush1.bf16.msra.mxu0 0
        %1879 = vmatprep.subr.bf16.mxu0 0
        %1880 = vmatpush1.bf16.msra.mxu0 0
        %1881 = vmatprep.subr.bf16.mxu0 0
        %1882 = vmatpush1.bf16.msra.mxu0 0
        %1883 = vmatprep.subr.bf16.mxu0 0
        %1884 = vmatpush1.bf16.msra.mxu0 0
        %1885 = vmatprep.mubr.bf16.mxu0 0
        %1886 = vmatmul.mubr.bf16.gmra.mrb[0].mxu0 %v1851
        %v1887 = vpop.f32.mrb[0].mxu0
        %v1888 = vadd.f32 %v1836, %v1887
        %v1889 = vpop.f32.mrb[0].mxu0
        %v1890 = vpop.f32.mrb[0].mxu0
        %v1891 = vpop.f32.mrb[0].mxu0
        %1892 = vdwg.mxu0
        %v1893 = vadd.f32 %v1888, %v719
        %v1894 = vld [vmem:[#allocation10] sm:$0x1]
        %v1895 = vld [vmem:[#allocation11] sm:$0x1]
        %v1896 = vsel %vm691, %v1893, 0.0
        %1897 = vadd.xlane.f32.xlu0 %v1896
        %v1898 = vpop.xlane.xlu0 %1897
        %v1899 = vmul.f32 %v1898, %v695
        %v1900 = vsub.f32 %v1893, %v1899
        %v1901 = vmul.f32 %v1900, %v1900
        %v1902 = vsel %vm691, %v1901, 0.0
        %1903 = vadd.xlane.f32.xlu0 %v1902
        %v1904 = vpop.xlane.xlu0 %1903
        %v1905 = vmul.f32 %v1904, %v695
        %v1906 = vadd.f32 %v1905, 1e-05
        %v1907 = vrsqrt.pop %v1906
        %v1908 = vmul.f32 %v1900, %v1907
        %v1910 = vlaneseq
        %v1911 = vshrl.u32 %v1910, 7
        %v1912 = vsub.s32 0, %v1911
        %v1913 = vrot.slane %v1894, %v1912
        %v1915 = vmul.f32 %v1908, %v1913
        %v1917 = vlaneseq
        %v1918 = vshrl.u32 %v1917, 7
        %v1919 = vsub.s32 0, %v1918
        %v1920 = vrot.slane %v1895, %v1919
        %v1922 = vadd.f32 %v1915, %v1920
        %v1923 = vadd.f32 %v719, %v1922
        %v1924 = vld [vmem:[%s10] sm:$0x1]
        %v1925 = vld [vmem:[%s11] sm:$0x1]
        %v1926 = vsel %vm691, %v1923, 0.0
        %1927 = vadd.xlane.f32.xlu0 %v1926
        %v1928 = vpop.xlane.xlu0 %1927
        %v1929 = vmul.f32 %v1928, %v695
        %v1930 = vsub.f32 %v1923, %v1929
        %v1931 = vmul.f32 %v1930, %v1930
        %v1932 = vsel %vm691, %v1931, 0.0
        %1933 = vadd.xlane.f32.xlu0 %v1932
        %v1934 = vpop.xlane.xlu0 %1933
        %v1935 = vmul.f32 %v1934, %v695
        %v1936 = vadd.f32 %v1935, 1e-05
        %v1937 = vrsqrt.pop %v1936
        %v1938 = vmul.f32 %v1930, %v1937
        %v1940 = vlaneseq
        %v1941 = vshrl.u32 %v1940, 7
        %v1942 = vsub.s32 0, %v1941
        %v1943 = vrot.slane %v1924, %v1942
        %v1945 = vmul.f32 %v1938, %v1943
        %v1947 = vlaneseq
        %v1948 = vshrl.u32 %v1947, 7
        %v1949 = vsub.s32 0, %v1948
        %v1950 = vrot.slane %v1925, %v1949
        %v1952 = vadd.f32 %v1945, %v1950
        %v1953 = vpack.c.bf16 %v1952, %v1952
        %v1954 = vld [vmem:[%s12] sm:$0xf]
        %v1955 = vld [vmem:[%s12 + $0x4] sm:$0xf]
        %v1956 = vld [vmem:[%s12 + $0x8] sm:$0xf]
        %v1957 = vld [vmem:[%s12 + $0xc] sm:$0xf]
        %v1958 = vld [vmem:[%s13] sm:$0x1]
        %v1960 = vlaneseq
        %v1961 = vshrl.u32 %v1960, 7
        %v1962 = vsub.s32 0, %v1961
        %v1963 = vrot.slane %v1958, %v1962
        %v1969 = vunpack.c.l.b16 %v1954
        %v1970 = vunpack.c.l.b16 %v1955
        %v1971 = vunpack.c.l.b16 %v1956
        %v1972 = vunpack.c.l.b16 %v1957
        %v1973 = vpack.c.b16 %v1970, %v1969
        %v1974 = vpack.c.b16 %v1972, %v1971
        %v1978 = vsel %vm691, %v1953, 0
        %1980 = vmatprep.subr.bf16.mxu0 0
        %1981 = vmatpush1.bf16.msra.mxu0 %v1973
        %1982 = vmatprep.subr.bf16.mxu0 0
        %1983 = vmatpush1.bf16.msra.mxu0 %v1974
        %1984 = vmatprep.subr.bf16.mxu0 0
        %1985 = vmatpush1.bf16.msra.mxu0 0
        %1986 = vmatprep.subr.bf16.mxu0 0
        %1987 = vmatpush1.bf16.msra.mxu0 0
        %1988 = vmatprep.subr.bf16.mxu0 0
        %1989 = vmatpush1.bf16.msra.mxu0 0
        %1990 = vmatprep.subr.bf16.mxu0 0
        %1991 = vmatpush1.bf16.msra.mxu0 0
        %1992 = vmatprep.subr.bf16.mxu0 0
        %1993 = vmatpush1.bf16.msra.mxu0 0
        %1994 = vmatprep.subr.bf16.mxu0 0
        %1995 = vmatpush1.bf16.msra.mxu0 0
        %1996 = vmatprep.subr.bf16.mxu0 0
        %1997 = vmatpush1.bf16.msra.mxu0 0
        %1998 = vmatprep.subr.bf16.mxu0 0
        %1999 = vmatpush1.bf16.msra.mxu0 0
        %2000 = vmatprep.subr.bf16.mxu0 0
        %2001 = vmatpush1.bf16.msra.mxu0 0
        %2002 = vmatprep.subr.bf16.mxu0 0
        %2003 = vmatpush1.bf16.msra.mxu0 0
        %2004 = vmatprep.subr.bf16.mxu0 0
        %2005 = vmatpush1.bf16.msra.mxu0 0
        %2006 = vmatprep.subr.bf16.mxu0 0
        %2007 = vmatpush1.bf16.msra.mxu0 0
        %2008 = vmatprep.subr.bf16.mxu0 0
        %2009 = vmatpush1.bf16.msra.mxu0 0
        %2010 = vmatprep.subr.bf16.mxu0 0
        %2011 = vmatpush1.bf16.msra.mxu0 0
        %2012 = vmatprep.mubr.bf16.mxu0 0
        %2013 = vmatmul.mubr.bf16.gmra.mrb[0].mxu0 %v1978
        %v2014 = vpop.f32.mrb[0].mxu0
        %v2015 = vadd.f32 %v1963, %v2014
        %v2016 = vpop.f32.mrb[0].mxu0
        %v2017 = vpop.f32.mrb[0].mxu0
        %v2018 = vpop.f32.mrb[0].mxu0
        %2019 = vdwg.mxu0
        %v2020 = vmax.f32 %v2015, 0.0
        %v2021 = vpack.c.bf16 %v2020, %v2020
        %v2022 = vld [vmem:[%s14] sm:$0xf]
        %v2023 = vld [vmem:[%s14 + $0x4] sm:$0xf]
        %v2024 = vld [vmem:[%s14 + $0x8] sm:$0xf]
        %v2025 = vld [vmem:[%s14 + $0xc] sm:$0xf]
        %v2026 = vld [vmem:[%s14 + $0x10] sm:$0xf]
        %v2027 = vld [vmem:[%s14 + $0x14] sm:$0xf]
        %v2028 = vld [vmem:[%s14 + $0x18] sm:$0xf]
        %v2029 = vld [vmem:[%s14 + $0x1c] sm:$0xf]
        %v2030 = vld [vmem:[%s15] sm:$0x1]
        %v2032 = vlaneseq
        %v2033 = vshrl.u32 %v2032, 7
        %v2034 = vsub.s32 0, %v2033
        %v2035 = vrot.slane %v2030, %v2034
        %v2045 = vunpack.c.l.b16 %v2022
        %v2046 = vunpack.c.l.b16 %v2023
        %v2047 = vunpack.c.l.b16 %v2024
        %v2048 = vunpack.c.l.b16 %v2025
        %v2049 = vunpack.c.l.b16 %v2026
        %v2050 = vunpack.c.l.b16 %v2027
        %v2051 = vunpack.c.l.b16 %v2028
        %v2052 = vunpack.c.l.b16 %v2029
        %v2053 = vpack.c.b16 %v2046, %v2045
        %v2054 = vpack.c.b16 %v2048, %v2047
        %v2055 = vpack.c.b16 %v2050, %v2049
        %v2056 = vpack.c.b16 %v2052, %v2051
        %vm2061 = vcmask 523264
        %v2063 = vsel %vm2061, %v2021, 0
        %2065 = vmatprep.subr.bf16.mxu0 0
        %2066 = vmatpush1.bf16.msra.mxu0 %v2053
        %2067 = vmatprep.subr.bf16.mxu0 0
        %2068 = vmatpush1.bf16.msra.mxu0 %v2054
        %2069 = vmatprep.subr.bf16.mxu0 0
        %2070 = vmatpush1.bf16.msra.mxu0 %v2055
        %2071 = vmatprep.subr.bf16.mxu0 0
        %2072 = vmatpush1.bf16.msra.mxu0 %v2056
        %2073 = vmatprep.subr.bf16.mxu0 0
        %2074 = vmatpush1.bf16.msra.mxu0 0
        %2075 = vmatprep.subr.bf16.mxu0 0
        %2076 = vmatpush1.bf16.msra.mxu0 0
        %2077 = vmatprep.subr.bf16.mxu0 0
        %2078 = vmatpush1.bf16.msra.mxu0 0
        %2079 = vmatprep.subr.bf16.mxu0 0
        %2080 = vmatpush1.bf16.msra.mxu0 0
        %2081 = vmatprep.subr.bf16.mxu0 0
        %2082 = vmatpush1.bf16.msra.mxu0 0
        %2083 = vmatprep.subr.bf16.mxu0 0
        %2084 = vmatpush1.bf16.msra.mxu0 0
        %2085 = vmatprep.subr.bf16.mxu0 0
        %2086 = vmatpush1.bf16.msra.mxu0 0
        %2087 = vmatprep.subr.bf16.mxu0 0
        %2088 = vmatpush1.bf16.msra.mxu0 0
        %2089 = vmatprep.subr.bf16.mxu0 0
        %2090 = vmatpush1.bf16.msra.mxu0 0
        %2091 = vmatprep.subr.bf16.mxu0 0
        %2092 = vmatpush1.bf16.msra.mxu0 0
        %2093 = vmatprep.subr.bf16.mxu0 0
        %2094 = vmatpush1.bf16.msra.mxu0 0
        %2095 = vmatprep.subr.bf16.mxu0 0
        %2096 = vmatpush1.bf16.msra.mxu0 0
        %2097 = vmatprep.mubr.bf16.mxu0 0
        %2098 = vmatmul.mubr.bf16.gmra.mrb[0].mxu0 %v2063
        %v2099 = vpop.f32.mrb[0].mxu0
        %v2100 = vadd.f32 %v2035, %v2099
        %v2101 = vpop.f32.mrb[0].mxu0
        %v2102 = vpop.f32.mrb[0].mxu0
        %v2103 = vpop.f32.mrb[0].mxu0
        %2104 = vdwg.mxu0
        %v2105 = vadd.f32 %v1952, %v2100
        %v2106 = vld [vmem:[%s16] sm:$0x1]
        %v2107 = vld [vmem:[%s17] sm:$0x1]
        %v2108 = vsel %vm691, %v2105, 0.0
        %2109 = vadd.xlane.f32.xlu0 %v2108
        %v2110 = vpop.xlane.xlu0 %2109
        %v2111 = vmul.f32 %v2110, %v695
        %v2112 = vsub.f32 %v2105, %v2111
        %v2113 = vmul.f32 %v2112, %v2112
        %v2114 = vsel %vm691, %v2113, 0.0
        %2115 = vadd.xlane.f32.xlu0 %v2114
        %v2116 = vpop.xlane.xlu0 %2115
        %v2117 = vmul.f32 %v2116, %v695
        %v2118 = vadd.f32 %v2117, 1e-05
        %v2119 = vrsqrt.pop %v2118
        %v2120 = vmul.f32 %v2112, %v2119
        %v2122 = vlaneseq
        %v2123 = vshrl.u32 %v2122, 7
        %v2124 = vsub.s32 0, %v2123
        %v2125 = vrot.slane %v2106, %v2124
        %v2127 = vmul.f32 %v2120, %v2125
        %v2129 = vlaneseq
        %v2130 = vshrl.u32 %v2129, 7
        %v2131 = vsub.s32 0, %v2130
        %v2132 = vrot.slane %v2107, %v2131
        %v2134 = vadd.f32 %v2127, %v2132
        %2135 = vst.msk [vmem:[%s675] sm:$0xff] %vm691, %v2134
        %s2136 = sand.u32 %s448, 1
        %s2137 = scalar_lea.sflag [#allocation4], %s2136
        %s2138 = sand.u32 %s448, 1
        %s2139 = smul.addr %s2138, 8
        %s2140 = scalar_lea.vmem [#allocation13], %s2139
        // Predicated region
        $region117: #{tpu_custom_call.1} parent=91 // pred_check
          %p2141 = pneg %p458
        $region118: #{tpu_custom_call.1} parent=91 // pred_check_branch
          %2143 = sbr.rel (%p2141) target = $region120
        $region119: #{tpu_custom_call.1} parent=91 // pred_region
          %s2145 = ssub.s32 128, 128
          %2146 = vsyncadd %s2137, %s2145
          %s2147 = sadd.s32 %s41, %s40
          %s2148 = smul.addr %s2147, 128
          %s2149 = scalar_lea.hbm %s18, %s2148
          %s2151 = sshll.u32 %s2140, 4
          %s2152 = int_to_ptr.vmem [resolvable:$true] %s2151
          %2154 = dma.vmem_to_hbm [thread:$0]  %s2152, 128, %s2149, %s2137
        $region120: #{tpu_custom_call.1} parent=91 // pred_fallthru
          _
      $region92: #{tpu_custom_call.1} parent=5 // pred_fallthru
        _
      %p2155 = scmp.le.s32.totalorder 2, %s31
      // Predicated region
      $region121: #{tpu_custom_call.1} parent=5 // pred_check
        %p2156 = pneg %p2155
      $region122: #{tpu_custom_call.1} parent=5 // pred_check_branch
        %2158 = sbr.rel (%p2156) target = $region124
      $region123: #{tpu_custom_call.1} parent=5 // pred_region
        %s2159 = ssub.s32 %s31, 2
        // Predicated region
        $region125: #{tpu_custom_call.1} parent=123 // pred_check
          %p2160 = pneg %p464
        $region126: #{tpu_custom_call.1} parent=123 // pred_check_branch
          %2162 = sbr.rel (%p2160) target = $region128
        $region127: #{tpu_custom_call.1} parent=123 // pred_region
          %s2163 = sand.u32 %s449, 1
          %s2164 = scalar_lea.sflag [#allocation4], %s2163
          %s2165 = sand.u32 %s449, 1
          %s2166 = smul.addr %s2165, 8
          %s2167 = scalar_lea.vmem [#allocation13], %s2166
          %2168 = dma.done %s2164, 128
        $region128: #{tpu_custom_call.1} parent=123 // pred_fallthru
          _
      $region124: #{tpu_custom_call.1} parent=5 // pred_fallthru
        _
    $region6: #{tpu_custom_call.1} parent=1 // loop_footer
      %s35 = sadd.s32 1, %s31
    $region7: #{tpu_custom_call.1} parent=1 // loop_footer_branch
      %30 = sbr.rel target = $region3
    $region8: #{tpu_custom_call.1} parent=1 // loop_exit
      _
    %2169 = vsyncpa [#allocation3], 1
    %s2170 = scalar_lea.sflag [#allocation3], 1
    %2171 = vsyncpa %s2170, 1
    %2172 = vsyncpa [#allocation6], 1
    %2173 = vsyncpa [#allocation9], 1
    %2174 = vsyncpa [#allocation12], 1
    %2175 = vsyncpa [#allocation4], 1
    %s2176 = scalar_lea.sflag [#allocation4], 1
    %2177 = vsyncpa %s2176, 1

</llo_original>
